<compile_context>
chip_gen: v7x
topology: tpu7x:2x2x1
jax: 0.10.0
libtpu: 0.0.40
codegen_flags: <defaults>
</compile_context>

<pallas_src>
import math
import jax
import jax.numpy as jnp
from jax.experimental import pallas as pl

# ------------------------- small, BERT-consistent config -------------------------
VOCAB = 64          # vocab_size for masked_lm embedding table
B, S, H = 2, 8, 32
NH = 4              # attention heads
HD = H // NH        # head dim
FF = 4 * H          # feed-forward hidden (=128)
LAYERS = 2          # transformer blocks
LANES = 128         # width of the packed bias/LN slab

assert FF <= LANES, "bias/LN slab packing assumes FF fits in one 128-lane row"

# rows of the packed per-layer vector slab [VEC_ROWS, LANES]
ROW_BQKV, ROW_BO, ROW_B1, ROW_B2 = 0, 1, 2, 3
ROW_LN1G, ROW_LN1B, ROW_LN2G, ROW_LN2B = 4, 5, 6, 7
VEC_ROWS = 8


def _layer_norm(x, g, b, eps=1e-12):
    mu = jnp.mean(x, axis=-1, keepdims=True)
    var = jnp.mean((x - mu) ** 2, axis=-1, keepdims=True)
    return (x - mu) * jax.lax.rsqrt(var + eps) * g + b


# ------------------------------ Pallas kernel ------------------------------------
def bert_encoder_kernel(x_ref, wbig_ref, w2_ref, vec_ref, o_ref):
    """Whole encoder in one invocation; activations loop-carried in vregs."""
    scale = 1.0 / math.sqrt(HD)
    x = x_ref[...]                                           # [B*S, H] f32

    for l in range(LAYERS):                                  # static unroll over layers
        # Weight slab columns: wq|wk|wv|wo (lanes 0:4H) | w1 (lanes 4H:4H+FF).
        w_qkvo = wbig_ref[l, :, :4 * H]                      # [H, 4H]  bf16 (tile-aligned slice)
        w_1 = wbig_ref[l, :, 4 * H:]                         # [H, FF]  bf16 (tile-aligned slice)
        w_o = w_qkvo[:, 3 * H:]                              # [H, H]   bf16
        w_2 = w2_ref[l]                                      # [FF, H]  bf16
        vec = vec_ref[l]                                     # [VEC_ROWS, LANES] f32

        b_qkv = vec[ROW_BQKV:ROW_BQKV + 1, :]                # [1,128] (zeros over the wo lanes)
        b_o = vec[ROW_BO:ROW_BO + 1, :H]
        b_1 = vec[ROW_B1:ROW_B1 + 1, :FF]
        b_2 = vec[ROW_B2:ROW_B2 + 1, :H]
        ln1g = vec[ROW_LN1G:ROW_LN1G + 1, :H]
        ln1b = vec[ROW_LN1B:ROW_LN1B + 1, :H]
        ln2g = vec[ROW_LN2G:ROW_LN2G + 1, :H]
        ln2b = vec[ROW_LN2B:ROW_LN2B + 1, :H]

        # --- attention --------------------------------------------------------
        # Fused lane-dense projection: one [B*S,32] x [32,128] bf16 MXU slab.
        # Lanes 0:3H hold q|k|v; lanes 3H:4H compute x@wo (discarded for free —
        # the MXU pads the RHS to 128 lanes anyway; its bias row is zero).
        qkv = jnp.dot(x.astype(jnp.bfloat16), w_qkvo,
                      preferred_element_type=jnp.float32) + b_qkv        # [B*S, 4H] f32

        # Stack heads on the leading (sublane) axis: z = head*B + batch.
        # Only leading-dim reshapes/concats -> no cross-lane transposes.
        def heads(base):
            return jnp.concatenate(
                [qkv[:, base + n * HD: base + (n + 1) * HD].reshape(B, S, HD)
                 for n in range(NH)], axis=0).astype(jnp.bfloat16)       # [B*NH, S, HD]

        q_z, k_z, v_z = heads(0), heads(H), heads(2 * H)

        s = jnp.einsum('zqd,zkd->zqk', q_z, k_z,
                       preferred_element_type=jnp.float32) * scale       # [B*NH, S, S]
        s = s - jnp.max(s, axis=-1, keepdims=True)
        p = jnp.exp(s)
        p = p * pl.reciprocal(jnp.sum(p, axis=-1, keepdims=True), approx=True)
        ctx = jnp.einsum('zqk,zkd->zqd', p.astype(jnp.bfloat16), v_z,
                         preferred_element_type=jnp.float32)             # [B*NH, S, HD]

        # Re-pack heads onto lanes and do ONE output projection.
        ctx_cat = jnp.concatenate(
            [ctx[n * B:(n + 1) * B].reshape(B * S, HD) for n in range(NH)],
            axis=1)                                                      # [B*S, H]
        attn = jnp.dot(ctx_cat.astype(jnp.bfloat16), w_o,
                       preferred_element_type=jnp.float32) + b_o         # [B*S, H]

        # post-LN (BERT style): x = LN(x + Attn(x)); x = LN(x + FFN(x)) — f32 VPU/EUP math.
        x1 = _layer_norm(x + attn, ln1g, ln1b)

        # --- feed-forward -----------------------------------------------------
        h = jnp.dot(x1.astype(jnp.bfloat16), w_1,
                    preferred_element_type=jnp.float32) + b_1            # [B*S, FF]
        h = jax.nn.gelu(h, approximate=True)
        ff = jnp.dot(h.astype(jnp.bfloat16), w_2,
                     preferred_element_type=jnp.float32) + b_2           # [B*S, H]

        x = _layer_norm(x1 + ff, ln2g, ln2b)

    o_ref[...] = x                                                       # single writeback


def bert_encoder(x, packed):
    """All LAYERS transformer blocks in ONE pallas_call, ONE grid step."""
    x_flat = x.reshape(B * S, H)                     # free metadata reshape in the wrapper
    out = pl.pallas_call(
        bert_encoder_kernel,
        out_shape=jax.ShapeDtypeStruct((B * S, H), jnp.float32),
        # No grid / BlockSpecs: whole arrays live in VMEM for the single invocation.
    )(x_flat, packed["w_big"], packed["w2"], packed["vec"])
    return out.reshape(B, S, H)


# ------------------------------ parameter init -----------------------------------
def _pad_lanes(v):
    return jnp.pad(v, ((0, 0), (0, LANES - v.shape[1])))


def pack_layer_params(layers):
    """Stack per-layer weights (bf16) and coalesce small vectors into one f32 slab."""
    w_big = jnp.stack([
        jnp.concatenate([lp["wq"], lp["wk"], lp["wv"], lp["wo"], lp["w1"]], axis=1)
        for lp in layers]).astype(jnp.bfloat16)                          # [L, H, 4H+FF]
    w2 = jnp.stack([lp["w2"] for lp in layers]).astype(jnp.bfloat16)     # [L, FF, H]
    vec = jnp.stack([
        jnp.concatenate([
            _pad_lanes(jnp.concatenate([lp["bq"], lp["bk"], lp["bv"]], axis=1)),
            _pad_lanes(lp["bo"]),
            _pad_lanes(lp["b1"]),
            _pad_lanes(lp["b2"]),
            _pad_lanes(lp["ln1_g"]), _pad_lanes(lp["ln1_b"]),
            _pad_lanes(lp["ln2_g"]), _pad_lanes(lp["ln2_b"]),
        ], axis=0)
        for lp in layers])                                               # [L, 8, 128] f32
    return {"w_big": w_big, "w2": w2, "vec": vec}


def init_params(key):
    def nrm(k, shape, scale=0.02):
        return (scale * jax.random.normal(k, shape)).astype(jnp.float32)

    keys = jax.random.split(key, 2 + LAYERS)
    layers = []
    for l in range(LAYERS):
        lk = jax.random.split(keys[2 + l], 6)
        layers.append({
            "wq": nrm(lk[0], (H, H)), "bq": jnp.zeros((1, H), jnp.float32),
            "wk": nrm(lk[1], (H, H)), "bk": jnp.zeros((1, H), jnp.float32),
            "wv": nrm(lk[2], (H, H)), "bv": jnp.zeros((1, H), jnp.float32),
            "wo": nrm(lk[3], (H, H)), "bo": jnp.zeros((1, H), jnp.float32),
            "ln1_g": jnp.ones((1, H), jnp.float32), "ln1_b": jnp.zeros((1, H), jnp.float32),
            "w1": nrm(lk[4], (H, FF)), "b1": jnp.zeros((1, FF), jnp.float32),
            "w2": nrm(lk[5], (FF, H)), "b2": jnp.zeros((1, H), jnp.float32),
            "ln2_g": jnp.ones((1, H), jnp.float32), "ln2_b": jnp.zeros((1, H), jnp.float32),
        })
    return {
        "tok_emb": nrm(keys[0], (VOCAB, H)),
        "pos_emb": nrm(keys[1], (S, H)),
        "layers": layers,
        "packed": pack_layer_params(layers),
    }


# ------------------------------ BERTLM forward ------------------------------------
def bert_lm_forward(tokens, params):
    # BERT embedding: token embedding + learned position embedding -> original_emb
    # TODO(synk): token-id gather stays in plain JAX (no clean Pallas equivalent at this size).
    original_emb = jnp.take(params["tok_emb"], tokens, axis=0) + params["pos_emb"][None, :, :]
    x = bert_encoder(original_emb, params["packed"])
    # BERTLM.forward returns (final hidden states, original embedding)
    return x, original_emb


# ------------------------------ pure-JAX reference --------------------------------
def bert_lm_reference(tokens, params):
    x = jnp.take(params["tok_emb"], tokens, axis=0) + params["pos_emb"][None, :, :]
    original_emb = x
    scale = 1.0 / math.sqrt(HD)
    for lp in params["layers"]:
        q = (x @ lp["wq"] + lp["bq"]).reshape(B, S, NH, HD)
        k = (x @ lp["wk"] + lp["bk"]).reshape(B, S, NH, HD)
        v = (x @ lp["wv"] + lp["bv"]).reshape(B, S, NH, HD)
        s = jnp.einsum('bqnd,bknd->bnqk', q, k) * scale
        p = jax.nn.softmax(s, axis=-1)
        ctx = jnp.einsum('bnqk,bknd->bqnd', p, v).reshape(B, S, H)
        attn = ctx @ lp["wo"] + lp["bo"]
        x = _layer_norm(x + attn, lp["ln1_g"], lp["ln1_b"])
        h = jax.nn.gelu(x @ lp["w1"] + lp["b1"], approximate=True)
        x = _layer_norm(x + h @ lp["w2"] + lp["b2"], lp["ln2_g"], lp["ln2_b"])
    return x, original_emb


if __name__ == "__main__":
    key = jax.random.PRNGKey(0)
    pkey, tkey = jax.random.split(key)
    params = init_params(pkey)
    tokens = jax.random.randint(tkey, (B, S), 0, VOCAB, dtype=jnp.int32)

    x_out, original_emb = bert_lm_forward(tokens, params)
    jax.block_until_ready((x_out, original_emb))

    x_ref_out, emb_ref = bert_lm_reference(tokens, params)
    assert x_out.shape == (B, S, H) and original_emb.shape == (B, S, H)
    assert jnp.allclose(original_emb, emb_ref)
    # bf16 MXU operands + approx-reciprocal softmax keep error ~1e-3 level.
    assert jnp.allclose(x_out, x_ref_out, atol=1e-2, rtol=1e-2)
    print("KERNEL_OK")
</pallas_src>

<mosaic_0001>
module attributes {stable_mosaic.version = 11 : i64} {
  func.func @bert_encoder_kernel(%arg0: memref<16x32xf32, #tpu.memory_space<vmem>>, %arg1: memref<2x32x256xbf16, #tpu.memory_space<vmem>>, %arg2: memref<2x128x32xbf16, #tpu.memory_space<vmem>>, %arg3: memref<2x8x128xf32, #tpu.memory_space<vmem>>, %arg4: memref<16x32xf32, #tpu.memory_space<vmem>>) attributes {dimension_semantics = [], scalar_prefetch = 0 : i64, scratch_operands = 0 : i64, tpu.core_type = #tpu.core_type<tc>} {
    %c0 = arith.constant 0 : index
    %c0_0 = arith.constant 0 : index
    %0 = vector.load %arg0[%c0, %c0_0] : memref<16x32xf32, #tpu.memory_space<vmem>>, vector<16x32xf32>
    %c0_1 = arith.constant 0 : index
    %c0_2 = arith.constant 0 : index
    %c0_3 = arith.constant 0 : index
    %1 = vector.load %arg1[%c0_1, %c0_2, %c0_3] : memref<2x32x256xbf16, #tpu.memory_space<vmem>>, vector<1x32x128xbf16>
    %2 = vector.shape_cast %1 : vector<1x32x128xbf16> to vector<32x128xbf16>
    %c0_4 = arith.constant 0 : index
    %c0_5 = arith.constant 0 : index
    %c128 = arith.constant 128 : index
    %3 = vector.load %arg1[%c0_4, %c0_5, %c128] : memref<2x32x256xbf16, #tpu.memory_space<vmem>>, vector<1x32x128xbf16>
    %4 = vector.shape_cast %3 : vector<1x32x128xbf16> to vector<32x128xbf16>
    %5 = vector.extract_strided_slice %2 {offsets = [0, 96], sizes = [32, 32], strides = [1, 1]} : vector<32x128xbf16> to vector<32x32xbf16>
    %c0_6 = arith.constant 0 : index
    %c0_7 = arith.constant 0 : index
    %c0_8 = arith.constant 0 : index
    %6 = vector.load %arg2[%c0_6, %c0_7, %c0_8] : memref<2x128x32xbf16, #tpu.memory_space<vmem>>, vector<1x128x32xbf16>
    %7 = vector.shape_cast %6 : vector<1x128x32xbf16> to vector<128x32xbf16>
    %c0_9 = arith.constant 0 : index
    %c0_10 = arith.constant 0 : index
    %c0_11 = arith.constant 0 : index
    %8 = vector.load %arg3[%c0_9, %c0_10, %c0_11] : memref<2x8x128xf32, #tpu.memory_space<vmem>>, vector<1x8x128xf32>
    %9 = vector.shape_cast %8 : vector<1x8x128xf32> to vector<8x128xf32>
    %10 = vector.extract_strided_slice %9 {offsets = [0, 0], sizes = [1, 128], strides = [1, 1]} : vector<8x128xf32> to vector<1x128xf32>
    %11 = vector.extract_strided_slice %9 {offsets = [1, 0], sizes = [1, 32], strides = [1, 1]} : vector<8x128xf32> to vector<1x32xf32>
    %12 = vector.extract_strided_slice %9 {offsets = [2, 0], sizes = [1, 128], strides = [1, 1]} : vector<8x128xf32> to vector<1x128xf32>
    %13 = vector.extract_strided_slice %9 {offsets = [3, 0], sizes = [1, 32], strides = [1, 1]} : vector<8x128xf32> to vector<1x32xf32>
    %14 = vector.extract_strided_slice %9 {offsets = [4, 0], sizes = [1, 32], strides = [1, 1]} : vector<8x128xf32> to vector<1x32xf32>
    %15 = vector.extract_strided_slice %9 {offsets = [5, 0], sizes = [1, 32], strides = [1, 1]} : vector<8x128xf32> to vector<1x32xf32>
    %16 = vector.extract_strided_slice %9 {offsets = [6, 0], sizes = [1, 32], strides = [1, 1]} : vector<8x128xf32> to vector<1x32xf32>
    %17 = vector.extract_strided_slice %9 {offsets = [7, 0], sizes = [1, 32], strides = [1, 1]} : vector<8x128xf32> to vector<1x32xf32>
    %18 = arith.truncf %0 : vector<16x32xf32> to vector<16x32xbf16>
    %cst = arith.constant dense<0.000000e+00> : vector<16x128xf32>
    %19 = tpu.matmul %18, %2, %cst {dimension_numbers = #tpu.dot_dimension_numbers<[1], [0], [0], [1], [0, 0, 1, 1], [], []>} : vector<16x32xbf16>, vector<32x128xbf16>, vector<16x128xf32> -> vector<16x128xf32>
    %20 = vector.broadcast %10 : vector<1x128xf32> to vector<16x128xf32>
    %21 = arith.addf %19, %20 : vector<16x128xf32>
    %22 = vector.extract_strided_slice %21 {offsets = [0, 0], sizes = [16, 8], strides = [1, 1]} : vector<16x128xf32> to vector<16x8xf32>
    %23 = vector.shape_cast %22 : vector<16x8xf32> to vector<2x8x8xf32>
    %24 = vector.extract_strided_slice %21 {offsets = [0, 8], sizes = [16, 8], strides = [1, 1]} : vector<16x128xf32> to vector<16x8xf32>
    %25 = vector.shape_cast %24 : vector<16x8xf32> to vector<2x8x8xf32>
    %26 = vector.extract_strided_slice %21 {offsets = [0, 16], sizes = [16, 8], strides = [1, 1]} : vector<16x128xf32> to vector<16x8xf32>
    %27 = vector.shape_cast %26 : vector<16x8xf32> to vector<2x8x8xf32>
    %28 = vector.extract_strided_slice %21 {offsets = [0, 24], sizes = [16, 8], strides = [1, 1]} : vector<16x128xf32> to vector<16x8xf32>
    %29 = vector.shape_cast %28 : vector<16x8xf32> to vector<2x8x8xf32>
    %30 = tpu.concatenate %23, %25, %27, %29 in 0 : vector<2x8x8xf32>, vector<2x8x8xf32>, vector<2x8x8xf32>, vector<2x8x8xf32> -> vector<8x8x8xf32>
    %31 = arith.truncf %30 : vector<8x8x8xf32> to vector<8x8x8xbf16>
    %32 = vector.extract_strided_slice %21 {offsets = [0, 32], sizes = [16, 8], strides = [1, 1]} : vector<16x128xf32> to vector<16x8xf32>
    %33 = vector.shape_cast %32 : vector<16x8xf32> to vector<2x8x8xf32>
    %34 = vector.extract_strided_slice %21 {offsets = [0, 40], sizes = [16, 8], strides = [1, 1]} : vector<16x128xf32> to vector<16x8xf32>
    %35 = vector.shape_cast %34 : vector<16x8xf32> to vector<2x8x8xf32>
    %36 = vector.extract_strided_slice %21 {offsets = [0, 48], sizes = [16, 8], strides = [1, 1]} : vector<16x128xf32> to vector<16x8xf32>
    %37 = vector.shape_cast %36 : vector<16x8xf32> to vector<2x8x8xf32>
    %38 = vector.extract_strided_slice %21 {offsets = [0, 56], sizes = [16, 8], strides = [1, 1]} : vector<16x128xf32> to vector<16x8xf32>
    %39 = vector.shape_cast %38 : vector<16x8xf32> to vector<2x8x8xf32>
    %40 = tpu.concatenate %33, %35, %37, %39 in 0 : vector<2x8x8xf32>, vector<2x8x8xf32>, vector<2x8x8xf32>, vector<2x8x8xf32> -> vector<8x8x8xf32>
    %41 = arith.truncf %40 : vector<8x8x8xf32> to vector<8x8x8xbf16>
    %42 = vector.extract_strided_slice %21 {offsets = [0, 64], sizes = [16, 8], strides = [1, 1]} : vector<16x128xf32> to vector<16x8xf32>
    %43 = vector.shape_cast %42 : vector<16x8xf32> to vector<2x8x8xf32>
    %44 = vector.extract_strided_slice %21 {offsets = [0, 72], sizes = [16, 8], strides = [1, 1]} : vector<16x128xf32> to vector<16x8xf32>
    %45 = vector.shape_cast %44 : vector<16x8xf32> to vector<2x8x8xf32>
    %46 = vector.extract_strided_slice %21 {offsets = [0, 80], sizes = [16, 8], strides = [1, 1]} : vector<16x128xf32> to vector<16x8xf32>
    %47 = vector.shape_cast %46 : vector<16x8xf32> to vector<2x8x8xf32>
    %48 = vector.extract_strided_slice %21 {offsets = [0, 88], sizes = [16, 8], strides = [1, 1]} : vector<16x128xf32> to vector<16x8xf32>
    %49 = vector.shape_cast %48 : vector<16x8xf32> to vector<2x8x8xf32>
    %50 = tpu.concatenate %43, %45, %47, %49 in 0 : vector<2x8x8xf32>, vector<2x8x8xf32>, vector<2x8x8xf32>, vector<2x8x8xf32> -> vector<8x8x8xf32>
    %51 = arith.truncf %50 : vector<8x8x8xf32> to vector<8x8x8xbf16>
    "tpu.trace_start"() <{level = 10 : i32, message = "zqd,zkd->zqk"}> : () -> ()
    %cst_12 = arith.constant dense<0.000000e+00> : vector<8x8x8xf32>
    %52 = tpu.matmul %31, %41, %cst_12 {dimension_numbers = #tpu.dot_dimension_numbers<[2], [2], [1], [1], [0, 0, 0, 1, 1, 1], [0], [0]>} : vector<8x8x8xbf16>, vector<8x8x8xbf16>, vector<8x8x8xf32> -> vector<8x8x8xf32>
    "tpu.trace_stop"() : () -> ()
    %cst_13 = arith.constant 0.353553385 : f32
    %53 = vector.broadcast %cst_13 : f32 to vector<8x8x8xf32>
    %54 = arith.mulf %52, %53 : vector<8x8x8xf32>
    %cst_14 = arith.constant dense<0xFF800000> : vector<8x8xf32>
    %55 = vector.multi_reduction <maximumf>, %54, %cst_14 [2] : vector<8x8x8xf32> to vector<8x8xf32>
    %56 = vector.shape_cast %55 : vector<8x8xf32> to vector<8x8x1xf32>
    %57 = vector.broadcast %56 : vector<8x8x1xf32> to vector<8x8x8xf32>
    %58 = arith.subf %54, %57 : vector<8x8x8xf32>
    %59 = math.exp %58 : vector<8x8x8xf32>
    %cst_15 = arith.constant dense<0.000000e+00> : vector<8x8xf32>
    %60 = vector.multi_reduction <add>, %59, %cst_15 [2] : vector<8x8x8xf32> to vector<8x8xf32>
    %61 = vector.shape_cast %60 : vector<8x8xf32> to vector<8x8x1xf32>
    %62 = tpu.reciprocal %61 {approx = true} : vector<8x8x1xf32> -> vector<8x8x1xf32>
    %63 = vector.broadcast %62 : vector<8x8x1xf32> to vector<8x8x8xf32>
    %64 = arith.mulf %59, %63 : vector<8x8x8xf32>
    %65 = arith.truncf %64 : vector<8x8x8xf32> to vector<8x8x8xbf16>
    "tpu.trace_start"() <{level = 10 : i32, message = "zqk,zkd->zqd"}> : () -> ()
    %cst_16 = arith.constant dense<0.000000e+00> : vector<8x8x8xf32>
    %66 = tpu.matmul %65, %51, %cst_16 {dimension_numbers = #tpu.dot_dimension_numbers<[2], [1], [1], [2], [0, 0, 0, 1, 1, 2], [0], [0]>} : vector<8x8x8xbf16>, vector<8x8x8xbf16>, vector<8x8x8xf32> -> vector<8x8x8xf32>
    "tpu.trace_stop"() : () -> ()
    %67 = vector.extract_strided_slice %66 {offsets = [0, 0, 0], sizes = [2, 8, 8], strides = [1, 1, 1]} : vector<8x8x8xf32> to vector<2x8x8xf32>
    %68 = vector.shape_cast %67 : vector<2x8x8xf32> to vector<16x8xf32>
    %69 = vector.extract_strided_slice %66 {offsets = [2, 0, 0], sizes = [2, 8, 8], strides = [1, 1, 1]} : vector<8x8x8xf32> to vector<2x8x8xf32>
    %70 = vector.shape_cast %69 : vector<2x8x8xf32> to vector<16x8xf32>
    %71 = vector.extract_strided_slice %66 {offsets = [4, 0, 0], sizes = [2, 8, 8], strides = [1, 1, 1]} : vector<8x8x8xf32> to vector<2x8x8xf32>
    %72 = vector.shape_cast %71 : vector<2x8x8xf32> to vector<16x8xf32>
    %73 = vector.extract_strided_slice %66 {offsets = [6, 0, 0], sizes = [2, 8, 8], strides = [1, 1, 1]} : vector<8x8x8xf32> to vector<2x8x8xf32>
    %74 = vector.shape_cast %73 : vector<2x8x8xf32> to vector<16x8xf32>
    %75 = tpu.concatenate %68, %70, %72, %74 in 1 : vector<16x8xf32>, vector<16x8xf32>, vector<16x8xf32>, vector<16x8xf32> -> vector<16x32xf32>
    %76 = arith.truncf %75 : vector<16x32xf32> to vector<16x32xbf16>
    %cst_17 = arith.constant dense<0.000000e+00> : vector<16x32xf32>
    %77 = tpu.matmul %76, %5, %cst_17 {dimension_numbers = #tpu.dot_dimension_numbers<[1], [0], [0], [1], [0, 0, 1, 1], [], []>} : vector<16x32xbf16>, vector<32x32xbf16>, vector<16x32xf32> -> vector<16x32xf32>
    %78 = vector.broadcast %11 : vector<1x32xf32> to vector<16x32xf32>
    %79 = arith.addf %77, %78 : vector<16x32xf32>
    %80 = arith.addf %0, %79 : vector<16x32xf32>
    %cst_18 = arith.constant dense<0.000000e+00> : vector<16xf32>
    %81 = vector.multi_reduction <add>, %80, %cst_18 [1] : vector<16x32xf32> to vector<16xf32>
    %82 = vector.shape_cast %81 : vector<16xf32> to vector<16x1xf32>
    %cst_19 = arith.constant 3.200000e+01 : f32
    %83 = vector.broadcast %cst_19 : f32 to vector<16x1xf32>
    %84 = arith.divf %82, %83 : vector<16x1xf32>
    %85 = vector.broadcast %84 : vector<16x1xf32> to vector<16x32xf32>
    %86 = arith.subf %80, %85 : vector<16x32xf32>
    %87 = arith.mulf %86, %86 : vector<16x32xf32>
    %cst_20 = arith.constant dense<0.000000e+00> : vector<16xf32>
    %88 = vector.multi_reduction <add>, %87, %cst_20 [1] : vector<16x32xf32> to vector<16xf32>
    %89 = vector.shape_cast %88 : vector<16xf32> to vector<16x1xf32>
    %cst_21 = arith.constant 3.200000e+01 : f32
    %90 = vector.broadcast %cst_21 : f32 to vector<16x1xf32>
    %91 = arith.divf %89, %90 : vector<16x1xf32>
    %92 = vector.broadcast %84 : vector<16x1xf32> to vector<16x32xf32>
    %93 = arith.subf %80, %92 : vector<16x32xf32>
    %cst_22 = arith.constant 9.99999996E-13 : f32
    %94 = vector.broadcast %cst_22 : f32 to vector<16x1xf32>
    %95 = arith.addf %91, %94 : vector<16x1xf32>
    %96 = math.rsqrt %95 : vector<16x1xf32>
    %97 = vector.broadcast %96 : vector<16x1xf32> to vector<16x32xf32>
    %98 = arith.mulf %93, %97 : vector<16x32xf32>
    %99 = vector.broadcast %14 : vector<1x32xf32> to vector<16x32xf32>
    %100 = arith.mulf %98, %99 : vector<16x32xf32>
    %101 = vector.broadcast %15 : vector<1x32xf32> to vector<16x32xf32>
    %102 = arith.addf %100, %101 : vector<16x32xf32>
    %103 = arith.truncf %102 : vector<16x32xf32> to vector<16x32xbf16>
    %cst_23 = arith.constant dense<0.000000e+00> : vector<16x128xf32>
    %104 = tpu.matmul %103, %4, %cst_23 {dimension_numbers = #tpu.dot_dimension_numbers<[1], [0], [0], [1], [0, 0, 1, 1], [], []>} : vector<16x32xbf16>, vector<32x128xbf16>, vector<16x128xf32> -> vector<16x128xf32>
    %105 = vector.broadcast %12 : vector<1x128xf32> to vector<16x128xf32>
    %106 = arith.addf %104, %105 : vector<16x128xf32>
    %107 = arith.mulf %106, %106 : vector<16x128xf32>
    %108 = arith.mulf %106, %107 : vector<16x128xf32>
    %cst_24 = arith.constant 4.471500e-02 : f32
    %109 = vector.broadcast %cst_24 : f32 to vector<16x128xf32>
    %110 = arith.mulf %109, %108 : vector<16x128xf32>
    %111 = arith.addf %106, %110 : vector<16x128xf32>
    %cst_25 = arith.constant 0.797884583 : f32
    %112 = vector.broadcast %cst_25 : f32 to vector<16x128xf32>
    %113 = arith.mulf %112, %111 : vector<16x128xf32>
    %114 = math.tanh %113 : vector<16x128xf32>
    %cst_26 = arith.constant 1.000000e+00 : f32
    %115 = vector.broadcast %cst_26 : f32 to vector<16x128xf32>
    %116 = arith.addf %115, %114 : vector<16x128xf32>
    %cst_27 = arith.constant 5.000000e-01 : f32
    %117 = vector.broadcast %cst_27 : f32 to vector<16x128xf32>
    %118 = arith.mulf %117, %116 : vector<16x128xf32>
    %119 = arith.mulf %106, %118 : vector<16x128xf32>
    %120 = arith.truncf %119 : vector<16x128xf32> to vector<16x128xbf16>
    %cst_28 = arith.constant dense<0.000000e+00> : vector<16x32xf32>
    %121 = tpu.matmul %120, %7, %cst_28 {dimension_numbers = #tpu.dot_dimension_numbers<[1], [0], [0], [1], [0, 0, 1, 1], [], []>} : vector<16x128xbf16>, vector<128x32xbf16>, vector<16x32xf32> -> vector<16x32xf32>
    %122 = vector.broadcast %13 : vector<1x32xf32> to vector<16x32xf32>
    %123 = arith.addf %121, %122 : vector<16x32xf32>
    %124 = arith.addf %102, %123 : vector<16x32xf32>
    %cst_29 = arith.constant dense<0.000000e+00> : vector<16xf32>
    %125 = vector.multi_reduction <add>, %124, %cst_29 [1] : vector<16x32xf32> to vector<16xf32>
    %126 = vector.shape_cast %125 : vector<16xf32> to vector<16x1xf32>
    %cst_30 = arith.constant 3.200000e+01 : f32
    %127 = vector.broadcast %cst_30 : f32 to vector<16x1xf32>
    %128 = arith.divf %126, %127 : vector<16x1xf32>
    %129 = vector.broadcast %128 : vector<16x1xf32> to vector<16x32xf32>
    %130 = arith.subf %124, %129 : vector<16x32xf32>
    %131 = arith.mulf %130, %130 : vector<16x32xf32>
    %cst_31 = arith.constant dense<0.000000e+00> : vector<16xf32>
    %132 = vector.multi_reduction <add>, %131, %cst_31 [1] : vector<16x32xf32> to vector<16xf32>
    %133 = vector.shape_cast %132 : vector<16xf32> to vector<16x1xf32>
    %cst_32 = arith.constant 3.200000e+01 : f32
    %134 = vector.broadcast %cst_32 : f32 to vector<16x1xf32>
    %135 = arith.divf %133, %134 : vector<16x1xf32>
    %136 = vector.broadcast %128 : vector<16x1xf32> to vector<16x32xf32>
    %137 = arith.subf %124, %136 : vector<16x32xf32>
    %cst_33 = arith.constant 9.99999996E-13 : f32
    %138 = vector.broadcast %cst_33 : f32 to vector<16x1xf32>
    %139 = arith.addf %135, %138 : vector<16x1xf32>
    %140 = math.rsqrt %139 : vector<16x1xf32>
    %141 = vector.broadcast %140 : vector<16x1xf32> to vector<16x32xf32>
    %142 = arith.mulf %137, %141 : vector<16x32xf32>
    %143 = vector.broadcast %16 : vector<1x32xf32> to vector<16x32xf32>
    %144 = arith.mulf %142, %143 : vector<16x32xf32>
    %145 = vector.broadcast %17 : vector<1x32xf32> to vector<16x32xf32>
    %146 = arith.addf %144, %145 : vector<16x32xf32>
    %c1 = arith.constant 1 : index
    %c0_34 = arith.constant 0 : index
    %c0_35 = arith.constant 0 : index
    %147 = vector.load %arg1[%c1, %c0_34, %c0_35] : memref<2x32x256xbf16, #tpu.memory_space<vmem>>, vector<1x32x128xbf16>
    %148 = vector.shape_cast %147 : vector<1x32x128xbf16> to vector<32x128xbf16>
    %c1_36 = arith.constant 1 : index
    %c0_37 = arith.constant 0 : index
    %c128_38 = arith.constant 128 : index
    %149 = vector.load %arg1[%c1_36, %c0_37, %c128_38] : memref<2x32x256xbf16, #tpu.memory_space<vmem>>, vector<1x32x128xbf16>
    %150 = vector.shape_cast %149 : vector<1x32x128xbf16> to vector<32x128xbf16>
    %151 = vector.extract_strided_slice %148 {offsets = [0, 96], sizes = [32, 32], strides = [1, 1]} : vector<32x128xbf16> to vector<32x32xbf16>
    %c1_39 = arith.constant 1 : index
    %c0_40 = arith.constant 0 : index
    %c0_41 = arith.constant 0 : index
    %152 = vector.load %arg2[%c1_39, %c0_40, %c0_41] : memref<2x128x32xbf16, #tpu.memory_space<vmem>>, vector<1x128x32xbf16>
    %153 = vector.shape_cast %152 : vector<1x128x32xbf16> to vector<128x32xbf16>
    %c1_42 = arith.constant 1 : index
    %c0_43 = arith.constant 0 : index
    %c0_44 = arith.constant 0 : index
    %154 = vector.load %arg3[%c1_42, %c0_43, %c0_44] : memref<2x8x128xf32, #tpu.memory_space<vmem>>, vector<1x8x128xf32>
    %155 = vector.shape_cast %154 : vector<1x8x128xf32> to vector<8x128xf32>
    %156 = vector.extract_strided_slice %155 {offsets = [0, 0], sizes = [1, 128], strides = [1, 1]} : vector<8x128xf32> to vector<1x128xf32>
    %157 = vector.extract_strided_slice %155 {offsets = [1, 0], sizes = [1, 32], strides = [1, 1]} : vector<8x128xf32> to vector<1x32xf32>
    %158 = vector.extract_strided_slice %155 {offsets = [2, 0], sizes = [1, 128], strides = [1, 1]} : vector<8x128xf32> to vector<1x128xf32>
    %159 = vector.extract_strided_slice %155 {offsets = [3, 0], sizes = [1, 32], strides = [1, 1]} : vector<8x128xf32> to vector<1x32xf32>
    %160 = vector.extract_strided_slice %155 {offsets = [4, 0], sizes = [1, 32], strides = [1, 1]} : vector<8x128xf32> to vector<1x32xf32>
    %161 = vector.extract_strided_slice %155 {offsets = [5, 0], sizes = [1, 32], strides = [1, 1]} : vector<8x128xf32> to vector<1x32xf32>
    %162 = vector.extract_strided_slice %155 {offsets = [6, 0], sizes = [1, 32], strides = [1, 1]} : vector<8x128xf32> to vector<1x32xf32>
    %163 = vector.extract_strided_slice %155 {offsets = [7, 0], sizes = [1, 32], strides = [1, 1]} : vector<8x128xf32> to vector<1x32xf32>
    %164 = arith.truncf %146 : vector<16x32xf32> to vector<16x32xbf16>
    %cst_45 = arith.constant dense<0.000000e+00> : vector<16x128xf32>
    %165 = tpu.matmul %164, %148, %cst_45 {dimension_numbers = #tpu.dot_dimension_numbers<[1], [0], [0], [1], [0, 0, 1, 1], [], []>} : vector<16x32xbf16>, vector<32x128xbf16>, vector<16x128xf32> -> vector<16x128xf32>
    %166 = vector.broadcast %156 : vector<1x128xf32> to vector<16x128xf32>
    %167 = arith.addf %165, %166 : vector<16x128xf32>
    %168 = vector.extract_strided_slice %167 {offsets = [0, 0], sizes = [16, 8], strides = [1, 1]} : vector<16x128xf32> to vector<16x8xf32>
    %169 = vector.shape_cast %168 : vector<16x8xf32> to vector<2x8x8xf32>
    %170 = vector.extract_strided_slice %167 {offsets = [0, 8], sizes = [16, 8], strides = [1, 1]} : vector<16x128xf32> to vector<16x8xf32>
    %171 = vector.shape_cast %170 : vector<16x8xf32> to vector<2x8x8xf32>
    %172 = vector.extract_strided_slice %167 {offsets = [0, 16], sizes = [16, 8], strides = [1, 1]} : vector<16x128xf32> to vector<16x8xf32>
    %173 = vector.shape_cast %172 : vector<16x8xf32> to vector<2x8x8xf32>
    %174 = vector.extract_strided_slice %167 {offsets = [0, 24], sizes = [16, 8], strides = [1, 1]} : vector<16x128xf32> to vector<16x8xf32>
    %175 = vector.shape_cast %174 : vector<16x8xf32> to vector<2x8x8xf32>
    %176 = tpu.concatenate %169, %171, %173, %175 in 0 : vector<2x8x8xf32>, vector<2x8x8xf32>, vector<2x8x8xf32>, vector<2x8x8xf32> -> vector<8x8x8xf32>
    %177 = arith.truncf %176 : vector<8x8x8xf32> to vector<8x8x8xbf16>
    %178 = vector.extract_strided_slice %167 {offsets = [0, 32], sizes = [16, 8], strides = [1, 1]} : vector<16x128xf32> to vector<16x8xf32>
    %179 = vector.shape_cast %178 : vector<16x8xf32> to vector<2x8x8xf32>
    %180 = vector.extract_strided_slice %167 {offsets = [0, 40], sizes = [16, 8], strides = [1, 1]} : vector<16x128xf32> to vector<16x8xf32>
    %181 = vector.shape_cast %180 : vector<16x8xf32> to vector<2x8x8xf32>
    %182 = vector.extract_strided_slice %167 {offsets = [0, 48], sizes = [16, 8], strides = [1, 1]} : vector<16x128xf32> to vector<16x8xf32>
    %183 = vector.shape_cast %182 : vector<16x8xf32> to vector<2x8x8xf32>
    %184 = vector.extract_strided_slice %167 {offsets = [0, 56], sizes = [16, 8], strides = [1, 1]} : vector<16x128xf32> to vector<16x8xf32>
    %185 = vector.shape_cast %184 : vector<16x8xf32> to vector<2x8x8xf32>
    %186 = tpu.concatenate %179, %181, %183, %185 in 0 : vector<2x8x8xf32>, vector<2x8x8xf32>, vector<2x8x8xf32>, vector<2x8x8xf32> -> vector<8x8x8xf32>
    %187 = arith.truncf %186 : vector<8x8x8xf32> to vector<8x8x8xbf16>
    %188 = vector.extract_strided_slice %167 {offsets = [0, 64], sizes = [16, 8], strides = [1, 1]} : vector<16x128xf32> to vector<16x8xf32>
    %189 = vector.shape_cast %188 : vector<16x8xf32> to vector<2x8x8xf32>
    %190 = vector.extract_strided_slice %167 {offsets = [0, 72], sizes = [16, 8], strides = [1, 1]} : vector<16x128xf32> to vector<16x8xf32>
    %191 = vector.shape_cast %190 : vector<16x8xf32> to vector<2x8x8xf32>
    %192 = vector.extract_strided_slice %167 {offsets = [0, 80], sizes = [16, 8], strides = [1, 1]} : vector<16x128xf32> to vector<16x8xf32>
    %193 = vector.shape_cast %192 : vector<16x8xf32> to vector<2x8x8xf32>
    %194 = vector.extract_strided_slice %167 {offsets = [0, 88], sizes = [16, 8], strides = [1, 1]} : vector<16x128xf32> to vector<16x8xf32>
    %195 = vector.shape_cast %194 : vector<16x8xf32> to vector<2x8x8xf32>
    %196 = tpu.concatenate %189, %191, %193, %195 in 0 : vector<2x8x8xf32>, vector<2x8x8xf32>, vector<2x8x8xf32>, vector<2x8x8xf32> -> vector<8x8x8xf32>
    %197 = arith.truncf %196 : vector<8x8x8xf32> to vector<8x8x8xbf16>
    "tpu.trace_start"() <{level = 10 : i32, message = "zqd,zkd->zqk"}> : () -> ()
    %cst_46 = arith.constant dense<0.000000e+00> : vector<8x8x8xf32>
    %198 = tpu.matmul %177, %187, %cst_46 {dimension_numbers = #tpu.dot_dimension_numbers<[2], [2], [1], [1], [0, 0, 0, 1, 1, 1], [0], [0]>} : vector<8x8x8xbf16>, vector<8x8x8xbf16>, vector<8x8x8xf32> -> vector<8x8x8xf32>
    "tpu.trace_stop"() : () -> ()
    %cst_47 = arith.constant 0.353553385 : f32
    %199 = vector.broadcast %cst_47 : f32 to vector<8x8x8xf32>
    %200 = arith.mulf %198, %199 : vector<8x8x8xf32>
    %cst_48 = arith.constant dense<0xFF800000> : vector<8x8xf32>
    %201 = vector.multi_reduction <maximumf>, %200, %cst_48 [2] : vector<8x8x8xf32> to vector<8x8xf32>
    %202 = vector.shape_cast %201 : vector<8x8xf32> to vector<8x8x1xf32>
    %203 = vector.broadcast %202 : vector<8x8x1xf32> to vector<8x8x8xf32>
    %204 = arith.subf %200, %203 : vector<8x8x8xf32>
    %205 = math.exp %204 : vector<8x8x8xf32>
    %cst_49 = arith.constant dense<0.000000e+00> : vector<8x8xf32>
    %206 = vector.multi_reduction <add>, %205, %cst_49 [2] : vector<8x8x8xf32> to vector<8x8xf32>
    %207 = vector.shape_cast %206 : vector<8x8xf32> to vector<8x8x1xf32>
    %208 = tpu.reciprocal %207 {approx = true} : vector<8x8x1xf32> -> vector<8x8x1xf32>
    %209 = vector.broadcast %208 : vector<8x8x1xf32> to vector<8x8x8xf32>
    %210 = arith.mulf %205, %209 : vector<8x8x8xf32>
    %211 = arith.truncf %210 : vector<8x8x8xf32> to vector<8x8x8xbf16>
    "tpu.trace_start"() <{level = 10 : i32, message = "zqk,zkd->zqd"}> : () -> ()
    %cst_50 = arith.constant dense<0.000000e+00> : vector<8x8x8xf32>
    %212 = tpu.matmul %211, %197, %cst_50 {dimension_numbers = #tpu.dot_dimension_numbers<[2], [1], [1], [2], [0, 0, 0, 1, 1, 2], [0], [0]>} : vector<8x8x8xbf16>, vector<8x8x8xbf16>, vector<8x8x8xf32> -> vector<8x8x8xf32>
    "tpu.trace_stop"() : () -> ()
    %213 = vector.extract_strided_slice %212 {offsets = [0, 0, 0], sizes = [2, 8, 8], strides = [1, 1, 1]} : vector<8x8x8xf32> to vector<2x8x8xf32>
    %214 = vector.shape_cast %213 : vector<2x8x8xf32> to vector<16x8xf32>
    %215 = vector.extract_strided_slice %212 {offsets = [2, 0, 0], sizes = [2, 8, 8], strides = [1, 1, 1]} : vector<8x8x8xf32> to vector<2x8x8xf32>
    %216 = vector.shape_cast %215 : vector<2x8x8xf32> to vector<16x8xf32>
    %217 = vector.extract_strided_slice %212 {offsets = [4, 0, 0], sizes = [2, 8, 8], strides = [1, 1, 1]} : vector<8x8x8xf32> to vector<2x8x8xf32>
    %218 = vector.shape_cast %217 : vector<2x8x8xf32> to vector<16x8xf32>
    %219 = vector.extract_strided_slice %212 {offsets = [6, 0, 0], sizes = [2, 8, 8], strides = [1, 1, 1]} : vector<8x8x8xf32> to vector<2x8x8xf32>
    %220 = vector.shape_cast %219 : vector<2x8x8xf32> to vector<16x8xf32>
    %221 = tpu.concatenate %214, %216, %218, %220 in 1 : vector<16x8xf32>, vector<16x8xf32>, vector<16x8xf32>, vector<16x8xf32> -> vector<16x32xf32>
    %222 = arith.truncf %221 : vector<16x32xf32> to vector<16x32xbf16>
    %cst_51 = arith.constant dense<0.000000e+00> : vector<16x32xf32>
    %223 = tpu.matmul %222, %151, %cst_51 {dimension_numbers = #tpu.dot_dimension_numbers<[1], [0], [0], [1], [0, 0, 1, 1], [], []>} : vector<16x32xbf16>, vector<32x32xbf16>, vector<16x32xf32> -> vector<16x32xf32>
    %224 = vector.broadcast %157 : vector<1x32xf32> to vector<16x32xf32>
    %225 = arith.addf %223, %224 : vector<16x32xf32>
    %226 = arith.addf %146, %225 : vector<16x32xf32>
    %cst_52 = arith.constant dense<0.000000e+00> : vector<16xf32>
    %227 = vector.multi_reduction <add>, %226, %cst_52 [1] : vector<16x32xf32> to vector<16xf32>
    %228 = vector.shape_cast %227 : vector<16xf32> to vector<16x1xf32>
    %cst_53 = arith.constant 3.200000e+01 : f32
    %229 = vector.broadcast %cst_53 : f32 to vector<16x1xf32>
    %230 = arith.divf %228, %229 : vector<16x1xf32>
    %231 = vector.broadcast %230 : vector<16x1xf32> to vector<16x32xf32>
    %232 = arith.subf %226, %231 : vector<16x32xf32>
    %233 = arith.mulf %232, %232 : vector<16x32xf32>
    %cst_54 = arith.constant dense<0.000000e+00> : vector<16xf32>
    %234 = vector.multi_reduction <add>, %233, %cst_54 [1] : vector<16x32xf32> to vector<16xf32>
    %235 = vector.shape_cast %234 : vector<16xf32> to vector<16x1xf32>
    %cst_55 = arith.constant 3.200000e+01 : f32
    %236 = vector.broadcast %cst_55 : f32 to vector<16x1xf32>
    %237 = arith.divf %235, %236 : vector<16x1xf32>
    %238 = vector.broadcast %230 : vector<16x1xf32> to vector<16x32xf32>
    %239 = arith.subf %226, %238 : vector<16x32xf32>
    %cst_56 = arith.constant 9.99999996E-13 : f32
    %240 = vector.broadcast %cst_56 : f32 to vector<16x1xf32>
    %241 = arith.addf %237, %240 : vector<16x1xf32>
    %242 = math.rsqrt %241 : vector<16x1xf32>
    %243 = vector.broadcast %242 : vector<16x1xf32> to vector<16x32xf32>
    %244 = arith.mulf %239, %243 : vector<16x32xf32>
    %245 = vector.broadcast %160 : vector<1x32xf32> to vector<16x32xf32>
    %246 = arith.mulf %244, %245 : vector<16x32xf32>
    %247 = vector.broadcast %161 : vector<1x32xf32> to vector<16x32xf32>
    %248 = arith.addf %246, %247 : vector<16x32xf32>
    %249 = arith.truncf %248 : vector<16x32xf32> to vector<16x32xbf16>
    %cst_57 = arith.constant dense<0.000000e+00> : vector<16x128xf32>
    %250 = tpu.matmul %249, %150, %cst_57 {dimension_numbers = #tpu.dot_dimension_numbers<[1], [0], [0], [1], [0, 0, 1, 1], [], []>} : vector<16x32xbf16>, vector<32x128xbf16>, vector<16x128xf32> -> vector<16x128xf32>
    %251 = vector.broadcast %158 : vector<1x128xf32> to vector<16x128xf32>
    %252 = arith.addf %250, %251 : vector<16x128xf32>
    %253 = arith.mulf %252, %252 : vector<16x128xf32>
    %254 = arith.mulf %252, %253 : vector<16x128xf32>
    %cst_58 = arith.constant 4.471500e-02 : f32
    %255 = vector.broadcast %cst_58 : f32 to vector<16x128xf32>
    %256 = arith.mulf %255, %254 : vector<16x128xf32>
    %257 = arith.addf %252, %256 : vector<16x128xf32>
    %cst_59 = arith.constant 0.797884583 : f32
    %258 = vector.broadcast %cst_59 : f32 to vector<16x128xf32>
    %259 = arith.mulf %258, %257 : vector<16x128xf32>
    %260 = math.tanh %259 : vector<16x128xf32>
    %cst_60 = arith.constant 1.000000e+00 : f32
    %261 = vector.broadcast %cst_60 : f32 to vector<16x128xf32>
    %262 = arith.addf %261, %260 : vector<16x128xf32>
    %cst_61 = arith.constant 5.000000e-01 : f32
    %263 = vector.broadcast %cst_61 : f32 to vector<16x128xf32>
    %264 = arith.mulf %263, %262 : vector<16x128xf32>
    %265 = arith.mulf %252, %264 : vector<16x128xf32>
    %266 = arith.truncf %265 : vector<16x128xf32> to vector<16x128xbf16>
    %cst_62 = arith.constant dense<0.000000e+00> : vector<16x32xf32>
    %267 = tpu.matmul %266, %153, %cst_62 {dimension_numbers = #tpu.dot_dimension_numbers<[1], [0], [0], [1], [0, 0, 1, 1], [], []>} : vector<16x128xbf16>, vector<128x32xbf16>, vector<16x32xf32> -> vector<16x32xf32>
    %268 = vector.broadcast %159 : vector<1x32xf32> to vector<16x32xf32>
    %269 = arith.addf %267, %268 : vector<16x32xf32>
    %270 = arith.addf %248, %269 : vector<16x32xf32>
    %cst_63 = arith.constant dense<0.000000e+00> : vector<16xf32>
    %271 = vector.multi_reduction <add>, %270, %cst_63 [1] : vector<16x32xf32> to vector<16xf32>
    %272 = vector.shape_cast %271 : vector<16xf32> to vector<16x1xf32>
    %cst_64 = arith.constant 3.200000e+01 : f32
    %273 = vector.broadcast %cst_64 : f32 to vector<16x1xf32>
    %274 = arith.divf %272, %273 : vector<16x1xf32>
    %275 = vector.broadcast %274 : vector<16x1xf32> to vector<16x32xf32>
    %276 = arith.subf %270, %275 : vector<16x32xf32>
    %277 = arith.mulf %276, %276 : vector<16x32xf32>
    %cst_65 = arith.constant dense<0.000000e+00> : vector<16xf32>
    %278 = vector.multi_reduction <add>, %277, %cst_65 [1] : vector<16x32xf32> to vector<16xf32>
    %279 = vector.shape_cast %278 : vector<16xf32> to vector<16x1xf32>
    %cst_66 = arith.constant 3.200000e+01 : f32
    %280 = vector.broadcast %cst_66 : f32 to vector<16x1xf32>
    %281 = arith.divf %279, %280 : vector<16x1xf32>
    %282 = vector.broadcast %274 : vector<16x1xf32> to vector<16x32xf32>
    %283 = arith.subf %270, %282 : vector<16x32xf32>
    %cst_67 = arith.constant 9.99999996E-13 : f32
    %284 = vector.broadcast %cst_67 : f32 to vector<16x1xf32>
    %285 = arith.addf %281, %284 : vector<16x1xf32>
    %286 = math.rsqrt %285 : vector<16x1xf32>
    %287 = vector.broadcast %286 : vector<16x1xf32> to vector<16x32xf32>
    %288 = arith.mulf %283, %287 : vector<16x32xf32>
    %289 = vector.broadcast %162 : vector<1x32xf32> to vector<16x32xf32>
    %290 = arith.mulf %288, %289 : vector<16x32xf32>
    %291 = vector.broadcast %163 : vector<1x32xf32> to vector<16x32xf32>
    %292 = arith.addf %290, %291 : vector<16x32xf32>
    %c0_68 = arith.constant 0 : index
    %c0_69 = arith.constant 0 : index
    %293 = vector.load %arg4[%c0_68, %c0_69] : memref<16x32xf32, #tpu.memory_space<vmem>>, vector<16x32xf32>
    tpu.vector_store %arg4[%c0_68, %c0_69], %292 {strides = array<i32>} : memref<16x32xf32, #tpu.memory_space<vmem>>, vector<16x32xf32>,
    return
  }
}

</mosaic_0001>

<llo_original>
// kernel: tpu_custom_call.1
$region0: #{tpu_custom_call.1}
  #allocation0 [shape = 'u32[]', space=smem, size = 0x4, offset = 0x4, fixed_abs, tag = 'smem constant byte address 0x4 - core index']
  #allocation1 [shape = 'u32[144,128]{1,0:T(1,128)}', space=vmem, size = 0x12000, scoped, tag = 'internal scratch']
  %s0 = inlined_call_operand.vmem [shape: f32[16,32], index: 0, kind: input, shape index: {}]
  %s1 = inlined_call_operand.vmem [shape: bf16[2,32,256], index: 1, kind: input, shape index: {}]
  %s2 = inlined_call_operand.vmem [shape: bf16[2,128,32], index: 2, kind: input, shape index: {}]
  %s3 = inlined_call_operand.vmem [shape: f32[2,8,128], index: 3, kind: input, shape index: {}]
  %s4 = inlined_call_operand.hbm [shape: f32[16,32], index: 4, kind: output, shape index: {}]
  %s5 = sld [smem:[#allocation0]]
  $region26: #{tpu_custom_call.1} parent=0
    _
  %s7 = ssub.s32 1, %s5
  %s8 = scalar_select 0, %s7, %s5
  $region1: #{tpu_custom_call.1} parent=0
    #allocation2 [shape = 'u8[8192]{0}', space=vmem, size = 0x2000, scoped, tag = 'output window, operand 0, single buffered']
    #allocation3 [shape = 's32[1]{0}', space=sflag, size = 0x4, scoped, tag = 'scoped memory for tpu_custom_call.1']
    %9 = vsyncpa [#allocation3], 0
    // Predicated region
    $region2: #{tpu_custom_call.1} parent=1 // pred_check
      _
    $region3: #{tpu_custom_call.1} parent=1 // pred_check_branch
      %11 = sbr.rel (0) target = $region5
    $region4: #{tpu_custom_call.1} parent=1 // pred_region
      _
    $region5: #{tpu_custom_call.1} parent=1 // pred_fallthru
      _
    // Predicated region
    $region6: #{tpu_custom_call.1} parent=1 // pred_check
      _
    $region7: #{tpu_custom_call.1} parent=1 // pred_check_branch
      %13 = sbr.rel (0) target = $region9
    $region8: #{tpu_custom_call.1} parent=1 // pred_region
      _
    $region9: #{tpu_custom_call.1} parent=1 // pred_fallthru
      _
    // Predicated region
    $region10: #{tpu_custom_call.1} parent=1 // pred_check
      _
    $region11: #{tpu_custom_call.1} parent=1 // pred_check_branch
      %15 = sbr.rel (0) target = $region13
    $region12: #{tpu_custom_call.1} parent=1 // pred_region
      _
    $region13: #{tpu_custom_call.1} parent=1 // pred_fallthru
      _
    // Predicated region
    $region14: #{tpu_custom_call.1} parent=1 // pred_check
      _
    $region15: #{tpu_custom_call.1} parent=1 // pred_check_branch
      %17 = sbr.rel (0) target = $region17
    $region16: #{tpu_custom_call.1} parent=1 // pred_region
      _
    $region17: #{tpu_custom_call.1} parent=1 // pred_fallthru
      _
    %v19 = vld [vmem:[%s0] sm:$0xff]
    %v20 = vld [vmem:[%s0 + $0x8] sm:$0xff]
    %v21 = vld [vmem:[%s1] sm:$0xf]
    %v22 = vld [vmem:[%s1 + $0x8] sm:$0xf]
    %v23 = vld [vmem:[%s1 + $0x10] sm:$0xf]
    %v24 = vld [vmem:[%s1 + $0x18] sm:$0xf]
    %v25 = vld [vmem:[%s1 + $0x4] sm:$0xf]
    %v26 = vld [vmem:[%s1 + $0xc] sm:$0xf]
    %v27 = vld [vmem:[%s1 + $0x14] sm:$0xf]
    %v28 = vld [vmem:[%s1 + $0x1c] sm:$0xf]
    %v29 = vld [vmem:[%s2] sm:$0xf]
    %v30 = vld [vmem:[%s2 + $0x4] sm:$0xf]
    %v31 = vld [vmem:[%s2 + $0x8] sm:$0xf]
    %v32 = vld [vmem:[%s2 + $0xc] sm:$0xf]
    %v33 = vld [vmem:[%s2 + $0x10] sm:$0xf]
    %v34 = vld [vmem:[%s2 + $0x14] sm:$0xf]
    %v35 = vld [vmem:[%s2 + $0x18] sm:$0xf]
    %v36 = vld [vmem:[%s2 + $0x1c] sm:$0xf]
    %v37 = vld [vmem:[%s2 + $0x20] sm:$0xf]
    %v38 = vld [vmem:[%s2 + $0x24] sm:$0xf]
    %v39 = vld [vmem:[%s2 + $0x28] sm:$0xf]
    %v40 = vld [vmem:[%s2 + $0x2c] sm:$0xf]
    %v41 = vld [vmem:[%s2 + $0x30] sm:$0xf]
    %v42 = vld [vmem:[%s2 + $0x34] sm:$0xf]
    %v43 = vld [vmem:[%s2 + $0x38] sm:$0xf]
    %v44 = vld [vmem:[%s2 + $0x3c] sm:$0xf]
    %v45 = vld [vmem:[%s3] sm:$0xff]
    %v46 = vpack.c.bf16 %v20, %v19
    %v47 = vlaneseq
    %v48 = vshrl.u32 %v47, 7
    %v49 = vsub.s32 0, %v48
    %v50 = vrot.slane %v45, %v49
    %v55 = vunpack.c.l.b16 %v21
    %v56 = vunpack.c.l.b16 %v22
    %v57 = vunpack.c.l.b16 %v23
    %v58 = vunpack.c.l.b16 %v24
    %v59 = vpack.c.b16 %v56, %v55
    %v60 = vpack.c.b16 %v58, %v57
    %vm63 = vcmask 261120
    %v65 = vsel %vm63, %v46, 0
    %67 = vmatprep.subr.bf16.mxu0 0
    %68 = vmatpush1.bf16.msra.mxu0 %v59
    %69 = vmatprep.subr.bf16.mxu0 0
    %70 = vmatpush1.bf16.msra.mxu0 %v60
    %71 = vmatprep.subr.bf16.mxu0 0
    %72 = vmatpush1.bf16.msra.mxu0 0
    %73 = vmatprep.subr.bf16.mxu0 0
    %74 = vmatpush1.bf16.msra.mxu0 0
    %75 = vmatprep.subr.bf16.mxu0 0
    %76 = vmatpush1.bf16.msra.mxu0 0
    %77 = vmatprep.subr.bf16.mxu0 0
    %78 = vmatpush1.bf16.msra.mxu0 0
    %79 = vmatprep.subr.bf16.mxu0 0
    %80 = vmatpush1.bf16.msra.mxu0 0
    %81 = vmatprep.subr.bf16.mxu0 0
    %82 = vmatpush1.bf16.msra.mxu0 0
    %83 = vmatprep.subr.bf16.mxu0 0
    %84 = vmatpush1.bf16.msra.mxu0 0
    %85 = vmatprep.subr.bf16.mxu0 0
    %86 = vmatpush1.bf16.msra.mxu0 0
    %87 = vmatprep.subr.bf16.mxu0 0
    %88 = vmatpush1.bf16.msra.mxu0 0
    %89 = vmatprep.subr.bf16.mxu0 0
    %90 = vmatpush1.bf16.msra.mxu0 0
    %91 = vmatprep.subr.bf16.mxu0 0
    %92 = vmatpush1.bf16.msra.mxu0 0
    %93 = vmatprep.subr.bf16.mxu0 0
    %94 = vmatpush1.bf16.msra.mxu0 0
    %95 = vmatprep.subr.bf16.mxu0 0
    %96 = vmatpush1.bf16.msra.mxu0 0
    %97 = vmatprep.subr.bf16.mxu0 0
    %98 = vmatpush1.bf16.msra.mxu0 0
    %99 = vmatprep.mubr.bf16.mxu0 0
    %100 = vmatmul.mubr.bf16.gmra.mrb[0].mxu0 %v65
    %v101 = vpop.f32.mrb[0].mxu0
    %v102 = vadd.f32 %v50, %v101
    %v103 = vpop.f32.mrb[0].mxu0
    %v104 = vpop.f32.mrb[0].mxu0
    %v105 = vadd.f32 %v50, %v104
    %v106 = vpop.f32.mrb[0].mxu0
    %107 = vdwg.mxu0
    %110 = vrot.lane.b32.xlu0 %v102, 120
    %v111 = vpop.permute.xlu0 %110
    %112 = vrot.lane.b32.xlu0 %v105, 120
    %v113 = vpop.permute.xlu0 %112
    %116 = vrot.lane.b32.xlu0 %v102, 112
    %v117 = vpop.permute.xlu0 %116
    %118 = vrot.lane.b32.xlu0 %v105, 112
    %v119 = vpop.permute.xlu0 %118
    %122 = vrot.lane.b32.xlu0 %v102, 104
    %v123 = vpop.permute.xlu0 %122
    %124 = vrot.lane.b32.xlu0 %v105, 104
    %v125 = vpop.permute.xlu0 %124
    %v128 = vpack.c.bf16 %v102, %v102
    %v129 = vpack.c.bf16 %v105, %v105
    %v130 = vpack.c.bf16 %v111, %v111
    %v131 = vpack.c.bf16 %v113, %v113
    %v132 = vpack.c.bf16 %v117, %v117
    %v133 = vpack.c.bf16 %v119, %v119
    %v134 = vpack.c.bf16 %v123, %v123
    %v135 = vpack.c.bf16 %v125, %v125
    %137 = vrot.lane.b32.xlu0 %v128, 96
    %v138 = vpop.permute.xlu0 %137
    %vm139 = vcmask 64512
    %v141 = vsel %vm139, %v128, 0
    %v144 = vsel %vm139, %v138, 0
    %146 = vmatprep.subr.bf16.mxu0 0
    %147 = vmatpush1.bf16.xpose.msra.mxu0 %v144
    %148 = vmatprep.subr.bf16.mxu0 0
    %149 = vmatpush1.bf16.xpose.msra.mxu0 0
    %150 = vmatprep.subr.bf16.mxu0 0
    %151 = vmatpush1.bf16.xpose.msra.mxu0 0
    %152 = vmatprep.subr.bf16.mxu0 0
    %153 = vmatpush1.bf16.xpose.msra.mxu0 0
    %154 = vmatprep.subr.bf16.mxu0 0
    %155 = vmatpush1.bf16.xpose.msra.mxu0 0
    %156 = vmatprep.subr.bf16.mxu0 0
    %157 = vmatpush1.bf16.xpose.msra.mxu0 0
    %158 = vmatprep.subr.bf16.mxu0 0
    %159 = vmatpush1.bf16.xpose.msra.mxu0 0
    %160 = vmatprep.subr.bf16.mxu0 0
    %161 = vmatpush1.bf16.xpose.msra.mxu0 0
    %162 = vmatprep.subr.bf16.mxu0 0
    %163 = vmatpush1.bf16.xpose.msra.mxu0 0
    %164 = vmatprep.subr.bf16.mxu0 0
    %165 = vmatpush1.bf16.xpose.msra.mxu0 0
    %166 = vmatprep.subr.bf16.mxu0 0
    %167 = vmatpush1.bf16.xpose.msra.mxu0 0
    %168 = vmatprep.subr.bf16.mxu0 0
    %169 = vmatpush1.bf16.xpose.msra.mxu0 0
    %170 = vmatprep.subr.bf16.mxu0 0
    %171 = vmatpush1.bf16.xpose.msra.mxu0 0
    %172 = vmatprep.subr.bf16.mxu0 0
    %173 = vmatpush1.bf16.xpose.msra.mxu0 0
    %174 = vmatprep.subr.bf16.mxu0 0
    %175 = vmatpush1.bf16.xpose.msra.mxu0 0
    %176 = vmatprep.subr.bf16.mxu0 0
    %177 = vmatpush1.bf16.xpose.msra.mxu0 0
    %178 = vmatprep.mubr.bf16.mxu0 0
    %179 = vmatmul.mubr.bf16.gmra.mrb[0].mxu0 %v141
    %v180 = vpop.f32.mrb[0].mxu0
    %v181 = vadd.f32 0.0, %v180
    %v182 = vpop.f32.mrb[0].mxu0
    %v183 = vpop.f32.mrb[0].mxu0
    %v184 = vpop.f32.mrb[0].mxu0
    %185 = vdwg.mxu0
    %187 = vrot.lane.b32.xlu0 %v129, 96
    %v188 = vpop.permute.xlu0 %187
    %v190 = vsel %vm139, %v129, 0
    %v193 = vsel %vm139, %v188, 0
    %195 = vmatprep.subr.bf16.mxu0 0
    %196 = vmatpush1.bf16.xpose.msra.mxu0 %v193
    %197 = vmatprep.subr.bf16.mxu0 0
    %198 = vmatpush1.bf16.xpose.msra.mxu0 0
    %199 = vmatprep.subr.bf16.mxu0 0
    %200 = vmatpush1.bf16.xpose.msra.mxu0 0
    %201 = vmatprep.subr.bf16.mxu0 0
    %202 = vmatpush1.bf16.xpose.msra.mxu0 0
    %203 = vmatprep.subr.bf16.mxu0 0
    %204 = vmatpush1.bf16.xpose.msra.mxu0 0
    %205 = vmatprep.subr.bf16.mxu0 0
    %206 = vmatpush1.bf16.xpose.msra.mxu0 0
    %207 = vmatprep.subr.bf16.mxu0 0
    %208 = vmatpush1.bf16.xpose.msra.mxu0 0
    %209 = vmatprep.subr.bf16.mxu0 0
    %210 = vmatpush1.bf16.xpose.msra.mxu0 0
    %211 = vmatprep.subr.bf16.mxu0 0
    %212 = vmatpush1.bf16.xpose.msra.mxu0 0
    %213 = vmatprep.subr.bf16.mxu0 0
    %214 = vmatpush1.bf16.xpose.msra.mxu0 0
    %215 = vmatprep.subr.bf16.mxu0 0
    %216 = vmatpush1.bf16.xpose.msra.mxu0 0
    %217 = vmatprep.subr.bf16.mxu0 0
    %218 = vmatpush1.bf16.xpose.msra.mxu0 0
    %219 = vmatprep.subr.bf16.mxu0 0
    %220 = vmatpush1.bf16.xpose.msra.mxu0 0
    %221 = vmatprep.subr.bf16.mxu0 0
    %222 = vmatpush1.bf16.xpose.msra.mxu0 0
    %223 = vmatprep.subr.bf16.mxu0 0
    %224 = vmatpush1.bf16.xpose.msra.mxu0 0
    %225 = vmatprep.subr.bf16.mxu0 0
    %226 = vmatpush1.bf16.xpose.msra.mxu0 0
    %227 = vmatprep.mubr.bf16.mxu0 0
    %228 = vmatmul.mubr.bf16.gmra.mrb[0].mxu0 %v190
    %v229 = vpop.f32.mrb[0].mxu0
    %v230 = vadd.f32 0.0, %v229
    %v231 = vpop.f32.mrb[0].mxu0
    %v232 = vpop.f32.mrb[0].mxu0
    %v233 = vpop.f32.mrb[0].mxu0
    %234 = vdwg.mxu0
    %236 = vrot.lane.b32.xlu0 %v130, 96
    %v237 = vpop.permute.xlu0 %236
    %v239 = vsel %vm139, %v130, 0
    %v242 = vsel %vm139, %v237, 0
    %244 = vmatprep.subr.bf16.mxu0 0
    %245 = vmatpush1.bf16.xpose.msra.mxu0 %v242
    %246 = vmatprep.subr.bf16.mxu0 0
    %247 = vmatpush1.bf16.xpose.msra.mxu0 0
    %248 = vmatprep.subr.bf16.mxu0 0
    %249 = vmatpush1.bf16.xpose.msra.mxu0 0
    %250 = vmatprep.subr.bf16.mxu0 0
    %251 = vmatpush1.bf16.xpose.msra.mxu0 0
    %252 = vmatprep.subr.bf16.mxu0 0
    %253 = vmatpush1.bf16.xpose.msra.mxu0 0
    %254 = vmatprep.subr.bf16.mxu0 0
    %255 = vmatpush1.bf16.xpose.msra.mxu0 0
    %256 = vmatprep.subr.bf16.mxu0 0
    %257 = vmatpush1.bf16.xpose.msra.mxu0 0
    %258 = vmatprep.subr.bf16.mxu0 0
    %259 = vmatpush1.bf16.xpose.msra.mxu0 0
    %260 = vmatprep.subr.bf16.mxu0 0
    %261 = vmatpush1.bf16.xpose.msra.mxu0 0
    %262 = vmatprep.subr.bf16.mxu0 0
    %263 = vmatpush1.bf16.xpose.msra.mxu0 0
    %264 = vmatprep.subr.bf16.mxu0 0
    %265 = vmatpush1.bf16.xpose.msra.mxu0 0
    %266 = vmatprep.subr.bf16.mxu0 0
    %267 = vmatpush1.bf16.xpose.msra.mxu0 0
    %268 = vmatprep.subr.bf16.mxu0 0
    %269 = vmatpush1.bf16.xpose.msra.mxu0 0
    %270 = vmatprep.subr.bf16.mxu0 0
    %271 = vmatpush1.bf16.xpose.msra.mxu0 0
    %272 = vmatprep.subr.bf16.mxu0 0
    %273 = vmatpush1.bf16.xpose.msra.mxu0 0
    %274 = vmatprep.subr.bf16.mxu0 0
    %275 = vmatpush1.bf16.xpose.msra.mxu0 0
    %276 = vmatprep.mubr.bf16.mxu0 0
    %277 = vmatmul.mubr.bf16.gmra.mrb[0].mxu0 %v239
    %v278 = vpop.f32.mrb[0].mxu0
    %v279 = vadd.f32 0.0, %v278
    %v280 = vpop.f32.mrb[0].mxu0
    %v281 = vpop.f32.mrb[0].mxu0
    %v282 = vpop.f32.mrb[0].mxu0
    %283 = vdwg.mxu0
    %285 = vrot.lane.b32.xlu0 %v131, 96
    %v286 = vpop.permute.xlu0 %285
    %v288 = vsel %vm139, %v131, 0
    %v291 = vsel %vm139, %v286, 0
    %293 = vmatprep.subr.bf16.mxu0 0
    %294 = vmatpush1.bf16.xpose.msra.mxu0 %v291
    %295 = vmatprep.subr.bf16.mxu0 0
    %296 = vmatpush1.bf16.xpose.msra.mxu0 0
    %297 = vmatprep.subr.bf16.mxu0 0
    %298 = vmatpush1.bf16.xpose.msra.mxu0 0
    %299 = vmatprep.subr.bf16.mxu0 0
    %300 = vmatpush1.bf16.xpose.msra.mxu0 0
    %301 = vmatprep.subr.bf16.mxu0 0
    %302 = vmatpush1.bf16.xpose.msra.mxu0 0
    %303 = vmatprep.subr.bf16.mxu0 0
    %304 = vmatpush1.bf16.xpose.msra.mxu0 0
    %305 = vmatprep.subr.bf16.mxu0 0
    %306 = vmatpush1.bf16.xpose.msra.mxu0 0
    %307 = vmatprep.subr.bf16.mxu0 0
    %308 = vmatpush1.bf16.xpose.msra.mxu0 0
    %309 = vmatprep.subr.bf16.mxu0 0
    %310 = vmatpush1.bf16.xpose.msra.mxu0 0
    %311 = vmatprep.subr.bf16.mxu0 0
    %312 = vmatpush1.bf16.xpose.msra.mxu0 0
    %313 = vmatprep.subr.bf16.mxu0 0
    %314 = vmatpush1.bf16.xpose.msra.mxu0 0
    %315 = vmatprep.subr.bf16.mxu0 0
    %316 = vmatpush1.bf16.xpose.msra.mxu0 0
    %317 = vmatprep.subr.bf16.mxu0 0
    %318 = vmatpush1.bf16.xpose.msra.mxu0 0
    %319 = vmatprep.subr.bf16.mxu0 0
    %320 = vmatpush1.bf16.xpose.msra.mxu0 0
    %321 = vmatprep.subr.bf16.mxu0 0
    %322 = vmatpush1.bf16.xpose.msra.mxu0 0
    %323 = vmatprep.subr.bf16.mxu0 0
    %324 = vmatpush1.bf16.xpose.msra.mxu0 0
    %325 = vmatprep.mubr.bf16.mxu0 0
    %326 = vmatmul.mubr.bf16.gmra.mrb[0].mxu0 %v288
    %v327 = vpop.f32.mrb[0].mxu0
    %v328 = vadd.f32 0.0, %v327
    %v329 = vpop.f32.mrb[0].mxu0
    %v330 = vpop.f32.mrb[0].mxu0
    %v331 = vpop.f32.mrb[0].mxu0
    %332 = vdwg.mxu0
    %334 = vrot.lane.b32.xlu0 %v132, 96
    %v335 = vpop.permute.xlu0 %334
    %v337 = vsel %vm139, %v132, 0
    %v340 = vsel %vm139, %v335, 0
    %342 = vmatprep.subr.bf16.mxu0 0
    %343 = vmatpush1.bf16.xpose.msra.mxu0 %v340
    %344 = vmatprep.subr.bf16.mxu0 0
    %345 = vmatpush1.bf16.xpose.msra.mxu0 0
    %346 = vmatprep.subr.bf16.mxu0 0
    %347 = vmatpush1.bf16.xpose.msra.mxu0 0
    %348 = vmatprep.subr.bf16.mxu0 0
    %349 = vmatpush1.bf16.xpose.msra.mxu0 0
    %350 = vmatprep.subr.bf16.mxu0 0
    %351 = vmatpush1.bf16.xpose.msra.mxu0 0
    %352 = vmatprep.subr.bf16.mxu0 0
    %353 = vmatpush1.bf16.xpose.msra.mxu0 0
    %354 = vmatprep.subr.bf16.mxu0 0
    %355 = vmatpush1.bf16.xpose.msra.mxu0 0
    %356 = vmatprep.subr.bf16.mxu0 0
    %357 = vmatpush1.bf16.xpose.msra.mxu0 0
    %358 = vmatprep.subr.bf16.mxu0 0
    %359 = vmatpush1.bf16.xpose.msra.mxu0 0
    %360 = vmatprep.subr.bf16.mxu0 0
    %361 = vmatpush1.bf16.xpose.msra.mxu0 0
    %362 = vmatprep.subr.bf16.mxu0 0
    %363 = vmatpush1.bf16.xpose.msra.mxu0 0
    %364 = vmatprep.subr.bf16.mxu0 0
    %365 = vmatpush1.bf16.xpose.msra.mxu0 0
    %366 = vmatprep.subr.bf16.mxu0 0
    %367 = vmatpush1.bf16.xpose.msra.mxu0 0
    %368 = vmatprep.subr.bf16.mxu0 0
    %369 = vmatpush1.bf16.xpose.msra.mxu0 0
    %370 = vmatprep.subr.bf16.mxu0 0
    %371 = vmatpush1.bf16.xpose.msra.mxu0 0
    %372 = vmatprep.subr.bf16.mxu0 0
    %373 = vmatpush1.bf16.xpose.msra.mxu0 0
    %374 = vmatprep.mubr.bf16.mxu0 0
    %375 = vmatmul.mubr.bf16.gmra.mrb[0].mxu0 %v337
    %v376 = vpop.f32.mrb[0].mxu0
    %v377 = vadd.f32 0.0, %v376
    %v378 = vpop.f32.mrb[0].mxu0
    %v379 = vpop.f32.mrb[0].mxu0
    %v380 = vpop.f32.mrb[0].mxu0
    %381 = vdwg.mxu0
    %383 = vrot.lane.b32.xlu0 %v133, 96
    %v384 = vpop.permute.xlu0 %383
    %v386 = vsel %vm139, %v133, 0
    %v389 = vsel %vm139, %v384, 0
    %391 = vmatprep.subr.bf16.mxu0 0
    %392 = vmatpush1.bf16.xpose.msra.mxu0 %v389
    %393 = vmatprep.subr.bf16.mxu0 0
    %394 = vmatpush1.bf16.xpose.msra.mxu0 0
    %395 = vmatprep.subr.bf16.mxu0 0
    %396 = vmatpush1.bf16.xpose.msra.mxu0 0
    %397 = vmatprep.subr.bf16.mxu0 0
    %398 = vmatpush1.bf16.xpose.msra.mxu0 0
    %399 = vmatprep.subr.bf16.mxu0 0
    %400 = vmatpush1.bf16.xpose.msra.mxu0 0
    %401 = vmatprep.subr.bf16.mxu0 0
    %402 = vmatpush1.bf16.xpose.msra.mxu0 0
    %403 = vmatprep.subr.bf16.mxu0 0
    %404 = vmatpush1.bf16.xpose.msra.mxu0 0
    %405 = vmatprep.subr.bf16.mxu0 0
    %406 = vmatpush1.bf16.xpose.msra.mxu0 0
    %407 = vmatprep.subr.bf16.mxu0 0
    %408 = vmatpush1.bf16.xpose.msra.mxu0 0
    %409 = vmatprep.subr.bf16.mxu0 0
    %410 = vmatpush1.bf16.xpose.msra.mxu0 0
    %411 = vmatprep.subr.bf16.mxu0 0
    %412 = vmatpush1.bf16.xpose.msra.mxu0 0
    %413 = vmatprep.subr.bf16.mxu0 0
    %414 = vmatpush1.bf16.xpose.msra.mxu0 0
    %415 = vmatprep.subr.bf16.mxu0 0
    %416 = vmatpush1.bf16.xpose.msra.mxu0 0
    %417 = vmatprep.subr.bf16.mxu0 0
    %418 = vmatpush1.bf16.xpose.msra.mxu0 0
    %419 = vmatprep.subr.bf16.mxu0 0
    %420 = vmatpush1.bf16.xpose.msra.mxu0 0
    %421 = vmatprep.subr.bf16.mxu0 0
    %422 = vmatpush1.bf16.xpose.msra.mxu0 0
    %423 = vmatprep.mubr.bf16.mxu0 0
    %424 = vmatmul.mubr.bf16.gmra.mrb[0].mxu0 %v386
    %v425 = vpop.f32.mrb[0].mxu0
    %v426 = vadd.f32 0.0, %v425
    %v427 = vpop.f32.mrb[0].mxu0
    %v428 = vpop.f32.mrb[0].mxu0
    %v429 = vpop.f32.mrb[0].mxu0
    %430 = vdwg.mxu0
    %432 = vrot.lane.b32.xlu0 %v134, 96
    %v433 = vpop.permute.xlu0 %432
    %v435 = vsel %vm139, %v134, 0
    %v438 = vsel %vm139, %v433, 0
    %440 = vmatprep.subr.bf16.mxu0 0
    %441 = vmatpush1.bf16.xpose.msra.mxu0 %v438
    %442 = vmatprep.subr.bf16.mxu0 0
    %443 = vmatpush1.bf16.xpose.msra.mxu0 0
    %444 = vmatprep.subr.bf16.mxu0 0
    %445 = vmatpush1.bf16.xpose.msra.mxu0 0
    %446 = vmatprep.subr.bf16.mxu0 0
    %447 = vmatpush1.bf16.xpose.msra.mxu0 0
    %448 = vmatprep.subr.bf16.mxu0 0
    %449 = vmatpush1.bf16.xpose.msra.mxu0 0
    %450 = vmatprep.subr.bf16.mxu0 0
    %451 = vmatpush1.bf16.xpose.msra.mxu0 0
    %452 = vmatprep.subr.bf16.mxu0 0
    %453 = vmatpush1.bf16.xpose.msra.mxu0 0
    %454 = vmatprep.subr.bf16.mxu0 0
    %455 = vmatpush1.bf16.xpose.msra.mxu0 0
    %456 = vmatprep.subr.bf16.mxu0 0
    %457 = vmatpush1.bf16.xpose.msra.mxu0 0
    %458 = vmatprep.subr.bf16.mxu0 0
    %459 = vmatpush1.bf16.xpose.msra.mxu0 0
    %460 = vmatprep.subr.bf16.mxu0 0
    %461 = vmatpush1.bf16.xpose.msra.mxu0 0
    %462 = vmatprep.subr.bf16.mxu0 0
    %463 = vmatpush1.bf16.xpose.msra.mxu0 0
    %464 = vmatprep.subr.bf16.mxu0 0
    %465 = vmatpush1.bf16.xpose.msra.mxu0 0
    %466 = vmatprep.subr.bf16.mxu0 0
    %467 = vmatpush1.bf16.xpose.msra.mxu0 0
    %468 = vmatprep.subr.bf16.mxu0 0
    %469 = vmatpush1.bf16.xpose.msra.mxu0 0
    %470 = vmatprep.subr.bf16.mxu0 0
    %471 = vmatpush1.bf16.xpose.msra.mxu0 0
    %472 = vmatprep.mubr.bf16.mxu0 0
    %473 = vmatmul.mubr.bf16.gmra.mrb[0].mxu0 %v435
    %v474 = vpop.f32.mrb[0].mxu0
    %v475 = vadd.f32 0.0, %v474
    %v476 = vpop.f32.mrb[0].mxu0
    %v477 = vpop.f32.mrb[0].mxu0
    %v478 = vpop.f32.mrb[0].mxu0
    %479 = vdwg.mxu0
    %481 = vrot.lane.b32.xlu0 %v135, 96
    %v482 = vpop.permute.xlu0 %481
    %v484 = vsel %vm139, %v135, 0
    %v487 = vsel %vm139, %v482, 0
    %489 = vmatprep.subr.bf16.mxu0 0
    %490 = vmatpush1.bf16.xpose.msra.mxu0 %v487
    %491 = vmatprep.subr.bf16.mxu0 0
    %492 = vmatpush1.bf16.xpose.msra.mxu0 0
    %493 = vmatprep.subr.bf16.mxu0 0
    %494 = vmatpush1.bf16.xpose.msra.mxu0 0
    %495 = vmatprep.subr.bf16.mxu0 0
    %496 = vmatpush1.bf16.xpose.msra.mxu0 0
    %497 = vmatprep.subr.bf16.mxu0 0
    %498 = vmatpush1.bf16.xpose.msra.mxu0 0
    %499 = vmatprep.subr.bf16.mxu0 0
    %500 = vmatpush1.bf16.xpose.msra.mxu0 0
    %501 = vmatprep.subr.bf16.mxu0 0
    %502 = vmatpush1.bf16.xpose.msra.mxu0 0
    %503 = vmatprep.subr.bf16.mxu0 0
    %504 = vmatpush1.bf16.xpose.msra.mxu0 0
    %505 = vmatprep.subr.bf16.mxu0 0
    %506 = vmatpush1.bf16.xpose.msra.mxu0 0
    %507 = vmatprep.subr.bf16.mxu0 0
    %508 = vmatpush1.bf16.xpose.msra.mxu0 0
    %509 = vmatprep.subr.bf16.mxu0 0
    %510 = vmatpush1.bf16.xpose.msra.mxu0 0
    %511 = vmatprep.subr.bf16.mxu0 0
    %512 = vmatpush1.bf16.xpose.msra.mxu0 0
    %513 = vmatprep.subr.bf16.mxu0 0
    %514 = vmatpush1.bf16.xpose.msra.mxu0 0
    %515 = vmatprep.subr.bf16.mxu0 0
    %516 = vmatpush1.bf16.xpose.msra.mxu0 0
    %517 = vmatprep.subr.bf16.mxu0 0
    %518 = vmatpush1.bf16.xpose.msra.mxu0 0
    %519 = vmatprep.subr.bf16.mxu0 0
    %520 = vmatpush1.bf16.xpose.msra.mxu0 0
    %521 = vmatprep.mubr.bf16.mxu0 0
    %522 = vmatmul.mubr.bf16.gmra.mrb[0].mxu0 %v484
    %v523 = vpop.f32.mrb[0].mxu0
    %v524 = vadd.f32 0.0, %v523
    %v525 = vpop.f32.mrb[0].mxu0
    %v526 = vpop.f32.mrb[0].mxu0
    %v527 = vpop.f32.mrb[0].mxu0
    %528 = vdwg.mxu0
    %v529 = vmul.f32 %v181, 0.35355338
    %v530 = vmul.f32 %v230, 0.35355338
    %v531 = vmul.f32 %v279, 0.35355338
    %v532 = vmul.f32 %v328, 0.35355338
    %v533 = vmul.f32 %v377, 0.35355338
    %v534 = vmul.f32 %v426, 0.35355338
    %v535 = vmul.f32 %v475, 0.35355338
    %v536 = vmul.f32 %v524, 0.35355338
    %v537 = vsel %vm139, %v529, -inf
    %538 = vmax.xlane.f32.xlu0 %v537
    %v539 = vpop.xlane.xlu0 %538
    %v540 = vsel %vm139, %v530, -inf
    %541 = vmax.xlane.f32.xlu0 %v540
    %v542 = vpop.xlane.xlu0 %541
    %v543 = vsel %vm139, %v531, -inf
    %544 = vmax.xlane.f32.xlu0 %v543
    %v545 = vpop.xlane.xlu0 %544
    %v546 = vsel %vm139, %v532, -inf
    %547 = vmax.xlane.f32.xlu0 %v546
    %v548 = vpop.xlane.xlu0 %547
    %v549 = vsel %vm139, %v533, -inf
    %550 = vmax.xlane.f32.xlu0 %v549
    %v551 = vpop.xlane.xlu0 %550
    %v552 = vsel %vm139, %v534, -inf
    %553 = vmax.xlane.f32.xlu0 %v552
    %v554 = vpop.xlane.xlu0 %553
    %v555 = vsel %vm139, %v535, -inf
    %556 = vmax.xlane.f32.xlu0 %v555
    %v557 = vpop.xlane.xlu0 %556
    %v558 = vsel %vm139, %v536, -inf
    %559 = vmax.xlane.f32.xlu0 %v558
    %v560 = vpop.xlane.xlu0 %559
    %v561 = vsub.f32 %v529, %v539
    %v562 = vsub.f32 %v530, %v542
    %v563 = vsub.f32 %v531, %v545
    %v564 = vsub.f32 %v532, %v548
    %v565 = vsub.f32 %v533, %v551
    %v566 = vsub.f32 %v534, %v554
    %v567 = vsub.f32 %v535, %v557
    %v568 = vsub.f32 %v536, %v560
    %v569 = vmul.f32 %v561, 1.442695
    %v570 = vpow.pop %v569
    %v571 = vmul.f32 %v562, 1.442695
    %v572 = vpow.pop %v571
    %v573 = vmul.f32 %v563, 1.442695
    %v574 = vpow.pop %v573
    %v575 = vmul.f32 %v564, 1.442695
    %v576 = vpow.pop %v575
    %v577 = vmul.f32 %v565, 1.442695
    %v578 = vpow.pop %v577
    %v579 = vmul.f32 %v566, 1.442695
    %v580 = vpow.pop %v579
    %v581 = vmul.f32 %v567, 1.442695
    %v582 = vpow.pop %v581
    %v583 = vmul.f32 %v568, 1.442695
    %v584 = vpow.pop %v583
    %v585 = vsel %vm139, %v570, 0.0
    %586 = vadd.xlane.f32.xlu0 %v585
    %v587 = vpop.xlane.xlu0 %586
    %v588 = vsel %vm139, %v572, 0.0
    %589 = vadd.xlane.f32.xlu0 %v588
    %v590 = vpop.xlane.xlu0 %589
    %v591 = vsel %vm139, %v574, 0.0
    %592 = vadd.xlane.f32.xlu0 %v591
    %v593 = vpop.xlane.xlu0 %592
    %v594 = vsel %vm139, %v576, 0.0
    %595 = vadd.xlane.f32.xlu0 %v594
    %v596 = vpop.xlane.xlu0 %595
    %v597 = vsel %vm139, %v578, 0.0
    %598 = vadd.xlane.f32.xlu0 %v597
    %v599 = vpop.xlane.xlu0 %598
    %v600 = vsel %vm139, %v580, 0.0
    %601 = vadd.xlane.f32.xlu0 %v600
    %v602 = vpop.xlane.xlu0 %601
    %v603 = vsel %vm139, %v582, 0.0
    %604 = vadd.xlane.f32.xlu0 %v603
    %v605 = vpop.xlane.xlu0 %604
    %v606 = vsel %vm139, %v584, 0.0
    %607 = vadd.xlane.f32.xlu0 %v606
    %v608 = vpop.xlane.xlu0 %607
    %v609 = vrcp.pop %v587
    %v610 = vrcp.pop %v590
    %v611 = vrcp.pop %v593
    %v612 = vrcp.pop %v596
    %v613 = vrcp.pop %v599
    %v614 = vrcp.pop %v602
    %v615 = vrcp.pop %v605
    %v616 = vrcp.pop %v608
    %v617 = vmul.f32 %v570, %v609
    %v618 = vmul.f32 %v572, %v610
    %v619 = vmul.f32 %v574, %v611
    %v620 = vmul.f32 %v576, %v612
    %v621 = vmul.f32 %v578, %v613
    %v622 = vmul.f32 %v580, %v614
    %v623 = vmul.f32 %v582, %v615
    %v624 = vmul.f32 %v584, %v616
    %v625 = vpack.c.bf16 %v617, %v617
    %v626 = vpack.c.bf16 %v618, %v618
    %v627 = vpack.c.bf16 %v619, %v619
    %v628 = vpack.c.bf16 %v620, %v620
    %v629 = vpack.c.bf16 %v621, %v621
    %v630 = vpack.c.bf16 %v622, %v622
    %v631 = vpack.c.bf16 %v623, %v623
    %v632 = vpack.c.bf16 %v624, %v624
    %633 = vrot.lane.b32.xlu0 %v128, 64
    %v634 = vpop.permute.xlu0 %633
    %v636 = vsel %vm139, %v625, 0
    %vm638 = vcmask 1043456
    %v640 = vsel %vm638, %v634, 0
    %642 = vmatprep.subr.bf16.mxu0 0
    %643 = vmatpush1.bf16.msra.mxu0 %v640
    %644 = vmatprep.subr.bf16.mxu0 0
    %645 = vmatpush1.bf16.msra.mxu0 0
    %646 = vmatprep.subr.bf16.mxu0 0
    %647 = vmatpush1.bf16.msra.mxu0 0
    %648 = vmatprep.subr.bf16.mxu0 0
    %649 = vmatpush1.bf16.msra.mxu0 0
    %650 = vmatprep.subr.bf16.mxu0 0
    %651 = vmatpush1.bf16.msra.mxu0 0
    %652 = vmatprep.subr.bf16.mxu0 0
    %653 = vmatpush1.bf16.msra.mxu0 0
    %654 = vmatprep.subr.bf16.mxu0 0
    %655 = vmatpush1.bf16.msra.mxu0 0
    %656 = vmatprep.subr.bf16.mxu0 0
    %657 = vmatpush1.bf16.msra.mxu0 0
    %658 = vmatprep.subr.bf16.mxu0 0
    %659 = vmatpush1.bf16.msra.mxu0 0
    %660 = vmatprep.subr.bf16.mxu0 0
    %661 = vmatpush1.bf16.msra.mxu0 0
    %662 = vmatprep.subr.bf16.mxu0 0
    %663 = vmatpush1.bf16.msra.mxu0 0
    %664 = vmatprep.subr.bf16.mxu0 0
    %665 = vmatpush1.bf16.msra.mxu0 0
    %666 = vmatprep.subr.bf16.mxu0 0
    %667 = vmatpush1.bf16.msra.mxu0 0
    %668 = vmatprep.subr.bf16.mxu0 0
    %669 = vmatpush1.bf16.msra.mxu0 0
    %670 = vmatprep.subr.bf16.mxu0 0
    %671 = vmatpush1.bf16.msra.mxu0 0
    %672 = vmatprep.subr.bf16.mxu0 0
    %673 = vmatpush1.bf16.msra.mxu0 0
    %674 = vmatprep.mubr.bf16.mxu0 0
    %675 = vmatmul.mubr.bf16.gmra.mrb[0].mxu0 %v636
    %v676 = vpop.f32.mrb[0].mxu0
    %v677 = vadd.f32 0.0, %v676
    %v678 = vpop.f32.mrb[0].mxu0
    %v679 = vpop.f32.mrb[0].mxu0
    %v680 = vpop.f32.mrb[0].mxu0
    %681 = vdwg.mxu0
    %682 = vrot.lane.b32.xlu0 %v129, 64
    %v683 = vpop.permute.xlu0 %682
    %v685 = vsel %vm139, %v626, 0
    %v688 = vsel %vm638, %v683, 0
    %690 = vmatprep.subr.bf16.mxu0 0
    %691 = vmatpush1.bf16.msra.mxu0 %v688
    %692 = vmatprep.subr.bf16.mxu0 0
    %693 = vmatpush1.bf16.msra.mxu0 0
    %694 = vmatprep.subr.bf16.mxu0 0
    %695 = vmatpush1.bf16.msra.mxu0 0
    %696 = vmatprep.subr.bf16.mxu0 0
    %697 = vmatpush1.bf16.msra.mxu0 0
    %698 = vmatprep.subr.bf16.mxu0 0
    %699 = vmatpush1.bf16.msra.mxu0 0
    %700 = vmatprep.subr.bf16.mxu0 0
    %701 = vmatpush1.bf16.msra.mxu0 0
    %702 = vmatprep.subr.bf16.mxu0 0
    %703 = vmatpush1.bf16.msra.mxu0 0
    %704 = vmatprep.subr.bf16.mxu0 0
    %705 = vmatpush1.bf16.msra.mxu0 0
    %706 = vmatprep.subr.bf16.mxu0 0
    %707 = vmatpush1.bf16.msra.mxu0 0
    %708 = vmatprep.subr.bf16.mxu0 0
    %709 = vmatpush1.bf16.msra.mxu0 0
    %710 = vmatprep.subr.bf16.mxu0 0
    %711 = vmatpush1.bf16.msra.mxu0 0
    %712 = vmatprep.subr.bf16.mxu0 0
    %713 = vmatpush1.bf16.msra.mxu0 0
    %714 = vmatprep.subr.bf16.mxu0 0
    %715 = vmatpush1.bf16.msra.mxu0 0
    %716 = vmatprep.subr.bf16.mxu0 0
    %717 = vmatpush1.bf16.msra.mxu0 0
    %718 = vmatprep.subr.bf16.mxu0 0
    %719 = vmatpush1.bf16.msra.mxu0 0
    %720 = vmatprep.subr.bf16.mxu0 0
    %721 = vmatpush1.bf16.msra.mxu0 0
    %722 = vmatprep.mubr.bf16.mxu0 0
    %723 = vmatmul.mubr.bf16.gmra.mrb[0].mxu0 %v685
    %v724 = vpop.f32.mrb[0].mxu0
    %v725 = vadd.f32 0.0, %v724
    %v726 = vpop.f32.mrb[0].mxu0
    %v727 = vpop.f32.mrb[0].mxu0
    %v728 = vpop.f32.mrb[0].mxu0
    %729 = vdwg.mxu0
    %730 = vrot.lane.b32.xlu0 %v130, 64
    %v731 = vpop.permute.xlu0 %730
    %v733 = vsel %vm139, %v627, 0
    %v736 = vsel %vm638, %v731, 0
    %738 = vmatprep.subr.bf16.mxu0 0
    %739 = vmatpush1.bf16.msra.mxu0 %v736
    %740 = vmatprep.subr.bf16.mxu0 0
    %741 = vmatpush1.bf16.msra.mxu0 0
    %742 = vmatprep.subr.bf16.mxu0 0
    %743 = vmatpush1.bf16.msra.mxu0 0
    %744 = vmatprep.subr.bf16.mxu0 0
    %745 = vmatpush1.bf16.msra.mxu0 0
    %746 = vmatprep.subr.bf16.mxu0 0
    %747 = vmatpush1.bf16.msra.mxu0 0
    %748 = vmatprep.subr.bf16.mxu0 0
    %749 = vmatpush1.bf16.msra.mxu0 0
    %750 = vmatprep.subr.bf16.mxu0 0
    %751 = vmatpush1.bf16.msra.mxu0 0
    %752 = vmatprep.subr.bf16.mxu0 0
    %753 = vmatpush1.bf16.msra.mxu0 0
    %754 = vmatprep.subr.bf16.mxu0 0
    %755 = vmatpush1.bf16.msra.mxu0 0
    %756 = vmatprep.subr.bf16.mxu0 0
    %757 = vmatpush1.bf16.msra.mxu0 0
    %758 = vmatprep.subr.bf16.mxu0 0
    %759 = vmatpush1.bf16.msra.mxu0 0
    %760 = vmatprep.subr.bf16.mxu0 0
    %761 = vmatpush1.bf16.msra.mxu0 0
    %762 = vmatprep.subr.bf16.mxu0 0
    %763 = vmatpush1.bf16.msra.mxu0 0
    %764 = vmatprep.subr.bf16.mxu0 0
    %765 = vmatpush1.bf16.msra.mxu0 0
    %766 = vmatprep.subr.bf16.mxu0 0
    %767 = vmatpush1.bf16.msra.mxu0 0
    %768 = vmatprep.subr.bf16.mxu0 0
    %769 = vmatpush1.bf16.msra.mxu0 0
    %770 = vmatprep.mubr.bf16.mxu0 0
    %771 = vmatmul.mubr.bf16.gmra.mrb[0].mxu0 %v733
    %v772 = vpop.f32.mrb[0].mxu0
    %v773 = vadd.f32 0.0, %v772
    %v774 = vpop.f32.mrb[0].mxu0
    %v775 = vpop.f32.mrb[0].mxu0
    %v776 = vpop.f32.mrb[0].mxu0
    %777 = vdwg.mxu0
    %778 = vrot.lane.b32.xlu0 %v131, 64
    %v779 = vpop.permute.xlu0 %778
    %v781 = vsel %vm139, %v628, 0
    %v784 = vsel %vm638, %v779, 0
    %786 = vmatprep.subr.bf16.mxu0 0
    %787 = vmatpush1.bf16.msra.mxu0 %v784
    %788 = vmatprep.subr.bf16.mxu0 0
    %789 = vmatpush1.bf16.msra.mxu0 0
    %790 = vmatprep.subr.bf16.mxu0 0
    %791 = vmatpush1.bf16.msra.mxu0 0
    %792 = vmatprep.subr.bf16.mxu0 0
    %793 = vmatpush1.bf16.msra.mxu0 0
    %794 = vmatprep.subr.bf16.mxu0 0
    %795 = vmatpush1.bf16.msra.mxu0 0
    %796 = vmatprep.subr.bf16.mxu0 0
    %797 = vmatpush1.bf16.msra.mxu0 0
    %798 = vmatprep.subr.bf16.mxu0 0
    %799 = vmatpush1.bf16.msra.mxu0 0
    %800 = vmatprep.subr.bf16.mxu0 0
    %801 = vmatpush1.bf16.msra.mxu0 0
    %802 = vmatprep.subr.bf16.mxu0 0
    %803 = vmatpush1.bf16.msra.mxu0 0
    %804 = vmatprep.subr.bf16.mxu0 0
    %805 = vmatpush1.bf16.msra.mxu0 0
    %806 = vmatprep.subr.bf16.mxu0 0
    %807 = vmatpush1.bf16.msra.mxu0 0
    %808 = vmatprep.subr.bf16.mxu0 0
    %809 = vmatpush1.bf16.msra.mxu0 0
    %810 = vmatprep.subr.bf16.mxu0 0
    %811 = vmatpush1.bf16.msra.mxu0 0
    %812 = vmatprep.subr.bf16.mxu0 0
    %813 = vmatpush1.bf16.msra.mxu0 0
    %814 = vmatprep.subr.bf16.mxu0 0
    %815 = vmatpush1.bf16.msra.mxu0 0
    %816 = vmatprep.subr.bf16.mxu0 0
    %817 = vmatpush1.bf16.msra.mxu0 0
    %818 = vmatprep.mubr.bf16.mxu0 0
    %819 = vmatmul.mubr.bf16.gmra.mrb[0].mxu0 %v781
    %v820 = vpop.f32.mrb[0].mxu0
    %v821 = vadd.f32 0.0, %v820
    %v822 = vpop.f32.mrb[0].mxu0
    %v823 = vpop.f32.mrb[0].mxu0
    %v824 = vpop.f32.mrb[0].mxu0
    %825 = vdwg.mxu0
    %826 = vrot.lane.b32.xlu0 %v132, 64
    %v827 = vpop.permute.xlu0 %826
    %v829 = vsel %vm139, %v629, 0
    %v832 = vsel %vm638, %v827, 0
    %834 = vmatprep.subr.bf16.mxu0 0
    %835 = vmatpush1.bf16.msra.mxu0 %v832
    %836 = vmatprep.subr.bf16.mxu0 0
    %837 = vmatpush1.bf16.msra.mxu0 0
    %838 = vmatprep.subr.bf16.mxu0 0
    %839 = vmatpush1.bf16.msra.mxu0 0
    %840 = vmatprep.subr.bf16.mxu0 0
    %841 = vmatpush1.bf16.msra.mxu0 0
    %842 = vmatprep.subr.bf16.mxu0 0
    %843 = vmatpush1.bf16.msra.mxu0 0
    %844 = vmatprep.subr.bf16.mxu0 0
    %845 = vmatpush1.bf16.msra.mxu0 0
    %846 = vmatprep.subr.bf16.mxu0 0
    %847 = vmatpush1.bf16.msra.mxu0 0
    %848 = vmatprep.subr.bf16.mxu0 0
    %849 = vmatpush1.bf16.msra.mxu0 0
    %850 = vmatprep.subr.bf16.mxu0 0
    %851 = vmatpush1.bf16.msra.mxu0 0
    %852 = vmatprep.subr.bf16.mxu0 0
    %853 = vmatpush1.bf16.msra.mxu0 0
    %854 = vmatprep.subr.bf16.mxu0 0
    %855 = vmatpush1.bf16.msra.mxu0 0
    %856 = vmatprep.subr.bf16.mxu0 0
    %857 = vmatpush1.bf16.msra.mxu0 0
    %858 = vmatprep.subr.bf16.mxu0 0
    %859 = vmatpush1.bf16.msra.mxu0 0
    %860 = vmatprep.subr.bf16.mxu0 0
    %861 = vmatpush1.bf16.msra.mxu0 0
    %862 = vmatprep.subr.bf16.mxu0 0
    %863 = vmatpush1.bf16.msra.mxu0 0
    %864 = vmatprep.subr.bf16.mxu0 0
    %865 = vmatpush1.bf16.msra.mxu0 0
    %866 = vmatprep.mubr.bf16.mxu0 0
    %867 = vmatmul.mubr.bf16.gmra.mrb[0].mxu0 %v829
    %v868 = vpop.f32.mrb[0].mxu0
    %v869 = vadd.f32 0.0, %v868
    %v870 = vpop.f32.mrb[0].mxu0
    %v871 = vpop.f32.mrb[0].mxu0
    %v872 = vpop.f32.mrb[0].mxu0
    %873 = vdwg.mxu0
    %874 = vrot.lane.b32.xlu0 %v133, 64
    %v875 = vpop.permute.xlu0 %874
    %v877 = vsel %vm139, %v630, 0
    %v880 = vsel %vm638, %v875, 0
    %882 = vmatprep.subr.bf16.mxu0 0
    %883 = vmatpush1.bf16.msra.mxu0 %v880
    %884 = vmatprep.subr.bf16.mxu0 0
    %885 = vmatpush1.bf16.msra.mxu0 0
    %886 = vmatprep.subr.bf16.mxu0 0
    %887 = vmatpush1.bf16.msra.mxu0 0
    %888 = vmatprep.subr.bf16.mxu0 0
    %889 = vmatpush1.bf16.msra.mxu0 0
    %890 = vmatprep.subr.bf16.mxu0 0
    %891 = vmatpush1.bf16.msra.mxu0 0
    %892 = vmatprep.subr.bf16.mxu0 0
    %893 = vmatpush1.bf16.msra.mxu0 0
    %894 = vmatprep.subr.bf16.mxu0 0
    %895 = vmatpush1.bf16.msra.mxu0 0
    %896 = vmatprep.subr.bf16.mxu0 0
    %897 = vmatpush1.bf16.msra.mxu0 0
    %898 = vmatprep.subr.bf16.mxu0 0
    %899 = vmatpush1.bf16.msra.mxu0 0
    %900 = vmatprep.subr.bf16.mxu0 0
    %901 = vmatpush1.bf16.msra.mxu0 0
    %902 = vmatprep.subr.bf16.mxu0 0
    %903 = vmatpush1.bf16.msra.mxu0 0
    %904 = vmatprep.subr.bf16.mxu0 0
    %905 = vmatpush1.bf16.msra.mxu0 0
    %906 = vmatprep.subr.bf16.mxu0 0
    %907 = vmatpush1.bf16.msra.mxu0 0
    %908 = vmatprep.subr.bf16.mxu0 0
    %909 = vmatpush1.bf16.msra.mxu0 0
    %910 = vmatprep.subr.bf16.mxu0 0
    %911 = vmatpush1.bf16.msra.mxu0 0
    %912 = vmatprep.subr.bf16.mxu0 0
    %913 = vmatpush1.bf16.msra.mxu0 0
    %914 = vmatprep.mubr.bf16.mxu0 0
    %915 = vmatmul.mubr.bf16.gmra.mrb[0].mxu0 %v877
    %v916 = vpop.f32.mrb[0].mxu0
    %v917 = vadd.f32 0.0, %v916
    %v918 = vpop.f32.mrb[0].mxu0
    %v919 = vpop.f32.mrb[0].mxu0
    %v920 = vpop.f32.mrb[0].mxu0
    %921 = vdwg.mxu0
    %922 = vrot.lane.b32.xlu0 %v134, 64
    %v923 = vpop.permute.xlu0 %922
    %v925 = vsel %vm139, %v631, 0
    %v928 = vsel %vm638, %v923, 0
    %930 = vmatprep.subr.bf16.mxu0 0
    %931 = vmatpush1.bf16.msra.mxu0 %v928
    %932 = vmatprep.subr.bf16.mxu0 0
    %933 = vmatpush1.bf16.msra.mxu0 0
    %934 = vmatprep.subr.bf16.mxu0 0
    %935 = vmatpush1.bf16.msra.mxu0 0
    %936 = vmatprep.subr.bf16.mxu0 0
    %937 = vmatpush1.bf16.msra.mxu0 0
    %938 = vmatprep.subr.bf16.mxu0 0
    %939 = vmatpush1.bf16.msra.mxu0 0
    %940 = vmatprep.subr.bf16.mxu0 0
    %941 = vmatpush1.bf16.msra.mxu0 0
    %942 = vmatprep.subr.bf16.mxu0 0
    %943 = vmatpush1.bf16.msra.mxu0 0
    %944 = vmatprep.subr.bf16.mxu0 0
    %945 = vmatpush1.bf16.msra.mxu0 0
    %946 = vmatprep.subr.bf16.mxu0 0
    %947 = vmatpush1.bf16.msra.mxu0 0
    %948 = vmatprep.subr.bf16.mxu0 0
    %949 = vmatpush1.bf16.msra.mxu0 0
    %950 = vmatprep.subr.bf16.mxu0 0
    %951 = vmatpush1.bf16.msra.mxu0 0
    %952 = vmatprep.subr.bf16.mxu0 0
    %953 = vmatpush1.bf16.msra.mxu0 0
    %954 = vmatprep.subr.bf16.mxu0 0
    %955 = vmatpush1.bf16.msra.mxu0 0
    %956 = vmatprep.subr.bf16.mxu0 0
    %957 = vmatpush1.bf16.msra.mxu0 0
    %958 = vmatprep.subr.bf16.mxu0 0
    %959 = vmatpush1.bf16.msra.mxu0 0
    %960 = vmatprep.subr.bf16.mxu0 0
    %961 = vmatpush1.bf16.msra.mxu0 0
    %962 = vmatprep.mubr.bf16.mxu0 0
    %963 = vmatmul.mubr.bf16.gmra.mrb[0].mxu0 %v925
    %v964 = vpop.f32.mrb[0].mxu0
    %v965 = vadd.f32 0.0, %v964
    %v966 = vpop.f32.mrb[0].mxu0
    %v967 = vpop.f32.mrb[0].mxu0
    %v968 = vpop.f32.mrb[0].mxu0
    %969 = vdwg.mxu0
    %970 = vrot.lane.b32.xlu0 %v135, 64
    %v971 = vpop.permute.xlu0 %970
    %v973 = vsel %vm139, %v632, 0
    %v976 = vsel %vm638, %v971, 0
    %978 = vmatprep.subr.bf16.mxu0 0
    %979 = vmatpush1.bf16.msra.mxu0 %v976
    %980 = vmatprep.subr.bf16.mxu0 0
    %981 = vmatpush1.bf16.msra.mxu0 0
    %982 = vmatprep.subr.bf16.mxu0 0
    %983 = vmatpush1.bf16.msra.mxu0 0
    %984 = vmatprep.subr.bf16.mxu0 0
    %985 = vmatpush1.bf16.msra.mxu0 0
    %986 = vmatprep.subr.bf16.mxu0 0
    %987 = vmatpush1.bf16.msra.mxu0 0
    %988 = vmatprep.subr.bf16.mxu0 0
    %989 = vmatpush1.bf16.msra.mxu0 0
    %990 = vmatprep.subr.bf16.mxu0 0
    %991 = vmatpush1.bf16.msra.mxu0 0
    %992 = vmatprep.subr.bf16.mxu0 0
    %993 = vmatpush1.bf16.msra.mxu0 0
    %994 = vmatprep.subr.bf16.mxu0 0
    %995 = vmatpush1.bf16.msra.mxu0 0
    %996 = vmatprep.subr.bf16.mxu0 0
    %997 = vmatpush1.bf16.msra.mxu0 0
    %998 = vmatprep.subr.bf16.mxu0 0
    %999 = vmatpush1.bf16.msra.mxu0 0
    %1000 = vmatprep.subr.bf16.mxu0 0
    %1001 = vmatpush1.bf16.msra.mxu0 0
    %1002 = vmatprep.subr.bf16.mxu0 0
    %1003 = vmatpush1.bf16.msra.mxu0 0
    %1004 = vmatprep.subr.bf16.mxu0 0
    %1005 = vmatpush1.bf16.msra.mxu0 0
    %1006 = vmatprep.subr.bf16.mxu0 0
    %1007 = vmatpush1.bf16.msra.mxu0 0
    %1008 = vmatprep.subr.bf16.mxu0 0
    %1009 = vmatpush1.bf16.msra.mxu0 0
    %1010 = vmatprep.mubr.bf16.mxu0 0
    %1011 = vmatmul.mubr.bf16.gmra.mrb[0].mxu0 %v973
    %v1012 = vpop.f32.mrb[0].mxu0
    %v1013 = vadd.f32 0.0, %v1012
    %v1014 = vpop.f32.mrb[0].mxu0
    %v1015 = vpop.f32.mrb[0].mxu0
    %v1016 = vpop.f32.mrb[0].mxu0
    %1017 = vdwg.mxu0
    %1020 = vrot.lane.b32.xlu0 %v773, 8
    %v1021 = vpop.permute.xlu0 %1020
    %1022 = vrot.lane.b32.xlu0 %v821, 8
    %v1023 = vpop.permute.xlu0 %1022
    %1028 = vrot.lane.b32.xlu0 %v869, 16
    %v1029 = vpop.permute.xlu0 %1028
    %1030 = vrot.lane.b32.xlu0 %v917, 16
    %v1031 = vpop.permute.xlu0 %1030
    %1036 = vrot.lane.b32.xlu0 %v965, 24
    %v1037 = vpop.permute.xlu0 %1036
    %1038 = vrot.lane.b32.xlu0 %v1013, 24
    %v1039 = vpop.permute.xlu0 %1038
    %v1042 = vsel %vm139, %v677, %v1021
    %v1043 = vsel %vm139, %v725, %v1023
    %vm1044 = vcmask 130048
    %v1045 = vsel %vm1044, %v1042, %v1029
    %v1046 = vsel %vm1044, %v1043, %v1031
    %vm1047 = vcmask 195584
    %v1048 = vsel %vm1047, %v1045, %v1037
    %v1049 = vsel %vm1047, %v1046, %v1039
    %v1050 = vpack.c.bf16 %v1049, %v1048
    %v1051 = vlaneseq
    %v1052 = vshrl.u32 %v1051, 7
    %v1053 = vsub.s32 1, %v1052
    %v1054 = vrot.slane %v45, %v1053
    %1055 = vrot.lane.b32.xlu0 %v59, 32
    %v1056 = vpop.permute.xlu0 %1055
    %1057 = vrot.lane.b32.xlu0 %v60, 32
    %v1058 = vpop.permute.xlu0 %1057
    %v1062 = vsel %vm63, %v1050, 0
    %1064 = vmatprep.subr.bf16.mxu0 0
    %1065 = vmatpush1.bf16.msra.mxu0 %v1056
    %1066 = vmatprep.subr.bf16.mxu0 0
    %1067 = vmatpush1.bf16.msra.mxu0 %v1058
    %1068 = vmatprep.subr.bf16.mxu0 0
    %1069 = vmatpush1.bf16.msra.mxu0 0
    %1070 = vmatprep.subr.bf16.mxu0 0
    %1071 = vmatpush1.bf16.msra.mxu0 0
    %1072 = vmatprep.subr.bf16.mxu0 0
    %1073 = vmatpush1.bf16.msra.mxu0 0
    %1074 = vmatprep.subr.bf16.mxu0 0
    %1075 = vmatpush1.bf16.msra.mxu0 0
    %1076 = vmatprep.subr.bf16.mxu0 0
    %1077 = vmatpush1.bf16.msra.mxu0 0
    %1078 = vmatprep.subr.bf16.mxu0 0
    %1079 = vmatpush1.bf16.msra.mxu0 0
    %1080 = vmatprep.subr.bf16.mxu0 0
    %1081 = vmatpush1.bf16.msra.mxu0 0
    %1082 = vmatprep.subr.bf16.mxu0 0
    %1083 = vmatpush1.bf16.msra.mxu0 0
    %1084 = vmatprep.subr.bf16.mxu0 0
    %1085 = vmatpush1.bf16.msra.mxu0 0
    %1086 = vmatprep.subr.bf16.mxu0 0
    %1087 = vmatpush1.bf16.msra.mxu0 0
    %1088 = vmatprep.subr.bf16.mxu0 0
    %1089 = vmatpush1.bf16.msra.mxu0 0
    %1090 = vmatprep.subr.bf16.mxu0 0
    %1091 = vmatpush1.bf16.msra.mxu0 0
    %1092 = vmatprep.subr.bf16.mxu0 0
    %1093 = vmatpush1.bf16.msra.mxu0 0
    %1094 = vmatprep.subr.bf16.mxu0 0
    %1095 = vmatpush1.bf16.msra.mxu0 0
    %1096 = vmatprep.mubr.bf16.mxu0 0
    %1097 = vmatmul.mubr.bf16.gmra.mrb[0].mxu0 %v1062
    %v1098 = vpop.f32.mrb[0].mxu0
    %v1099 = vadd.f32 %v1054, %v1098
    %v1100 = vpop.f32.mrb[0].mxu0
    %v1101 = vpop.f32.mrb[0].mxu0
    %v1102 = vadd.f32 %v1054, %v1101
    %v1103 = vpop.f32.mrb[0].mxu0
    %1104 = vdwg.mxu0
    %v1105 = vadd.f32 %v19, %v1099
    %v1106 = vadd.f32 %v20, %v1102
    %v1107 = vsel %vm63, %v1105, 0.0
    %1108 = vadd.xlane.f32.xlu0 %v1107
    %v1109 = vpop.xlane.xlu0 %1108
    %v1110 = vsel %vm63, %v1106, 0.0
    %1111 = vadd.xlane.f32.xlu0 %v1110
    %v1112 = vpop.xlane.xlu0 %1111
    %v1113 = vrcp.pop 32.0
    %v1114 = vmul.f32 %v1109, %v1113
    %v1115 = vmul.f32 %v1112, %v1113
    %v1116 = vsub.f32 %v1105, %v1114
    %v1117 = vsub.f32 %v1106, %v1115
    %v1118 = vmul.f32 %v1116, %v1116
    %v1119 = vmul.f32 %v1117, %v1117
    %v1120 = vsel %vm63, %v1118, 0.0
    %1121 = vadd.xlane.f32.xlu0 %v1120
    %v1122 = vpop.xlane.xlu0 %1121
    %v1123 = vsel %vm63, %v1119, 0.0
    %1124 = vadd.xlane.f32.xlu0 %v1123
    %v1125 = vpop.xlane.xlu0 %1124
    %v1126 = vmul.f32 %v1122, %v1113
    %v1127 = vmul.f32 %v1125, %v1113
    %v1128 = vadd.f32 %v1126, 1e-12
    %v1129 = vadd.f32 %v1127, 1e-12
    %v1130 = vrsqrt.pop %v1128
    %v1131 = vrsqrt.pop %v1129
    %v1132 = vmul.f32 %v1116, %v1130
    %v1133 = vmul.f32 %v1117, %v1131
    %v1134 = vlaneseq
    %v1135 = vshrl.u32 %v1134, 7
    %v1136 = vsub.s32 4, %v1135
    %v1137 = vrot.slane %v45, %v1136
    %v1138 = vmul.f32 %v1132, %v1137
    %v1139 = vmul.f32 %v1133, %v1137
    %v1140 = vlaneseq
    %v1141 = vshrl.u32 %v1140, 7
    %v1142 = vsub.s32 5, %v1141
    %v1143 = vrot.slane %v45, %v1142
    %v1144 = vadd.f32 %v1138, %v1143
    %v1145 = vadd.f32 %v1139, %v1143
    %v1146 = vpack.c.bf16 %v1145, %v1144
    %v1147 = vlaneseq
    %v1148 = vshrl.u32 %v1147, 7
    %v1149 = vsub.s32 2, %v1148
    %v1150 = vrot.slane %v45, %v1149
    %v1155 = vunpack.c.l.b16 %v25
    %v1156 = vunpack.c.l.b16 %v26
    %v1157 = vunpack.c.l.b16 %v27
    %v1158 = vunpack.c.l.b16 %v28
    %v1159 = vpack.c.b16 %v1156, %v1155
    %v1160 = vpack.c.b16 %v1158, %v1157
    %v1164 = vsel %vm63, %v1146, 0
    %1166 = vmatprep.subr.bf16.mxu0 0
    %1167 = vmatpush1.bf16.msra.mxu0 %v1159
    %1168 = vmatprep.subr.bf16.mxu0 0
    %1169 = vmatpush1.bf16.msra.mxu0 %v1160
    %1170 = vmatprep.subr.bf16.mxu0 0
    %1171 = vmatpush1.bf16.msra.mxu0 0
    %1172 = vmatprep.subr.bf16.mxu0 0
    %1173 = vmatpush1.bf16.msra.mxu0 0
    %1174 = vmatprep.subr.bf16.mxu0 0
    %1175 = vmatpush1.bf16.msra.mxu0 0
    %1176 = vmatprep.subr.bf16.mxu0 0
    %1177 = vmatpush1.bf16.msra.mxu0 0
    %1178 = vmatprep.subr.bf16.mxu0 0
    %1179 = vmatpush1.bf16.msra.mxu0 0
    %1180 = vmatprep.subr.bf16.mxu0 0
    %1181 = vmatpush1.bf16.msra.mxu0 0
    %1182 = vmatprep.subr.bf16.mxu0 0
    %1183 = vmatpush1.bf16.msra.mxu0 0
    %1184 = vmatprep.subr.bf16.mxu0 0
    %1185 = vmatpush1.bf16.msra.mxu0 0
    %1186 = vmatprep.subr.bf16.mxu0 0
    %1187 = vmatpush1.bf16.msra.mxu0 0
    %1188 = vmatprep.subr.bf16.mxu0 0
    %1189 = vmatpush1.bf16.msra.mxu0 0
    %1190 = vmatprep.subr.bf16.mxu0 0
    %1191 = vmatpush1.bf16.msra.mxu0 0
    %1192 = vmatprep.subr.bf16.mxu0 0
    %1193 = vmatpush1.bf16.msra.mxu0 0
    %1194 = vmatprep.subr.bf16.mxu0 0
    %1195 = vmatpush1.bf16.msra.mxu0 0
    %1196 = vmatprep.subr.bf16.mxu0 0
    %1197 = vmatpush1.bf16.msra.mxu0 0
    %1198 = vmatprep.mubr.bf16.mxu0 0
    %1199 = vmatmul.mubr.bf16.gmra.mrb[0].mxu0 %v1164
    %v1200 = vpop.f32.mrb[0].mxu0
    %v1201 = vadd.f32 %v1150, %v1200
    %v1202 = vpop.f32.mrb[0].mxu0
    %v1203 = vpop.f32.mrb[0].mxu0
    %v1204 = vadd.f32 %v1150, %v1203
    %v1205 = vpop.f32.mrb[0].mxu0
    %1206 = vdwg.mxu0
    %v1207 = vmul.f32 %v1201, %v1201
    %v1208 = vmul.f32 %v1204, %v1204
    %v1209 = vmul.f32 %v1201, %v1207
    %v1210 = vmul.f32 %v1204, %v1208
    %v1211 = vmul.f32 %v1209, 0.044715
    %v1212 = vmul.f32 %v1210, 0.044715
    %v1213 = vadd.f32 %v1201, %v1211
    %v1214 = vadd.f32 %v1204, %v1212
    %v1215 = vmul.f32 %v1213, 0.7978846
    %v1216 = vmul.f32 %v1214, 0.7978846
    %v1217 = vtanh.pop %v1215
    %v1218 = vtanh.pop %v1216
    %v1219 = vadd.f32 %v1217, 1.0
    %v1220 = vadd.f32 %v1218, 1.0
    %v1221 = vmul.f32 %v1219, 0.5
    %v1222 = vmul.f32 %v1220, 0.5
    %v1223 = vmul.f32 %v1201, %v1221
    %v1224 = vmul.f32 %v1204, %v1222
    %v1225 = vpack.c.bf16 %v1224, %v1223
    %v1226 = vlaneseq
    %v1227 = vshrl.u32 %v1226, 7
    %v1228 = vsub.s32 3, %v1227
    %v1229 = vrot.slane %v45, %v1228
    %v1246 = vunpack.c.l.b16 %v29
    %v1247 = vunpack.c.l.b16 %v30
    %v1248 = vunpack.c.l.b16 %v31
    %v1249 = vunpack.c.l.b16 %v32
    %v1250 = vunpack.c.l.b16 %v33
    %v1251 = vunpack.c.l.b16 %v34
    %v1252 = vunpack.c.l.b16 %v35
    %v1253 = vunpack.c.l.b16 %v36
    %v1254 = vunpack.c.l.b16 %v37
    %v1255 = vunpack.c.l.b16 %v38
    %v1256 = vunpack.c.l.b16 %v39
    %v1257 = vunpack.c.l.b16 %v40
    %v1258 = vunpack.c.l.b16 %v41
    %v1259 = vunpack.c.l.b16 %v42
    %v1260 = vunpack.c.l.b16 %v43
    %v1261 = vunpack.c.l.b16 %v44
    %v1262 = vpack.c.b16 %v1247, %v1246
    %v1263 = vpack.c.b16 %v1249, %v1248
    %v1264 = vpack.c.b16 %v1251, %v1250
    %v1265 = vpack.c.b16 %v1253, %v1252
    %v1266 = vpack.c.b16 %v1255, %v1254
    %v1267 = vpack.c.b16 %v1257, %v1256
    %v1268 = vpack.c.b16 %v1259, %v1258
    %v1269 = vpack.c.b16 %v1261, %v1260
    %1278 = vmatprep.subr.bf16.mxu0 0
    %1279 = vmatpush1.bf16.msra.mxu0 %v1262
    %1280 = vmatprep.subr.bf16.mxu0 0
    %1281 = vmatpush1.bf16.msra.mxu0 %v1263
    %1282 = vmatprep.subr.bf16.mxu0 0
    %1283 = vmatpush1.bf16.msra.mxu0 %v1264
    %1284 = vmatprep.subr.bf16.mxu0 0
    %1285 = vmatpush1.bf16.msra.mxu0 %v1265
    %1286 = vmatprep.subr.bf16.mxu0 0
    %1287 = vmatpush1.bf16.msra.mxu0 %v1266
    %1288 = vmatprep.subr.bf16.mxu0 0
    %1289 = vmatpush1.bf16.msra.mxu0 %v1267
    %1290 = vmatprep.subr.bf16.mxu0 0
    %1291 = vmatpush1.bf16.msra.mxu0 %v1268
    %1292 = vmatprep.subr.bf16.mxu0 0
    %1293 = vmatpush1.bf16.msra.mxu0 %v1269
    %1294 = vmatprep.subr.bf16.mxu0 0
    %1295 = vmatpush1.bf16.msra.mxu0 0
    %1296 = vmatprep.subr.bf16.mxu0 0
    %1297 = vmatpush1.bf16.msra.mxu0 0
    %1298 = vmatprep.subr.bf16.mxu0 0
    %1299 = vmatpush1.bf16.msra.mxu0 0
    %1300 = vmatprep.subr.bf16.mxu0 0
    %1301 = vmatpush1.bf16.msra.mxu0 0
    %1302 = vmatprep.subr.bf16.mxu0 0
    %1303 = vmatpush1.bf16.msra.mxu0 0
    %1304 = vmatprep.subr.bf16.mxu0 0
    %1305 = vmatpush1.bf16.msra.mxu0 0
    %1306 = vmatprep.subr.bf16.mxu0 0
    %1307 = vmatpush1.bf16.msra.mxu0 0
    %1308 = vmatprep.subr.bf16.mxu0 0
    %1309 = vmatpush1.bf16.msra.mxu0 0
    %1310 = vmatprep.mubr.bf16.mxu0 0
    %1311 = vmatmul.mubr.bf16.gmra.mrb[0].mxu0 %v1225
    %v1312 = vpop.f32.mrb[0].mxu0
    %v1313 = vadd.f32 %v1229, %v1312
    %v1314 = vpop.f32.mrb[0].mxu0
    %v1315 = vpop.f32.mrb[0].mxu0
    %v1316 = vadd.f32 %v1229, %v1315
    %v1317 = vpop.f32.mrb[0].mxu0
    %1318 = vdwg.mxu0
    %v1319 = vadd.f32 %v1144, %v1313
    %v1320 = vadd.f32 %v1145, %v1316
    %v1321 = vsel %vm63, %v1319, 0.0
    %1322 = vadd.xlane.f32.xlu0 %v1321
    %v1323 = vpop.xlane.xlu0 %1322
    %v1324 = vsel %vm63, %v1320, 0.0
    %1325 = vadd.xlane.f32.xlu0 %v1324
    %v1326 = vpop.xlane.xlu0 %1325
    %v1327 = vmul.f32 %v1323, %v1113
    %v1328 = vmul.f32 %v1326, %v1113
    %v1329 = vsub.f32 %v1319, %v1327
    %v1330 = vsub.f32 %v1320, %v1328
    %v1331 = vmul.f32 %v1329, %v1329
    %v1332 = vmul.f32 %v1330, %v1330
    %v1333 = vsel %vm63, %v1331, 0.0
    %1334 = vadd.xlane.f32.xlu0 %v1333
    %v1335 = vpop.xlane.xlu0 %1334
    %v1336 = vsel %vm63, %v1332, 0.0
    %1337 = vadd.xlane.f32.xlu0 %v1336
    %v1338 = vpop.xlane.xlu0 %1337
    %v1339 = vmul.f32 %v1335, %v1113
    %v1340 = vmul.f32 %v1338, %v1113
    %v1341 = vadd.f32 %v1339, 1e-12
    %v1342 = vadd.f32 %v1340, 1e-12
    %v1343 = vrsqrt.pop %v1341
    %v1344 = vrsqrt.pop %v1342
    %v1345 = vmul.f32 %v1329, %v1343
    %v1346 = vmul.f32 %v1330, %v1344
    %v1347 = vlaneseq
    %v1348 = vshrl.u32 %v1347, 7
    %v1349 = vsub.s32 6, %v1348
    %v1350 = vrot.slane %v45, %v1349
    %v1351 = vmul.f32 %v1345, %v1350
    %v1352 = vmul.f32 %v1346, %v1350
    %v1353 = vlaneseq
    %v1354 = vshrl.u32 %v1353, 7
    %v1355 = vsub.s32 7, %v1354
    %v1356 = vrot.slane %v45, %v1355
    %v1357 = vadd.f32 %v1351, %v1356
    %v1358 = vadd.f32 %v1352, %v1356
    %s1359 = scalar_lea.vmem %s1, 32
    %v1360 = vld [vmem:[%s1359] sm:$0xf]
    %v1361 = vld [vmem:[%s1359 + $0x8] sm:$0xf]
    %v1362 = vld [vmem:[%s1359 + $0x10] sm:$0xf]
    %v1363 = vld [vmem:[%s1359 + $0x18] sm:$0xf]
    %v1364 = vld [vmem:[%s1359 + $0x4] sm:$0xf]
    %v1365 = vld [vmem:[%s1359 + $0xc] sm:$0xf]
    %v1366 = vld [vmem:[%s1359 + $0x14] sm:$0xf]
    %v1367 = vld [vmem:[%s1359 + $0x1c] sm:$0xf]
    %s1368 = scalar_lea.vmem %s2, 64
    %v1369 = vld [vmem:[%s1368] sm:$0xf]
    %v1370 = vld [vmem:[%s1368 + $0x4] sm:$0xf]
    %v1371 = vld [vmem:[%s1368 + $0x8] sm:$0xf]
    %v1372 = vld [vmem:[%s1368 + $0xc] sm:$0xf]
    %v1373 = vld [vmem:[%s1368 + $0x10] sm:$0xf]
    %v1374 = vld [vmem:[%s1368 + $0x14] sm:$0xf]
    %v1375 = vld [vmem:[%s1368 + $0x18] sm:$0xf]
    %v1376 = vld [vmem:[%s1368 + $0x1c] sm:$0xf]
    %v1377 = vld [vmem:[%s1368 + $0x20] sm:$0xf]
    %v1378 = vld [vmem:[%s1368 + $0x24] sm:$0xf]
    %v1379 = vld [vmem:[%s1368 + $0x28] sm:$0xf]
    %v1380 = vld [vmem:[%s1368 + $0x2c] sm:$0xf]
    %v1381 = vld [vmem:[%s1368 + $0x30] sm:$0xf]
    %v1382 = vld [vmem:[%s1368 + $0x34] sm:$0xf]
    %v1383 = vld [vmem:[%s1368 + $0x38] sm:$0xf]
    %v1384 = vld [vmem:[%s1368 + $0x3c] sm:$0xf]
    %s1385 = scalar_lea.vmem %s3, 8
    %v1386 = vld [vmem:[%s1385] sm:$0xff]
    %v1387 = vpack.c.bf16 %v1358, %v1357
    %v1388 = vlaneseq
    %v1389 = vshrl.u32 %v1388, 7
    %v1390 = vsub.s32 0, %v1389
    %v1391 = vrot.slane %v1386, %v1390
    %v1396 = vunpack.c.l.b16 %v1360
    %v1397 = vunpack.c.l.b16 %v1361
    %v1398 = vunpack.c.l.b16 %v1362
    %v1399 = vunpack.c.l.b16 %v1363
    %v1400 = vpack.c.b16 %v1397, %v1396
    %v1401 = vpack.c.b16 %v1399, %v1398
    %v1405 = vsel %vm63, %v1387, 0
    %1407 = vmatprep.subr.bf16.mxu0 0
    %1408 = vmatpush1.bf16.msra.mxu0 %v1400
    %1409 = vmatprep.subr.bf16.mxu0 0
    %1410 = vmatpush1.bf16.msra.mxu0 %v1401
    %1411 = vmatprep.subr.bf16.mxu0 0
    %1412 = vmatpush1.bf16.msra.mxu0 0
    %1413 = vmatprep.subr.bf16.mxu0 0
    %1414 = vmatpush1.bf16.msra.mxu0 0
    %1415 = vmatprep.subr.bf16.mxu0 0
    %1416 = vmatpush1.bf16.msra.mxu0 0
    %1417 = vmatprep.subr.bf16.mxu0 0
    %1418 = vmatpush1.bf16.msra.mxu0 0
    %1419 = vmatprep.subr.bf16.mxu0 0
    %1420 = vmatpush1.bf16.msra.mxu0 0
    %1421 = vmatprep.subr.bf16.mxu0 0
    %1422 = vmatpush1.bf16.msra.mxu0 0
    %1423 = vmatprep.subr.bf16.mxu0 0
    %1424 = vmatpush1.bf16.msra.mxu0 0
    %1425 = vmatprep.subr.bf16.mxu0 0
    %1426 = vmatpush1.bf16.msra.mxu0 0
    %1427 = vmatprep.subr.bf16.mxu0 0
    %1428 = vmatpush1.bf16.msra.mxu0 0
    %1429 = vmatprep.subr.bf16.mxu0 0
    %1430 = vmatpush1.bf16.msra.mxu0 0
    %1431 = vmatprep.subr.bf16.mxu0 0
    %1432 = vmatpush1.bf16.msra.mxu0 0
    %1433 = vmatprep.subr.bf16.mxu0 0
    %1434 = vmatpush1.bf16.msra.mxu0 0
    %1435 = vmatprep.subr.bf16.mxu0 0
    %1436 = vmatpush1.bf16.msra.mxu0 0
    %1437 = vmatprep.subr.bf16.mxu0 0
    %1438 = vmatpush1.bf16.msra.mxu0 0
    %1439 = vmatprep.mubr.bf16.mxu0 0
    %1440 = vmatmul.mubr.bf16.gmra.mrb[0].mxu0 %v1405
    %v1441 = vpop.f32.mrb[0].mxu0
    %v1442 = vadd.f32 %v1391, %v1441
    %v1443 = vpop.f32.mrb[0].mxu0
    %v1444 = vpop.f32.mrb[0].mxu0
    %v1445 = vadd.f32 %v1391, %v1444
    %v1446 = vpop.f32.mrb[0].mxu0
    %1447 = vdwg.mxu0
    %1450 = vrot.lane.b32.xlu0 %v1442, 120
    %v1451 = vpop.permute.xlu0 %1450
    %1452 = vrot.lane.b32.xlu0 %v1445, 120
    %v1453 = vpop.permute.xlu0 %1452
    %1456 = vrot.lane.b32.xlu0 %v1442, 112
    %v1457 = vpop.permute.xlu0 %1456
    %1458 = vrot.lane.b32.xlu0 %v1445, 112
    %v1459 = vpop.permute.xlu0 %1458
    %1462 = vrot.lane.b32.xlu0 %v1442, 104
    %v1463 = vpop.permute.xlu0 %1462
    %1464 = vrot.lane.b32.xlu0 %v1445, 104
    %v1465 = vpop.permute.xlu0 %1464
    %v1468 = vpack.c.bf16 %v1442, %v1442
    %v1469 = vpack.c.bf16 %v1445, %v1445
    %v1470 = vpack.c.bf16 %v1451, %v1451
    %v1471 = vpack.c.bf16 %v1453, %v1453
    %v1472 = vpack.c.bf16 %v1457, %v1457
    %v1473 = vpack.c.bf16 %v1459, %v1459
    %v1474 = vpack.c.bf16 %v1463, %v1463
    %v1475 = vpack.c.bf16 %v1465, %v1465
    %1477 = vrot.lane.b32.xlu0 %v1468, 96
    %v1478 = vpop.permute.xlu0 %1477
    %v1480 = vsel %vm139, %v1468, 0
    %v1483 = vsel %vm139, %v1478, 0
    %1485 = vmatprep.subr.bf16.mxu0 0
    %1486 = vmatpush1.bf16.xpose.msra.mxu0 %v1483
    %1487 = vmatprep.subr.bf16.mxu0 0
    %1488 = vmatpush1.bf16.xpose.msra.mxu0 0
    %1489 = vmatprep.subr.bf16.mxu0 0
    %1490 = vmatpush1.bf16.xpose.msra.mxu0 0
    %1491 = vmatprep.subr.bf16.mxu0 0
    %1492 = vmatpush1.bf16.xpose.msra.mxu0 0
    %1493 = vmatprep.subr.bf16.mxu0 0
    %1494 = vmatpush1.bf16.xpose.msra.mxu0 0
    %1495 = vmatprep.subr.bf16.mxu0 0
    %1496 = vmatpush1.bf16.xpose.msra.mxu0 0
    %1497 = vmatprep.subr.bf16.mxu0 0
    %1498 = vmatpush1.bf16.xpose.msra.mxu0 0
    %1499 = vmatprep.subr.bf16.mxu0 0
    %1500 = vmatpush1.bf16.xpose.msra.mxu0 0
    %1501 = vmatprep.subr.bf16.mxu0 0
    %1502 = vmatpush1.bf16.xpose.msra.mxu0 0
    %1503 = vmatprep.subr.bf16.mxu0 0
    %1504 = vmatpush1.bf16.xpose.msra.mxu0 0
    %1505 = vmatprep.subr.bf16.mxu0 0
    %1506 = vmatpush1.bf16.xpose.msra.mxu0 0
    %1507 = vmatprep.subr.bf16.mxu0 0
    %1508 = vmatpush1.bf16.xpose.msra.mxu0 0
    %1509 = vmatprep.subr.bf16.mxu0 0
    %1510 = vmatpush1.bf16.xpose.msra.mxu0 0
    %1511 = vmatprep.subr.bf16.mxu0 0
    %1512 = vmatpush1.bf16.xpose.msra.mxu0 0
    %1513 = vmatprep.subr.bf16.mxu0 0
    %1514 = vmatpush1.bf16.xpose.msra.mxu0 0
    %1515 = vmatprep.subr.bf16.mxu0 0
    %1516 = vmatpush1.bf16.xpose.msra.mxu0 0
    %1517 = vmatprep.mubr.bf16.mxu0 0
    %1518 = vmatmul.mubr.bf16.gmra.mrb[0].mxu0 %v1480
    %v1519 = vpop.f32.mrb[0].mxu0
    %v1520 = vadd.f32 0.0, %v1519
    %v1521 = vpop.f32.mrb[0].mxu0
    %v1522 = vpop.f32.mrb[0].mxu0
    %v1523 = vpop.f32.mrb[0].mxu0
    %1524 = vdwg.mxu0
    %1526 = vrot.lane.b32.xlu0 %v1469, 96
    %v1527 = vpop.permute.xlu0 %1526
    %v1529 = vsel %vm139, %v1469, 0
    %v1532 = vsel %vm139, %v1527, 0
    %1534 = vmatprep.subr.bf16.mxu0 0
    %1535 = vmatpush1.bf16.xpose.msra.mxu0 %v1532
    %1536 = vmatprep.subr.bf16.mxu0 0
    %1537 = vmatpush1.bf16.xpose.msra.mxu0 0
    %1538 = vmatprep.subr.bf16.mxu0 0
    %1539 = vmatpush1.bf16.xpose.msra.mxu0 0
    %1540 = vmatprep.subr.bf16.mxu0 0
    %1541 = vmatpush1.bf16.xpose.msra.mxu0 0
    %1542 = vmatprep.subr.bf16.mxu0 0
    %1543 = vmatpush1.bf16.xpose.msra.mxu0 0
    %1544 = vmatprep.subr.bf16.mxu0 0
    %1545 = vmatpush1.bf16.xpose.msra.mxu0 0
    %1546 = vmatprep.subr.bf16.mxu0 0
    %1547 = vmatpush1.bf16.xpose.msra.mxu0 0
    %1548 = vmatprep.subr.bf16.mxu0 0
    %1549 = vmatpush1.bf16.xpose.msra.mxu0 0
    %1550 = vmatprep.subr.bf16.mxu0 0
    %1551 = vmatpush1.bf16.xpose.msra.mxu0 0
    %1552 = vmatprep.subr.bf16.mxu0 0
    %1553 = vmatpush1.bf16.xpose.msra.mxu0 0
    %1554 = vmatprep.subr.bf16.mxu0 0
    %1555 = vmatpush1.bf16.xpose.msra.mxu0 0
    %1556 = vmatprep.subr.bf16.mxu0 0
    %1557 = vmatpush1.bf16.xpose.msra.mxu0 0
    %1558 = vmatprep.subr.bf16.mxu0 0
    %1559 = vmatpush1.bf16.xpose.msra.mxu0 0
    %1560 = vmatprep.subr.bf16.mxu0 0
    %1561 = vmatpush1.bf16.xpose.msra.mxu0 0
    %1562 = vmatprep.subr.bf16.mxu0 0
    %1563 = vmatpush1.bf16.xpose.msra.mxu0 0
    %1564 = vmatprep.subr.bf16.mxu0 0
    %1565 = vmatpush1.bf16.xpose.msra.mxu0 0
    %1566 = vmatprep.mubr.bf16.mxu0 0
    %1567 = vmatmul.mubr.bf16.gmra.mrb[0].mxu0 %v1529
    %v1568 = vpop.f32.mrb[0].mxu0
    %v1569 = vadd.f32 0.0, %v1568
    %v1570 = vpop.f32.mrb[0].mxu0
    %v1571 = vpop.f32.mrb[0].mxu0
    %v1572 = vpop.f32.mrb[0].mxu0
    %1573 = vdwg.mxu0
    %1575 = vrot.lane.b32.xlu0 %v1470, 96
    %v1576 = vpop.permute.xlu0 %1575
    %v1578 = vsel %vm139, %v1470, 0
    %v1581 = vsel %vm139, %v1576, 0
    %1583 = vmatprep.subr.bf16.mxu0 0
    %1584 = vmatpush1.bf16.xpose.msra.mxu0 %v1581
    %1585 = vmatprep.subr.bf16.mxu0 0
    %1586 = vmatpush1.bf16.xpose.msra.mxu0 0
    %1587 = vmatprep.subr.bf16.mxu0 0
    %1588 = vmatpush1.bf16.xpose.msra.mxu0 0
    %1589 = vmatprep.subr.bf16.mxu0 0
    %1590 = vmatpush1.bf16.xpose.msra.mxu0 0
    %1591 = vmatprep.subr.bf16.mxu0 0
    %1592 = vmatpush1.bf16.xpose.msra.mxu0 0
    %1593 = vmatprep.subr.bf16.mxu0 0
    %1594 = vmatpush1.bf16.xpose.msra.mxu0 0
    %1595 = vmatprep.subr.bf16.mxu0 0
    %1596 = vmatpush1.bf16.xpose.msra.mxu0 0
    %1597 = vmatprep.subr.bf16.mxu0 0
    %1598 = vmatpush1.bf16.xpose.msra.mxu0 0
    %1599 = vmatprep.subr.bf16.mxu0 0
    %1600 = vmatpush1.bf16.xpose.msra.mxu0 0
    %1601 = vmatprep.subr.bf16.mxu0 0
    %1602 = vmatpush1.bf16.xpose.msra.mxu0 0
    %1603 = vmatprep.subr.bf16.mxu0 0
    %1604 = vmatpush1.bf16.xpose.msra.mxu0 0
    %1605 = vmatprep.subr.bf16.mxu0 0
    %1606 = vmatpush1.bf16.xpose.msra.mxu0 0
    %1607 = vmatprep.subr.bf16.mxu0 0
    %1608 = vmatpush1.bf16.xpose.msra.mxu0 0
    %1609 = vmatprep.subr.bf16.mxu0 0
    %1610 = vmatpush1.bf16.xpose.msra.mxu0 0
    %1611 = vmatprep.subr.bf16.mxu0 0
    %1612 = vmatpush1.bf16.xpose.msra.mxu0 0
    %1613 = vmatprep.subr.bf16.mxu0 0
    %1614 = vmatpush1.bf16.xpose.msra.mxu0 0
    %1615 = vmatprep.mubr.bf16.mxu0 0
    %1616 = vmatmul.mubr.bf16.gmra.mrb[0].mxu0 %v1578
    %v1617 = vpop.f32.mrb[0].mxu0
    %v1618 = vadd.f32 0.0, %v1617
    %v1619 = vpop.f32.mrb[0].mxu0
    %v1620 = vpop.f32.mrb[0].mxu0
    %v1621 = vpop.f32.mrb[0].mxu0
    %1622 = vdwg.mxu0
    %1624 = vrot.lane.b32.xlu0 %v1471, 96
    %v1625 = vpop.permute.xlu0 %1624
    %v1627 = vsel %vm139, %v1471, 0
    %v1630 = vsel %vm139, %v1625, 0
    %1632 = vmatprep.subr.bf16.mxu0 0
    %1633 = vmatpush1.bf16.xpose.msra.mxu0 %v1630
    %1634 = vmatprep.subr.bf16.mxu0 0
    %1635 = vmatpush1.bf16.xpose.msra.mxu0 0
    %1636 = vmatprep.subr.bf16.mxu0 0
    %1637 = vmatpush1.bf16.xpose.msra.mxu0 0
    %1638 = vmatprep.subr.bf16.mxu0 0
    %1639 = vmatpush1.bf16.xpose.msra.mxu0 0
    %1640 = vmatprep.subr.bf16.mxu0 0
    %1641 = vmatpush1.bf16.xpose.msra.mxu0 0
    %1642 = vmatprep.subr.bf16.mxu0 0
    %1643 = vmatpush1.bf16.xpose.msra.mxu0 0
    %1644 = vmatprep.subr.bf16.mxu0 0
    %1645 = vmatpush1.bf16.xpose.msra.mxu0 0
    %1646 = vmatprep.subr.bf16.mxu0 0
    %1647 = vmatpush1.bf16.xpose.msra.mxu0 0
    %1648 = vmatprep.subr.bf16.mxu0 0
    %1649 = vmatpush1.bf16.xpose.msra.mxu0 0
    %1650 = vmatprep.subr.bf16.mxu0 0
    %1651 = vmatpush1.bf16.xpose.msra.mxu0 0
    %1652 = vmatprep.subr.bf16.mxu0 0
    %1653 = vmatpush1.bf16.xpose.msra.mxu0 0
    %1654 = vmatprep.subr.bf16.mxu0 0
    %1655 = vmatpush1.bf16.xpose.msra.mxu0 0
    %1656 = vmatprep.subr.bf16.mxu0 0
    %1657 = vmatpush1.bf16.xpose.msra.mxu0 0
    %1658 = vmatprep.subr.bf16.mxu0 0
    %1659 = vmatpush1.bf16.xpose.msra.mxu0 0
    %1660 = vmatprep.subr.bf16.mxu0 0
    %1661 = vmatpush1.bf16.xpose.msra.mxu0 0
    %1662 = vmatprep.subr.bf16.mxu0 0
    %1663 = vmatpush1.bf16.xpose.msra.mxu0 0
    %1664 = vmatprep.mubr.bf16.mxu0 0
    %1665 = vmatmul.mubr.bf16.gmra.mrb[0].mxu0 %v1627
    %v1666 = vpop.f32.mrb[0].mxu0
    %v1667 = vadd.f32 0.0, %v1666
    %v1668 = vpop.f32.mrb[0].mxu0
    %v1669 = vpop.f32.mrb[0].mxu0
    %v1670 = vpop.f32.mrb[0].mxu0
    %1671 = vdwg.mxu0
    %1673 = vrot.lane.b32.xlu0 %v1472, 96
    %v1674 = vpop.permute.xlu0 %1673
    %v1676 = vsel %vm139, %v1472, 0
    %v1679 = vsel %vm139, %v1674, 0
    %1681 = vmatprep.subr.bf16.mxu0 0
    %1682 = vmatpush1.bf16.xpose.msra.mxu0 %v1679
    %1683 = vmatprep.subr.bf16.mxu0 0
    %1684 = vmatpush1.bf16.xpose.msra.mxu0 0
    %1685 = vmatprep.subr.bf16.mxu0 0
    %1686 = vmatpush1.bf16.xpose.msra.mxu0 0
    %1687 = vmatprep.subr.bf16.mxu0 0
    %1688 = vmatpush1.bf16.xpose.msra.mxu0 0
    %1689 = vmatprep.subr.bf16.mxu0 0
    %1690 = vmatpush1.bf16.xpose.msra.mxu0 0
    %1691 = vmatprep.subr.bf16.mxu0 0
    %1692 = vmatpush1.bf16.xpose.msra.mxu0 0
    %1693 = vmatprep.subr.bf16.mxu0 0
    %1694 = vmatpush1.bf16.xpose.msra.mxu0 0
    %1695 = vmatprep.subr.bf16.mxu0 0
    %1696 = vmatpush1.bf16.xpose.msra.mxu0 0
    %1697 = vmatprep.subr.bf16.mxu0 0
    %1698 = vmatpush1.bf16.xpose.msra.mxu0 0
    %1699 = vmatprep.subr.bf16.mxu0 0
    %1700 = vmatpush1.bf16.xpose.msra.mxu0 0
    %1701 = vmatprep.subr.bf16.mxu0 0
    %1702 = vmatpush1.bf16.xpose.msra.mxu0 0
    %1703 = vmatprep.subr.bf16.mxu0 0
    %1704 = vmatpush1.bf16.xpose.msra.mxu0 0
    %1705 = vmatprep.subr.bf16.mxu0 0
    %1706 = vmatpush1.bf16.xpose.msra.mxu0 0
    %1707 = vmatprep.subr.bf16.mxu0 0
    %1708 = vmatpush1.bf16.xpose.msra.mxu0 0
    %1709 = vmatprep.subr.bf16.mxu0 0
    %1710 = vmatpush1.bf16.xpose.msra.mxu0 0
    %1711 = vmatprep.subr.bf16.mxu0 0
    %1712 = vmatpush1.bf16.xpose.msra.mxu0 0
    %1713 = vmatprep.mubr.bf16.mxu0 0
    %1714 = vmatmul.mubr.bf16.gmra.mrb[0].mxu0 %v1676
    %v1715 = vpop.f32.mrb[0].mxu0
    %v1716 = vadd.f32 0.0, %v1715
    %v1717 = vpop.f32.mrb[0].mxu0
    %v1718 = vpop.f32.mrb[0].mxu0
    %v1719 = vpop.f32.mrb[0].mxu0
    %1720 = vdwg.mxu0
    %1722 = vrot.lane.b32.xlu0 %v1473, 96
    %v1723 = vpop.permute.xlu0 %1722
    %v1725 = vsel %vm139, %v1473, 0
    %v1728 = vsel %vm139, %v1723, 0
    %1730 = vmatprep.subr.bf16.mxu0 0
    %1731 = vmatpush1.bf16.xpose.msra.mxu0 %v1728
    %1732 = vmatprep.subr.bf16.mxu0 0
    %1733 = vmatpush1.bf16.xpose.msra.mxu0 0
    %1734 = vmatprep.subr.bf16.mxu0 0
    %1735 = vmatpush1.bf16.xpose.msra.mxu0 0
    %1736 = vmatprep.subr.bf16.mxu0 0
    %1737 = vmatpush1.bf16.xpose.msra.mxu0 0
    %1738 = vmatprep.subr.bf16.mxu0 0
    %1739 = vmatpush1.bf16.xpose.msra.mxu0 0
    %1740 = vmatprep.subr.bf16.mxu0 0
    %1741 = vmatpush1.bf16.xpose.msra.mxu0 0
    %1742 = vmatprep.subr.bf16.mxu0 0
    %1743 = vmatpush1.bf16.xpose.msra.mxu0 0
    %1744 = vmatprep.subr.bf16.mxu0 0
    %1745 = vmatpush1.bf16.xpose.msra.mxu0 0
    %1746 = vmatprep.subr.bf16.mxu0 0
    %1747 = vmatpush1.bf16.xpose.msra.mxu0 0
    %1748 = vmatprep.subr.bf16.mxu0 0
    %1749 = vmatpush1.bf16.xpose.msra.mxu0 0
    %1750 = vmatprep.subr.bf16.mxu0 0
    %1751 = vmatpush1.bf16.xpose.msra.mxu0 0
    %1752 = vmatprep.subr.bf16.mxu0 0
    %1753 = vmatpush1.bf16.xpose.msra.mxu0 0
    %1754 = vmatprep.subr.bf16.mxu0 0
    %1755 = vmatpush1.bf16.xpose.msra.mxu0 0
    %1756 = vmatprep.subr.bf16.mxu0 0
    %1757 = vmatpush1.bf16.xpose.msra.mxu0 0
    %1758 = vmatprep.subr.bf16.mxu0 0
    %1759 = vmatpush1.bf16.xpose.msra.mxu0 0
    %1760 = vmatprep.subr.bf16.mxu0 0
    %1761 = vmatpush1.bf16.xpose.msra.mxu0 0
    %1762 = vmatprep.mubr.bf16.mxu0 0
    %1763 = vmatmul.mubr.bf16.gmra.mrb[0].mxu0 %v1725
    %v1764 = vpop.f32.mrb[0].mxu0
    %v1765 = vadd.f32 0.0, %v1764
    %v1766 = vpop.f32.mrb[0].mxu0
    %v1767 = vpop.f32.mrb[0].mxu0
    %v1768 = vpop.f32.mrb[0].mxu0
    %1769 = vdwg.mxu0
    %1771 = vrot.lane.b32.xlu0 %v1474, 96
    %v1772 = vpop.permute.xlu0 %1771
    %v1774 = vsel %vm139, %v1474, 0
    %v1777 = vsel %vm139, %v1772, 0
    %1779 = vmatprep.subr.bf16.mxu0 0
    %1780 = vmatpush1.bf16.xpose.msra.mxu0 %v1777
    %1781 = vmatprep.subr.bf16.mxu0 0
    %1782 = vmatpush1.bf16.xpose.msra.mxu0 0
    %1783 = vmatprep.subr.bf16.mxu0 0
    %1784 = vmatpush1.bf16.xpose.msra.mxu0 0
    %1785 = vmatprep.subr.bf16.mxu0 0
    %1786 = vmatpush1.bf16.xpose.msra.mxu0 0
    %1787 = vmatprep.subr.bf16.mxu0 0
    %1788 = vmatpush1.bf16.xpose.msra.mxu0 0
    %1789 = vmatprep.subr.bf16.mxu0 0
    %1790 = vmatpush1.bf16.xpose.msra.mxu0 0
    %1791 = vmatprep.subr.bf16.mxu0 0
    %1792 = vmatpush1.bf16.xpose.msra.mxu0 0
    %1793 = vmatprep.subr.bf16.mxu0 0
    %1794 = vmatpush1.bf16.xpose.msra.mxu0 0
    %1795 = vmatprep.subr.bf16.mxu0 0
    %1796 = vmatpush1.bf16.xpose.msra.mxu0 0
    %1797 = vmatprep.subr.bf16.mxu0 0
    %1798 = vmatpush1.bf16.xpose.msra.mxu0 0
    %1799 = vmatprep.subr.bf16.mxu0 0
    %1800 = vmatpush1.bf16.xpose.msra.mxu0 0
    %1801 = vmatprep.subr.bf16.mxu0 0
    %1802 = vmatpush1.bf16.xpose.msra.mxu0 0
    %1803 = vmatprep.subr.bf16.mxu0 0
    %1804 = vmatpush1.bf16.xpose.msra.mxu0 0
    %1805 = vmatprep.subr.bf16.mxu0 0
    %1806 = vmatpush1.bf16.xpose.msra.mxu0 0
    %1807 = vmatprep.subr.bf16.mxu0 0
    %1808 = vmatpush1.bf16.xpose.msra.mxu0 0
    %1809 = vmatprep.subr.bf16.mxu0 0
    %1810 = vmatpush1.bf16.xpose.msra.mxu0 0
    %1811 = vmatprep.mubr.bf16.mxu0 0
    %1812 = vmatmul.mubr.bf16.gmra.mrb[0].mxu0 %v1774
    %v1813 = vpop.f32.mrb[0].mxu0
    %v1814 = vadd.f32 0.0, %v1813
    %v1815 = vpop.f32.mrb[0].mxu0
    %v1816 = vpop.f32.mrb[0].mxu0
    %v1817 = vpop.f32.mrb[0].mxu0
    %1818 = vdwg.mxu0
    %1820 = vrot.lane.b32.xlu0 %v1475, 96
    %v1821 = vpop.permute.xlu0 %1820
    %v1823 = vsel %vm139, %v1475, 0
    %v1826 = vsel %vm139, %v1821, 0
    %1828 = vmatprep.subr.bf16.mxu0 0
    %1829 = vmatpush1.bf16.xpose.msra.mxu0 %v1826
    %1830 = vmatprep.subr.bf16.mxu0 0
    %1831 = vmatpush1.bf16.xpose.msra.mxu0 0
    %1832 = vmatprep.subr.bf16.mxu0 0
    %1833 = vmatpush1.bf16.xpose.msra.mxu0 0
    %1834 = vmatprep.subr.bf16.mxu0 0
    %1835 = vmatpush1.bf16.xpose.msra.mxu0 0
    %1836 = vmatprep.subr.bf16.mxu0 0
    %1837 = vmatpush1.bf16.xpose.msra.mxu0 0
    %1838 = vmatprep.subr.bf16.mxu0 0
    %1839 = vmatpush1.bf16.xpose.msra.mxu0 0
    %1840 = vmatprep.subr.bf16.mxu0 0
    %1841 = vmatpush1.bf16.xpose.msra.mxu0 0
    %1842 = vmatprep.subr.bf16.mxu0 0
    %1843 = vmatpush1.bf16.xpose.msra.mxu0 0
    %1844 = vmatprep.subr.bf16.mxu0 0
    %1845 = vmatpush1.bf16.xpose.msra.mxu0 0
    %1846 = vmatprep.subr.bf16.mxu0 0
    %1847 = vmatpush1.bf16.xpose.msra.mxu0 0
    %1848 = vmatprep.subr.bf16.mxu0 0
    %1849 = vmatpush1.bf16.xpose.msra.mxu0 0
    %1850 = vmatprep.subr.bf16.mxu0 0
    %1851 = vmatpush1.bf16.xpose.msra.mxu0 0
    %1852 = vmatprep.subr.bf16.mxu0 0
    %1853 = vmatpush1.bf16.xpose.msra.mxu0 0
    %1854 = vmatprep.subr.bf16.mxu0 0
    %1855 = vmatpush1.bf16.xpose.msra.mxu0 0
    %1856 = vmatprep.subr.bf16.mxu0 0
    %1857 = vmatpush1.bf16.xpose.msra.mxu0 0
    %1858 = vmatprep.subr.bf16.mxu0 0
    %1859 = vmatpush1.bf16.xpose.msra.mxu0 0
    %1860 = vmatprep.mubr.bf16.mxu0 0
    %1861 = vmatmul.mubr.bf16.gmra.mrb[0].mxu0 %v1823
    %v1862 = vpop.f32.mrb[0].mxu0
    %v1863 = vadd.f32 0.0, %v1862
    %v1864 = vpop.f32.mrb[0].mxu0
    %v1865 = vpop.f32.mrb[0].mxu0
    %v1866 = vpop.f32.mrb[0].mxu0
    %1867 = vdwg.mxu0
    %v1868 = vmul.f32 %v1520, 0.35355338
    %v1869 = vmul.f32 %v1569, 0.35355338
    %v1870 = vmul.f32 %v1618, 0.35355338
    %v1871 = vmul.f32 %v1667, 0.35355338
    %v1872 = vmul.f32 %v1716, 0.35355338
    %v1873 = vmul.f32 %v1765, 0.35355338
    %v1874 = vmul.f32 %v1814, 0.35355338
    %v1875 = vmul.f32 %v1863, 0.35355338
    %v1876 = vsel %vm139, %v1868, -inf
    %1877 = vmax.xlane.f32.xlu0 %v1876
    %v1878 = vpop.xlane.xlu0 %1877
    %v1879 = vsel %vm139, %v1869, -inf
    %1880 = vmax.xlane.f32.xlu0 %v1879
    %v1881 = vpop.xlane.xlu0 %1880
    %v1882 = vsel %vm139, %v1870, -inf
    %1883 = vmax.xlane.f32.xlu0 %v1882
    %v1884 = vpop.xlane.xlu0 %1883
    %v1885 = vsel %vm139, %v1871, -inf
    %1886 = vmax.xlane.f32.xlu0 %v1885
    %v1887 = vpop.xlane.xlu0 %1886
    %v1888 = vsel %vm139, %v1872, -inf
    %1889 = vmax.xlane.f32.xlu0 %v1888
    %v1890 = vpop.xlane.xlu0 %1889
    %v1891 = vsel %vm139, %v1873, -inf
    %1892 = vmax.xlane.f32.xlu0 %v1891
    %v1893 = vpop.xlane.xlu0 %1892
    %v1894 = vsel %vm139, %v1874, -inf
    %1895 = vmax.xlane.f32.xlu0 %v1894
    %v1896 = vpop.xlane.xlu0 %1895
    %v1897 = vsel %vm139, %v1875, -inf
    %1898 = vmax.xlane.f32.xlu0 %v1897
    %v1899 = vpop.xlane.xlu0 %1898
    %v1900 = vsub.f32 %v1868, %v1878
    %v1901 = vsub.f32 %v1869, %v1881
    %v1902 = vsub.f32 %v1870, %v1884
    %v1903 = vsub.f32 %v1871, %v1887
    %v1904 = vsub.f32 %v1872, %v1890
    %v1905 = vsub.f32 %v1873, %v1893
    %v1906 = vsub.f32 %v1874, %v1896
    %v1907 = vsub.f32 %v1875, %v1899
    %v1908 = vmul.f32 %v1900, 1.442695
    %v1909 = vpow.pop %v1908
    %v1910 = vmul.f32 %v1901, 1.442695
    %v1911 = vpow.pop %v1910
    %v1912 = vmul.f32 %v1902, 1.442695
    %v1913 = vpow.pop %v1912
    %v1914 = vmul.f32 %v1903, 1.442695
    %v1915 = vpow.pop %v1914
    %v1916 = vmul.f32 %v1904, 1.442695
    %v1917 = vpow.pop %v1916
    %v1918 = vmul.f32 %v1905, 1.442695
    %v1919 = vpow.pop %v1918
    %v1920 = vmul.f32 %v1906, 1.442695
    %v1921 = vpow.pop %v1920
    %v1922 = vmul.f32 %v1907, 1.442695
    %v1923 = vpow.pop %v1922
    %v1924 = vsel %vm139, %v1909, 0.0
    %1925 = vadd.xlane.f32.xlu0 %v1924
    %v1926 = vpop.xlane.xlu0 %1925
    %v1927 = vsel %vm139, %v1911, 0.0
    %1928 = vadd.xlane.f32.xlu0 %v1927
    %v1929 = vpop.xlane.xlu0 %1928
    %v1930 = vsel %vm139, %v1913, 0.0
    %1931 = vadd.xlane.f32.xlu0 %v1930
    %v1932 = vpop.xlane.xlu0 %1931
    %v1933 = vsel %vm139, %v1915, 0.0
    %1934 = vadd.xlane.f32.xlu0 %v1933
    %v1935 = vpop.xlane.xlu0 %1934
    %v1936 = vsel %vm139, %v1917, 0.0
    %1937 = vadd.xlane.f32.xlu0 %v1936
    %v1938 = vpop.xlane.xlu0 %1937
    %v1939 = vsel %vm139, %v1919, 0.0
    %1940 = vadd.xlane.f32.xlu0 %v1939
    %v1941 = vpop.xlane.xlu0 %1940
    %v1942 = vsel %vm139, %v1921, 0.0
    %1943 = vadd.xlane.f32.xlu0 %v1942
    %v1944 = vpop.xlane.xlu0 %1943
    %v1945 = vsel %vm139, %v1923, 0.0
    %1946 = vadd.xlane.f32.xlu0 %v1945
    %v1947 = vpop.xlane.xlu0 %1946
    %v1948 = vrcp.pop %v1926
    %v1949 = vrcp.pop %v1929
    %v1950 = vrcp.pop %v1932
    %v1951 = vrcp.pop %v1935
    %v1952 = vrcp.pop %v1938
    %v1953 = vrcp.pop %v1941
    %v1954 = vrcp.pop %v1944
    %v1955 = vrcp.pop %v1947
    %v1956 = vmul.f32 %v1909, %v1948
    %v1957 = vmul.f32 %v1911, %v1949
    %v1958 = vmul.f32 %v1913, %v1950
    %v1959 = vmul.f32 %v1915, %v1951
    %v1960 = vmul.f32 %v1917, %v1952
    %v1961 = vmul.f32 %v1919, %v1953
    %v1962 = vmul.f32 %v1921, %v1954
    %v1963 = vmul.f32 %v1923, %v1955
    %v1964 = vpack.c.bf16 %v1956, %v1956
    %v1965 = vpack.c.bf16 %v1957, %v1957
    %v1966 = vpack.c.bf16 %v1958, %v1958
    %v1967 = vpack.c.bf16 %v1959, %v1959
    %v1968 = vpack.c.bf16 %v1960, %v1960
    %v1969 = vpack.c.bf16 %v1961, %v1961
    %v1970 = vpack.c.bf16 %v1962, %v1962
    %v1971 = vpack.c.bf16 %v1963, %v1963
    %1972 = vrot.lane.b32.xlu0 %v1468, 64
    %v1973 = vpop.permute.xlu0 %1972
    %v1975 = vsel %vm139, %v1964, 0
    %v1978 = vsel %vm638, %v1973, 0
    %1980 = vmatprep.subr.bf16.mxu0 0
    %1981 = vmatpush1.bf16.msra.mxu0 %v1978
    %1982 = vmatprep.subr.bf16.mxu0 0
    %1983 = vmatpush1.bf16.msra.mxu0 0
    %1984 = vmatprep.subr.bf16.mxu0 0
    %1985 = vmatpush1.bf16.msra.mxu0 0
    %1986 = vmatprep.subr.bf16.mxu0 0
    %1987 = vmatpush1.bf16.msra.mxu0 0
    %1988 = vmatprep.subr.bf16.mxu0 0
    %1989 = vmatpush1.bf16.msra.mxu0 0
    %1990 = vmatprep.subr.bf16.mxu0 0
    %1991 = vmatpush1.bf16.msra.mxu0 0
    %1992 = vmatprep.subr.bf16.mxu0 0
    %1993 = vmatpush1.bf16.msra.mxu0 0
    %1994 = vmatprep.subr.bf16.mxu0 0
    %1995 = vmatpush1.bf16.msra.mxu0 0
    %1996 = vmatprep.subr.bf16.mxu0 0
    %1997 = vmatpush1.bf16.msra.mxu0 0
    %1998 = vmatprep.subr.bf16.mxu0 0
    %1999 = vmatpush1.bf16.msra.mxu0 0
    %2000 = vmatprep.subr.bf16.mxu0 0
    %2001 = vmatpush1.bf16.msra.mxu0 0
    %2002 = vmatprep.subr.bf16.mxu0 0
    %2003 = vmatpush1.bf16.msra.mxu0 0
    %2004 = vmatprep.subr.bf16.mxu0 0
    %2005 = vmatpush1.bf16.msra.mxu0 0
    %2006 = vmatprep.subr.bf16.mxu0 0
    %2007 = vmatpush1.bf16.msra.mxu0 0
    %2008 = vmatprep.subr.bf16.mxu0 0
    %2009 = vmatpush1.bf16.msra.mxu0 0
    %2010 = vmatprep.subr.bf16.mxu0 0
    %2011 = vmatpush1.bf16.msra.mxu0 0
    %2012 = vmatprep.mubr.bf16.mxu0 0
    %2013 = vmatmul.mubr.bf16.gmra.mrb[0].mxu0 %v1975
    %v2014 = vpop.f32.mrb[0].mxu0
    %v2015 = vadd.f32 0.0, %v2014
    %v2016 = vpop.f32.mrb[0].mxu0
    %v2017 = vpop.f32.mrb[0].mxu0
    %v2018 = vpop.f32.mrb[0].mxu0
    %2019 = vdwg.mxu0
    %2020 = vrot.lane.b32.xlu0 %v1469, 64
    %v2021 = vpop.permute.xlu0 %2020
    %v2023 = vsel %vm139, %v1965, 0
    %v2026 = vsel %vm638, %v2021, 0
    %2028 = vmatprep.subr.bf16.mxu0 0
    %2029 = vmatpush1.bf16.msra.mxu0 %v2026
    %2030 = vmatprep.subr.bf16.mxu0 0
    %2031 = vmatpush1.bf16.msra.mxu0 0
    %2032 = vmatprep.subr.bf16.mxu0 0
    %2033 = vmatpush1.bf16.msra.mxu0 0
    %2034 = vmatprep.subr.bf16.mxu0 0
    %2035 = vmatpush1.bf16.msra.mxu0 0
    %2036 = vmatprep.subr.bf16.mxu0 0
    %2037 = vmatpush1.bf16.msra.mxu0 0
    %2038 = vmatprep.subr.bf16.mxu0 0
    %2039 = vmatpush1.bf16.msra.mxu0 0
    %2040 = vmatprep.subr.bf16.mxu0 0
    %2041 = vmatpush1.bf16.msra.mxu0 0
    %2042 = vmatprep.subr.bf16.mxu0 0
    %2043 = vmatpush1.bf16.msra.mxu0 0
    %2044 = vmatprep.subr.bf16.mxu0 0
    %2045 = vmatpush1.bf16.msra.mxu0 0
    %2046 = vmatprep.subr.bf16.mxu0 0
    %2047 = vmatpush1.bf16.msra.mxu0 0
    %2048 = vmatprep.subr.bf16.mxu0 0
    %2049 = vmatpush1.bf16.msra.mxu0 0
    %2050 = vmatprep.subr.bf16.mxu0 0
    %2051 = vmatpush1.bf16.msra.mxu0 0
    %2052 = vmatprep.subr.bf16.mxu0 0
    %2053 = vmatpush1.bf16.msra.mxu0 0
    %2054 = vmatprep.subr.bf16.mxu0 0
    %2055 = vmatpush1.bf16.msra.mxu0 0
    %2056 = vmatprep.subr.bf16.mxu0 0
    %2057 = vmatpush1.bf16.msra.mxu0 0
    %2058 = vmatprep.subr.bf16.mxu0 0
    %2059 = vmatpush1.bf16.msra.mxu0 0
    %2060 = vmatprep.mubr.bf16.mxu0 0
    %2061 = vmatmul.mubr.bf16.gmra.mrb[0].mxu0 %v2023
    %v2062 = vpop.f32.mrb[0].mxu0
    %v2063 = vadd.f32 0.0, %v2062
    %v2064 = vpop.f32.mrb[0].mxu0
    %v2065 = vpop.f32.mrb[0].mxu0
    %v2066 = vpop.f32.mrb[0].mxu0
    %2067 = vdwg.mxu0
    %2068 = vrot.lane.b32.xlu0 %v1470, 64
    %v2069 = vpop.permute.xlu0 %2068
    %v2071 = vsel %vm139, %v1966, 0
    %v2074 = vsel %vm638, %v2069, 0
    %2076 = vmatprep.subr.bf16.mxu0 0
    %2077 = vmatpush1.bf16.msra.mxu0 %v2074
    %2078 = vmatprep.subr.bf16.mxu0 0
    %2079 = vmatpush1.bf16.msra.mxu0 0
    %2080 = vmatprep.subr.bf16.mxu0 0
    %2081 = vmatpush1.bf16.msra.mxu0 0
    %2082 = vmatprep.subr.bf16.mxu0 0
    %2083 = vmatpush1.bf16.msra.mxu0 0
    %2084 = vmatprep.subr.bf16.mxu0 0
    %2085 = vmatpush1.bf16.msra.mxu0 0
    %2086 = vmatprep.subr.bf16.mxu0 0
    %2087 = vmatpush1.bf16.msra.mxu0 0
    %2088 = vmatprep.subr.bf16.mxu0 0
    %2089 = vmatpush1.bf16.msra.mxu0 0
    %2090 = vmatprep.subr.bf16.mxu0 0
    %2091 = vmatpush1.bf16.msra.mxu0 0
    %2092 = vmatprep.subr.bf16.mxu0 0
    %2093 = vmatpush1.bf16.msra.mxu0 0
    %2094 = vmatprep.subr.bf16.mxu0 0
    %2095 = vmatpush1.bf16.msra.mxu0 0
    %2096 = vmatprep.subr.bf16.mxu0 0
    %2097 = vmatpush1.bf16.msra.mxu0 0
    %2098 = vmatprep.subr.bf16.mxu0 0
    %2099 = vmatpush1.bf16.msra.mxu0 0
    %2100 = vmatprep.subr.bf16.mxu0 0
    %2101 = vmatpush1.bf16.msra.mxu0 0
    %2102 = vmatprep.subr.bf16.mxu0 0
    %2103 = vmatpush1.bf16.msra.mxu0 0
    %2104 = vmatprep.subr.bf16.mxu0 0
    %2105 = vmatpush1.bf16.msra.mxu0 0
    %2106 = vmatprep.subr.bf16.mxu0 0
    %2107 = vmatpush1.bf16.msra.mxu0 0
    %2108 = vmatprep.mubr.bf16.mxu0 0
    %2109 = vmatmul.mubr.bf16.gmra.mrb[0].mxu0 %v2071
    %v2110 = vpop.f32.mrb[0].mxu0
    %v2111 = vadd.f32 0.0, %v2110
    %v2112 = vpop.f32.mrb[0].mxu0
    %v2113 = vpop.f32.mrb[0].mxu0
    %v2114 = vpop.f32.mrb[0].mxu0
    %2115 = vdwg.mxu0
    %2116 = vrot.lane.b32.xlu0 %v1471, 64
    %v2117 = vpop.permute.xlu0 %2116
    %v2119 = vsel %vm139, %v1967, 0
    %v2122 = vsel %vm638, %v2117, 0
    %2124 = vmatprep.subr.bf16.mxu0 0
    %2125 = vmatpush1.bf16.msra.mxu0 %v2122
    %2126 = vmatprep.subr.bf16.mxu0 0
    %2127 = vmatpush1.bf16.msra.mxu0 0
    %2128 = vmatprep.subr.bf16.mxu0 0
    %2129 = vmatpush1.bf16.msra.mxu0 0
    %2130 = vmatprep.subr.bf16.mxu0 0
    %2131 = vmatpush1.bf16.msra.mxu0 0
    %2132 = vmatprep.subr.bf16.mxu0 0
    %2133 = vmatpush1.bf16.msra.mxu0 0
    %2134 = vmatprep.subr.bf16.mxu0 0
    %2135 = vmatpush1.bf16.msra.mxu0 0
    %2136 = vmatprep.subr.bf16.mxu0 0
    %2137 = vmatpush1.bf16.msra.mxu0 0
    %2138 = vmatprep.subr.bf16.mxu0 0
    %2139 = vmatpush1.bf16.msra.mxu0 0
    %2140 = vmatprep.subr.bf16.mxu0 0
    %2141 = vmatpush1.bf16.msra.mxu0 0
    %2142 = vmatprep.subr.bf16.mxu0 0
    %2143 = vmatpush1.bf16.msra.mxu0 0
    %2144 = vmatprep.subr.bf16.mxu0 0
    %2145 = vmatpush1.bf16.msra.mxu0 0
    %2146 = vmatprep.subr.bf16.mxu0 0
    %2147 = vmatpush1.bf16.msra.mxu0 0
    %2148 = vmatprep.subr.bf16.mxu0 0
    %2149 = vmatpush1.bf16.msra.mxu0 0
    %2150 = vmatprep.subr.bf16.mxu0 0
    %2151 = vmatpush1.bf16.msra.mxu0 0
    %2152 = vmatprep.subr.bf16.mxu0 0
    %2153 = vmatpush1.bf16.msra.mxu0 0
    %2154 = vmatprep.subr.bf16.mxu0 0
    %2155 = vmatpush1.bf16.msra.mxu0 0
    %2156 = vmatprep.mubr.bf16.mxu0 0
    %2157 = vmatmul.mubr.bf16.gmra.mrb[0].mxu0 %v2119
    %v2158 = vpop.f32.mrb[0].mxu0
    %v2159 = vadd.f32 0.0, %v2158
    %v2160 = vpop.f32.mrb[0].mxu0
    %v2161 = vpop.f32.mrb[0].mxu0
    %v2162 = vpop.f32.mrb[0].mxu0
    %2163 = vdwg.mxu0
    %2164 = vrot.lane.b32.xlu0 %v1472, 64
    %v2165 = vpop.permute.xlu0 %2164
    %v2167 = vsel %vm139, %v1968, 0
    %v2170 = vsel %vm638, %v2165, 0
    %2172 = vmatprep.subr.bf16.mxu0 0
    %2173 = vmatpush1.bf16.msra.mxu0 %v2170
    %2174 = vmatprep.subr.bf16.mxu0 0
    %2175 = vmatpush1.bf16.msra.mxu0 0
    %2176 = vmatprep.subr.bf16.mxu0 0
    %2177 = vmatpush1.bf16.msra.mxu0 0
    %2178 = vmatprep.subr.bf16.mxu0 0
    %2179 = vmatpush1.bf16.msra.mxu0 0
    %2180 = vmatprep.subr.bf16.mxu0 0
    %2181 = vmatpush1.bf16.msra.mxu0 0
    %2182 = vmatprep.subr.bf16.mxu0 0
    %2183 = vmatpush1.bf16.msra.mxu0 0
    %2184 = vmatprep.subr.bf16.mxu0 0
    %2185 = vmatpush1.bf16.msra.mxu0 0
    %2186 = vmatprep.subr.bf16.mxu0 0
    %2187 = vmatpush1.bf16.msra.mxu0 0
    %2188 = vmatprep.subr.bf16.mxu0 0
    %2189 = vmatpush1.bf16.msra.mxu0 0
    %2190 = vmatprep.subr.bf16.mxu0 0
    %2191 = vmatpush1.bf16.msra.mxu0 0
    %2192 = vmatprep.subr.bf16.mxu0 0
    %2193 = vmatpush1.bf16.msra.mxu0 0
    %2194 = vmatprep.subr.bf16.mxu0 0
    %2195 = vmatpush1.bf16.msra.mxu0 0
    %2196 = vmatprep.subr.bf16.mxu0 0
    %2197 = vmatpush1.bf16.msra.mxu0 0
    %2198 = vmatprep.subr.bf16.mxu0 0
    %2199 = vmatpush1.bf16.msra.mxu0 0
    %2200 = vmatprep.subr.bf16.mxu0 0
    %2201 = vmatpush1.bf16.msra.mxu0 0
    %2202 = vmatprep.subr.bf16.mxu0 0
    %2203 = vmatpush1.bf16.msra.mxu0 0
    %2204 = vmatprep.mubr.bf16.mxu0 0
    %2205 = vmatmul.mubr.bf16.gmra.mrb[0].mxu0 %v2167
    %v2206 = vpop.f32.mrb[0].mxu0
    %v2207 = vadd.f32 0.0, %v2206
    %v2208 = vpop.f32.mrb[0].mxu0
    %v2209 = vpop.f32.mrb[0].mxu0
    %v2210 = vpop.f32.mrb[0].mxu0
    %2211 = vdwg.mxu0
    %2212 = vrot.lane.b32.xlu0 %v1473, 64
    %v2213 = vpop.permute.xlu0 %2212
    %v2215 = vsel %vm139, %v1969, 0
    %v2218 = vsel %vm638, %v2213, 0
    %2220 = vmatprep.subr.bf16.mxu0 0
    %2221 = vmatpush1.bf16.msra.mxu0 %v2218
    %2222 = vmatprep.subr.bf16.mxu0 0
    %2223 = vmatpush1.bf16.msra.mxu0 0
    %2224 = vmatprep.subr.bf16.mxu0 0
    %2225 = vmatpush1.bf16.msra.mxu0 0
    %2226 = vmatprep.subr.bf16.mxu0 0
    %2227 = vmatpush1.bf16.msra.mxu0 0
    %2228 = vmatprep.subr.bf16.mxu0 0
    %2229 = vmatpush1.bf16.msra.mxu0 0
    %2230 = vmatprep.subr.bf16.mxu0 0
    %2231 = vmatpush1.bf16.msra.mxu0 0
    %2232 = vmatprep.subr.bf16.mxu0 0
    %2233 = vmatpush1.bf16.msra.mxu0 0
    %2234 = vmatprep.subr.bf16.mxu0 0
    %2235 = vmatpush1.bf16.msra.mxu0 0
    %2236 = vmatprep.subr.bf16.mxu0 0
    %2237 = vmatpush1.bf16.msra.mxu0 0
    %2238 = vmatprep.subr.bf16.mxu0 0
    %2239 = vmatpush1.bf16.msra.mxu0 0
    %2240 = vmatprep.subr.bf16.mxu0 0
    %2241 = vmatpush1.bf16.msra.mxu0 0
    %2242 = vmatprep.subr.bf16.mxu0 0
    %2243 = vmatpush1.bf16.msra.mxu0 0
    %2244 = vmatprep.subr.bf16.mxu0 0
    %2245 = vmatpush1.bf16.msra.mxu0 0
    %2246 = vmatprep.subr.bf16.mxu0 0
    %2247 = vmatpush1.bf16.msra.mxu0 0
    %2248 = vmatprep.subr.bf16.mxu0 0
    %2249 = vmatpush1.bf16.msra.mxu0 0
    %2250 = vmatprep.subr.bf16.mxu0 0
    %2251 = vmatpush1.bf16.msra.mxu0 0
    %2252 = vmatprep.mubr.bf16.mxu0 0
    %2253 = vmatmul.mubr.bf16.gmra.mrb[0].mxu0 %v2215
    %v2254 = vpop.f32.mrb[0].mxu0
    %v2255 = vadd.f32 0.0, %v2254
    %v2256 = vpop.f32.mrb[0].mxu0
    %v2257 = vpop.f32.mrb[0].mxu0
    %v2258 = vpop.f32.mrb[0].mxu0
    %2259 = vdwg.mxu0
    %2260 = vrot.lane.b32.xlu0 %v1474, 64
    %v2261 = vpop.permute.xlu0 %2260
    %v2263 = vsel %vm139, %v1970, 0
    %v2266 = vsel %vm638, %v2261, 0
    %2268 = vmatprep.subr.bf16.mxu0 0
    %2269 = vmatpush1.bf16.msra.mxu0 %v2266
    %2270 = vmatprep.subr.bf16.mxu0 0
    %2271 = vmatpush1.bf16.msra.mxu0 0
    %2272 = vmatprep.subr.bf16.mxu0 0
    %2273 = vmatpush1.bf16.msra.mxu0 0
    %2274 = vmatprep.subr.bf16.mxu0 0
    %2275 = vmatpush1.bf16.msra.mxu0 0
    %2276 = vmatprep.subr.bf16.mxu0 0
    %2277 = vmatpush1.bf16.msra.mxu0 0
    %2278 = vmatprep.subr.bf16.mxu0 0
    %2279 = vmatpush1.bf16.msra.mxu0 0
    %2280 = vmatprep.subr.bf16.mxu0 0
    %2281 = vmatpush1.bf16.msra.mxu0 0
    %2282 = vmatprep.subr.bf16.mxu0 0
    %2283 = vmatpush1.bf16.msra.mxu0 0
    %2284 = vmatprep.subr.bf16.mxu0 0
    %2285 = vmatpush1.bf16.msra.mxu0 0
    %2286 = vmatprep.subr.bf16.mxu0 0
    %2287 = vmatpush1.bf16.msra.mxu0 0
    %2288 = vmatprep.subr.bf16.mxu0 0
    %2289 = vmatpush1.bf16.msra.mxu0 0
    %2290 = vmatprep.subr.bf16.mxu0 0
    %2291 = vmatpush1.bf16.msra.mxu0 0
    %2292 = vmatprep.subr.bf16.mxu0 0
    %2293 = vmatpush1.bf16.msra.mxu0 0
    %2294 = vmatprep.subr.bf16.mxu0 0
    %2295 = vmatpush1.bf16.msra.mxu0 0
    %2296 = vmatprep.subr.bf16.mxu0 0
    %2297 = vmatpush1.bf16.msra.mxu0 0
    %2298 = vmatprep.subr.bf16.mxu0 0
    %2299 = vmatpush1.bf16.msra.mxu0 0
    %2300 = vmatprep.mubr.bf16.mxu0 0
    %2301 = vmatmul.mubr.bf16.gmra.mrb[0].mxu0 %v2263
    %v2302 = vpop.f32.mrb[0].mxu0
    %v2303 = vadd.f32 0.0, %v2302
    %v2304 = vpop.f32.mrb[0].mxu0
    %v2305 = vpop.f32.mrb[0].mxu0
    %v2306 = vpop.f32.mrb[0].mxu0
    %2307 = vdwg.mxu0
    %2308 = vrot.lane.b32.xlu0 %v1475, 64
    %v2309 = vpop.permute.xlu0 %2308
    %v2311 = vsel %vm139, %v1971, 0
    %v2314 = vsel %vm638, %v2309, 0
    %2316 = vmatprep.subr.bf16.mxu0 0
    %2317 = vmatpush1.bf16.msra.mxu0 %v2314
    %2318 = vmatprep.subr.bf16.mxu0 0
    %2319 = vmatpush1.bf16.msra.mxu0 0
    %2320 = vmatprep.subr.bf16.mxu0 0
    %2321 = vmatpush1.bf16.msra.mxu0 0
    %2322 = vmatprep.subr.bf16.mxu0 0
    %2323 = vmatpush1.bf16.msra.mxu0 0
    %2324 = vmatprep.subr.bf16.mxu0 0
    %2325 = vmatpush1.bf16.msra.mxu0 0
    %2326 = vmatprep.subr.bf16.mxu0 0
    %2327 = vmatpush1.bf16.msra.mxu0 0
    %2328 = vmatprep.subr.bf16.mxu0 0
    %2329 = vmatpush1.bf16.msra.mxu0 0
    %2330 = vmatprep.subr.bf16.mxu0 0
    %2331 = vmatpush1.bf16.msra.mxu0 0
    %2332 = vmatprep.subr.bf16.mxu0 0
    %2333 = vmatpush1.bf16.msra.mxu0 0
    %2334 = vmatprep.subr.bf16.mxu0 0
    %2335 = vmatpush1.bf16.msra.mxu0 0
    %2336 = vmatprep.subr.bf16.mxu0 0
    %2337 = vmatpush1.bf16.msra.mxu0 0
    %2338 = vmatprep.subr.bf16.mxu0 0
    %2339 = vmatpush1.bf16.msra.mxu0 0
    %2340 = vmatprep.subr.bf16.mxu0 0
    %2341 = vmatpush1.bf16.msra.mxu0 0
    %2342 = vmatprep.subr.bf16.mxu0 0
    %2343 = vmatpush1.bf16.msra.mxu0 0
    %2344 = vmatprep.subr.bf16.mxu0 0
    %2345 = vmatpush1.bf16.msra.mxu0 0
    %2346 = vmatprep.subr.bf16.mxu0 0
    %2347 = vmatpush1.bf16.msra.mxu0 0
    %2348 = vmatprep.mubr.bf16.mxu0 0
    %2349 = vmatmul.mubr.bf16.gmra.mrb[0].mxu0 %v2311
    %v2350 = vpop.f32.mrb[0].mxu0
    %v2351 = vadd.f32 0.0, %v2350
    %v2352 = vpop.f32.mrb[0].mxu0
    %v2353 = vpop.f32.mrb[0].mxu0
    %v2354 = vpop.f32.mrb[0].mxu0
    %2355 = vdwg.mxu0
    %2358 = vrot.lane.b32.xlu0 %v2111, 8
    %v2359 = vpop.permute.xlu0 %2358
    %2360 = vrot.lane.b32.xlu0 %v2159, 8
    %v2361 = vpop.permute.xlu0 %2360
    %2366 = vrot.lane.b32.xlu0 %v2207, 16
    %v2367 = vpop.permute.xlu0 %2366
    %2368 = vrot.lane.b32.xlu0 %v2255, 16
    %v2369 = vpop.permute.xlu0 %2368
    %2374 = vrot.lane.b32.xlu0 %v2303, 24
    %v2375 = vpop.permute.xlu0 %2374
    %2376 = vrot.lane.b32.xlu0 %v2351, 24
    %v2377 = vpop.permute.xlu0 %2376
    %v2380 = vsel %vm139, %v2015, %v2359
    %v2381 = vsel %vm139, %v2063, %v2361
    %v2382 = vsel %vm1044, %v2380, %v2367
    %v2383 = vsel %vm1044, %v2381, %v2369
    %v2384 = vsel %vm1047, %v2382, %v2375
    %v2385 = vsel %vm1047, %v2383, %v2377
    %v2386 = vpack.c.bf16 %v2385, %v2384
    %v2387 = vlaneseq
    %v2388 = vshrl.u32 %v2387, 7
    %v2389 = vsub.s32 1, %v2388
    %v2390 = vrot.slane %v1386, %v2389
    %2391 = vrot.lane.b32.xlu0 %v1400, 32
    %v2392 = vpop.permute.xlu0 %2391
    %2393 = vrot.lane.b32.xlu0 %v1401, 32
    %v2394 = vpop.permute.xlu0 %2393
    %v2398 = vsel %vm63, %v2386, 0
    %2400 = vmatprep.subr.bf16.mxu0 0
    %2401 = vmatpush1.bf16.msra.mxu0 %v2392
    %2402 = vmatprep.subr.bf16.mxu0 0
    %2403 = vmatpush1.bf16.msra.mxu0 %v2394
    %2404 = vmatprep.subr.bf16.mxu0 0
    %2405 = vmatpush1.bf16.msra.mxu0 0
    %2406 = vmatprep.subr.bf16.mxu0 0
    %2407 = vmatpush1.bf16.msra.mxu0 0
    %2408 = vmatprep.subr.bf16.mxu0 0
    %2409 = vmatpush1.bf16.msra.mxu0 0
    %2410 = vmatprep.subr.bf16.mxu0 0
    %2411 = vmatpush1.bf16.msra.mxu0 0
    %2412 = vmatprep.subr.bf16.mxu0 0
    %2413 = vmatpush1.bf16.msra.mxu0 0
    %2414 = vmatprep.subr.bf16.mxu0 0
    %2415 = vmatpush1.bf16.msra.mxu0 0
    %2416 = vmatprep.subr.bf16.mxu0 0
    %2417 = vmatpush1.bf16.msra.mxu0 0
    %2418 = vmatprep.subr.bf16.mxu0 0
    %2419 = vmatpush1.bf16.msra.mxu0 0
    %2420 = vmatprep.subr.bf16.mxu0 0
    %2421 = vmatpush1.bf16.msra.mxu0 0
    %2422 = vmatprep.subr.bf16.mxu0 0
    %2423 = vmatpush1.bf16.msra.mxu0 0
    %2424 = vmatprep.subr.bf16.mxu0 0
    %2425 = vmatpush1.bf16.msra.mxu0 0
    %2426 = vmatprep.subr.bf16.mxu0 0
    %2427 = vmatpush1.bf16.msra.mxu0 0
    %2428 = vmatprep.subr.bf16.mxu0 0
    %2429 = vmatpush1.bf16.msra.mxu0 0
    %2430 = vmatprep.subr.bf16.mxu0 0
    %2431 = vmatpush1.bf16.msra.mxu0 0
    %2432 = vmatprep.mubr.bf16.mxu0 0
    %2433 = vmatmul.mubr.bf16.gmra.mrb[0].mxu0 %v2398
    %v2434 = vpop.f32.mrb[0].mxu0
    %v2435 = vadd.f32 %v2390, %v2434
    %v2436 = vpop.f32.mrb[0].mxu0
    %v2437 = vpop.f32.mrb[0].mxu0
    %v2438 = vadd.f32 %v2390, %v2437
    %v2439 = vpop.f32.mrb[0].mxu0
    %2440 = vdwg.mxu0
    %v2441 = vadd.f32 %v1357, %v2435
    %v2442 = vadd.f32 %v1358, %v2438
    %v2443 = vsel %vm63, %v2441, 0.0
    %2444 = vadd.xlane.f32.xlu0 %v2443
    %v2445 = vpop.xlane.xlu0 %2444
    %v2446 = vsel %vm63, %v2442, 0.0
    %2447 = vadd.xlane.f32.xlu0 %v2446
    %v2448 = vpop.xlane.xlu0 %2447
    %v2449 = vmul.f32 %v2445, %v1113
    %v2450 = vmul.f32 %v2448, %v1113
    %v2451 = vsub.f32 %v2441, %v2449
    %v2452 = vsub.f32 %v2442, %v2450
    %v2453 = vmul.f32 %v2451, %v2451
    %v2454 = vmul.f32 %v2452, %v2452
    %v2455 = vsel %vm63, %v2453, 0.0
    %2456 = vadd.xlane.f32.xlu0 %v2455
    %v2457 = vpop.xlane.xlu0 %2456
    %v2458 = vsel %vm63, %v2454, 0.0
    %2459 = vadd.xlane.f32.xlu0 %v2458
    %v2460 = vpop.xlane.xlu0 %2459
    %v2461 = vmul.f32 %v2457, %v1113
    %v2462 = vmul.f32 %v2460, %v1113
    %v2463 = vadd.f32 %v2461, 1e-12
    %v2464 = vadd.f32 %v2462, 1e-12
    %v2465 = vrsqrt.pop %v2463
    %v2466 = vrsqrt.pop %v2464
    %v2467 = vmul.f32 %v2451, %v2465
    %v2468 = vmul.f32 %v2452, %v2466
    %v2469 = vlaneseq
    %v2470 = vshrl.u32 %v2469, 7
    %v2471 = vsub.s32 4, %v2470
    %v2472 = vrot.slane %v1386, %v2471
    %v2473 = vmul.f32 %v2467, %v2472
    %v2474 = vmul.f32 %v2468, %v2472
    %v2475 = vlaneseq
    %v2476 = vshrl.u32 %v2475, 7
    %v2477 = vsub.s32 5, %v2476
    %v2478 = vrot.slane %v1386, %v2477
    %v2479 = vadd.f32 %v2473, %v2478
    %v2480 = vadd.f32 %v2474, %v2478
    %v2481 = vpack.c.bf16 %v2480, %v2479
    %v2482 = vlaneseq
    %v2483 = vshrl.u32 %v2482, 7
    %v2484 = vsub.s32 2, %v2483
    %v2485 = vrot.slane %v1386, %v2484
    %v2490 = vunpack.c.l.b16 %v1364
    %v2491 = vunpack.c.l.b16 %v1365
    %v2492 = vunpack.c.l.b16 %v1366
    %v2493 = vunpack.c.l.b16 %v1367
    %v2494 = vpack.c.b16 %v2491, %v2490
    %v2495 = vpack.c.b16 %v2493, %v2492
    %v2499 = vsel %vm63, %v2481, 0
    %2501 = vmatprep.subr.bf16.mxu0 0
    %2502 = vmatpush1.bf16.msra.mxu0 %v2494
    %2503 = vmatprep.subr.bf16.mxu0 0
    %2504 = vmatpush1.bf16.msra.mxu0 %v2495
    %2505 = vmatprep.subr.bf16.mxu0 0
    %2506 = vmatpush1.bf16.msra.mxu0 0
    %2507 = vmatprep.subr.bf16.mxu0 0
    %2508 = vmatpush1.bf16.msra.mxu0 0
    %2509 = vmatprep.subr.bf16.mxu0 0
    %2510 = vmatpush1.bf16.msra.mxu0 0
    %2511 = vmatprep.subr.bf16.mxu0 0
    %2512 = vmatpush1.bf16.msra.mxu0 0
    %2513 = vmatprep.subr.bf16.mxu0 0
    %2514 = vmatpush1.bf16.msra.mxu0 0
    %2515 = vmatprep.subr.bf16.mxu0 0
    %2516 = vmatpush1.bf16.msra.mxu0 0
    %2517 = vmatprep.subr.bf16.mxu0 0
    %2518 = vmatpush1.bf16.msra.mxu0 0
    %2519 = vmatprep.subr.bf16.mxu0 0
    %2520 = vmatpush1.bf16.msra.mxu0 0
    %2521 = vmatprep.subr.bf16.mxu0 0
    %2522 = vmatpush1.bf16.msra.mxu0 0
    %2523 = vmatprep.subr.bf16.mxu0 0
    %2524 = vmatpush1.bf16.msra.mxu0 0
    %2525 = vmatprep.subr.bf16.mxu0 0
    %2526 = vmatpush1.bf16.msra.mxu0 0
    %2527 = vmatprep.subr.bf16.mxu0 0
    %2528 = vmatpush1.bf16.msra.mxu0 0
    %2529 = vmatprep.subr.bf16.mxu0 0
    %2530 = vmatpush1.bf16.msra.mxu0 0
    %2531 = vmatprep.subr.bf16.mxu0 0
    %2532 = vmatpush1.bf16.msra.mxu0 0
    %2533 = vmatprep.mubr.bf16.mxu0 0
    %2534 = vmatmul.mubr.bf16.gmra.mrb[0].mxu0 %v2499
    %v2535 = vpop.f32.mrb[0].mxu0
    %v2536 = vadd.f32 %v2485, %v2535
    %v2537 = vpop.f32.mrb[0].mxu0
    %v2538 = vpop.f32.mrb[0].mxu0
    %v2539 = vadd.f32 %v2485, %v2538
    %v2540 = vpop.f32.mrb[0].mxu0
    %2541 = vdwg.mxu0
    %v2542 = vmul.f32 %v2536, %v2536
    %v2543 = vmul.f32 %v2539, %v2539
    %v2544 = vmul.f32 %v2536, %v2542
    %v2545 = vmul.f32 %v2539, %v2543
    %v2546 = vmul.f32 %v2544, 0.044715
    %v2547 = vmul.f32 %v2545, 0.044715
    %v2548 = vadd.f32 %v2536, %v2546
    %v2549 = vadd.f32 %v2539, %v2547
    %v2550 = vmul.f32 %v2548, 0.7978846
    %v2551 = vmul.f32 %v2549, 0.7978846
    %v2552 = vtanh.pop %v2550
    %v2553 = vtanh.pop %v2551
    %v2554 = vadd.f32 %v2552, 1.0
    %v2555 = vadd.f32 %v2553, 1.0
    %v2556 = vmul.f32 %v2554, 0.5
    %v2557 = vmul.f32 %v2555, 0.5
    %v2558 = vmul.f32 %v2536, %v2556
    %v2559 = vmul.f32 %v2539, %v2557
    %v2560 = vpack.c.bf16 %v2559, %v2558
    %v2561 = vlaneseq
    %v2562 = vshrl.u32 %v2561, 7
    %v2563 = vsub.s32 3, %v2562
    %v2564 = vrot.slane %v1386, %v2563
    %v2581 = vunpack.c.l.b16 %v1369
    %v2582 = vunpack.c.l.b16 %v1370
    %v2583 = vunpack.c.l.b16 %v1371
    %v2584 = vunpack.c.l.b16 %v1372
    %v2585 = vunpack.c.l.b16 %v1373
    %v2586 = vunpack.c.l.b16 %v1374
    %v2587 = vunpack.c.l.b16 %v1375
    %v2588 = vunpack.c.l.b16 %v1376
    %v2589 = vunpack.c.l.b16 %v1377
    %v2590 = vunpack.c.l.b16 %v1378
    %v2591 = vunpack.c.l.b16 %v1379
    %v2592 = vunpack.c.l.b16 %v1380
    %v2593 = vunpack.c.l.b16 %v1381
    %v2594 = vunpack.c.l.b16 %v1382
    %v2595 = vunpack.c.l.b16 %v1383
    %v2596 = vunpack.c.l.b16 %v1384
    %v2597 = vpack.c.b16 %v2582, %v2581
    %v2598 = vpack.c.b16 %v2584, %v2583
    %v2599 = vpack.c.b16 %v2586, %v2585
    %v2600 = vpack.c.b16 %v2588, %v2587
    %v2601 = vpack.c.b16 %v2590, %v2589
    %v2602 = vpack.c.b16 %v2592, %v2591
    %v2603 = vpack.c.b16 %v2594, %v2593
    %v2604 = vpack.c.b16 %v2596, %v2595
    %2613 = vmatprep.subr.bf16.mxu0 0
    %2614 = vmatpush1.bf16.msra.mxu0 %v2597
    %2615 = vmatprep.subr.bf16.mxu0 0
    %2616 = vmatpush1.bf16.msra.mxu0 %v2598
    %2617 = vmatprep.subr.bf16.mxu0 0
    %2618 = vmatpush1.bf16.msra.mxu0 %v2599
    %2619 = vmatprep.subr.bf16.mxu0 0
    %2620 = vmatpush1.bf16.msra.mxu0 %v2600
    %2621 = vmatprep.subr.bf16.mxu0 0
    %2622 = vmatpush1.bf16.msra.mxu0 %v2601
    %2623 = vmatprep.subr.bf16.mxu0 0
    %2624 = vmatpush1.bf16.msra.mxu0 %v2602
    %2625 = vmatprep.subr.bf16.mxu0 0
    %2626 = vmatpush1.bf16.msra.mxu0 %v2603
    %2627 = vmatprep.subr.bf16.mxu0 0
    %2628 = vmatpush1.bf16.msra.mxu0 %v2604
    %2629 = vmatprep.subr.bf16.mxu0 0
    %2630 = vmatpush1.bf16.msra.mxu0 0
    %2631 = vmatprep.subr.bf16.mxu0 0
    %2632 = vmatpush1.bf16.msra.mxu0 0
    %2633 = vmatprep.subr.bf16.mxu0 0
    %2634 = vmatpush1.bf16.msra.mxu0 0
    %2635 = vmatprep.subr.bf16.mxu0 0
    %2636 = vmatpush1.bf16.msra.mxu0 0
    %2637 = vmatprep.subr.bf16.mxu0 0
    %2638 = vmatpush1.bf16.msra.mxu0 0
    %2639 = vmatprep.subr.bf16.mxu0 0
    %2640 = vmatpush1.bf16.msra.mxu0 0
    %2641 = vmatprep.subr.bf16.mxu0 0
    %2642 = vmatpush1.bf16.msra.mxu0 0
    %2643 = vmatprep.subr.bf16.mxu0 0
    %2644 = vmatpush1.bf16.msra.mxu0 0
    %2645 = vmatprep.mubr.bf16.mxu0 0
    %2646 = vmatmul.mubr.bf16.gmra.mrb[0].mxu0 %v2560
    %v2647 = vpop.f32.mrb[0].mxu0
    %v2648 = vadd.f32 %v2564, %v2647
    %v2649 = vpop.f32.mrb[0].mxu0
    %v2650 = vpop.f32.mrb[0].mxu0
    %v2651 = vadd.f32 %v2564, %v2650
    %v2652 = vpop.f32.mrb[0].mxu0
    %2653 = vdwg.mxu0
    %v2654 = vadd.f32 %v2479, %v2648
    %v2655 = vadd.f32 %v2480, %v2651
    %v2656 = vsel %vm63, %v2654, 0.0
    %2657 = vadd.xlane.f32.xlu0 %v2656
    %v2658 = vpop.xlane.xlu0 %2657
    %v2659 = vsel %vm63, %v2655, 0.0
    %2660 = vadd.xlane.f32.xlu0 %v2659
    %v2661 = vpop.xlane.xlu0 %2660
    %v2662 = vmul.f32 %v2658, %v1113
    %v2663 = vmul.f32 %v2661, %v1113
    %v2664 = vsub.f32 %v2654, %v2662
    %v2665 = vsub.f32 %v2655, %v2663
    %v2666 = vmul.f32 %v2664, %v2664
    %v2667 = vmul.f32 %v2665, %v2665
    %v2668 = vsel %vm63, %v2666, 0.0
    %2669 = vadd.xlane.f32.xlu0 %v2668
    %v2670 = vpop.xlane.xlu0 %2669
    %v2671 = vsel %vm63, %v2667, 0.0
    %2672 = vadd.xlane.f32.xlu0 %v2671
    %v2673 = vpop.xlane.xlu0 %2672
    %v2674 = vmul.f32 %v2670, %v1113
    %v2675 = vmul.f32 %v2673, %v1113
    %v2676 = vadd.f32 %v2674, 1e-12
    %v2677 = vadd.f32 %v2675, 1e-12
    %v2678 = vrsqrt.pop %v2676
    %v2679 = vrsqrt.pop %v2677
    %v2680 = vmul.f32 %v2664, %v2678
    %v2681 = vmul.f32 %v2665, %v2679
    %v2682 = vlaneseq
    %v2683 = vshrl.u32 %v2682, 7
    %v2684 = vsub.s32 6, %v2683
    %v2685 = vrot.slane %v1386, %v2684
    %v2686 = vmul.f32 %v2680, %v2685
    %v2687 = vmul.f32 %v2681, %v2685
    %v2688 = vlaneseq
    %v2689 = vshrl.u32 %v2688, 7
    %v2690 = vsub.s32 7, %v2689
    %v2691 = vrot.slane %v1386, %v2690
    %v2692 = vadd.f32 %v2686, %v2691
    %v2693 = vadd.f32 %v2687, %v2691
    %2694 = vst.msk [vmem:[#allocation2] sm:$0xff] %vm63, %v2692
    %2695 = vst.msk [vmem:[#allocation2 + $0x8] sm:$0xff] %vm63, %v2693
    // Predicated region
    $region18: #{tpu_custom_call.1} parent=1 // pred_check
      _
    $region19: #{tpu_custom_call.1} parent=1 // pred_check_branch
      %2697 = sbr.rel (0) target = $region21
    $region20: #{tpu_custom_call.1} parent=1 // pred_region
      %s2699 = ssub.s32 256, 256
      %2700 = vsyncadd [#allocation3], %s2699
      %s2701 = sshll.u32 [#allocation2], 4
      %s2702 = int_to_ptr.vmem [resolvable:$true] %s2701
      %2707 = dma.vmem_to_hbm [thread:$0]  %s2702, 256, %s4, [#allocation3], 128, 128, 8
    $region21: #{tpu_custom_call.1} parent=1 // pred_fallthru
      _
    // Predicated region
    $region22: #{tpu_custom_call.1} parent=1 // pred_check
      _
    $region23: #{tpu_custom_call.1} parent=1 // pred_check_branch
      %2709 = sbr.rel (0) target = $region25
    $region24: #{tpu_custom_call.1} parent=1 // pred_region
      %2710 = dma.done [#allocation3], 256
    $region25: #{tpu_custom_call.1} parent=1 // pred_fallthru
      _
    %2711 = vsyncpa [#allocation3], 1

</llo_original>
